<compile_context>
chip_gen: v6e
topology: v6e:2x2x1
jax: 0.10.0
libtpu: 0.0.40
codegen_flags: <defaults>
</compile_context>

<pallas_src>
import functools

import jax
import jax.numpy as jnp
from jax.experimental import pallas as pl
from jax.experimental.pallas import tpu as pltpu

# ---------------------------------------------------------------------------
# Model sizes (consistent with the module's constructor conventions)
# ---------------------------------------------------------------------------
POS_SIZE = 8                      # position inputs per timestep (x[:, t, :-1])
IN_FEATURES = POS_SIZE + 1        # + 1 force channel (x[:, t, -1])
SENSORY_LAYER_1_SIZE = 16
SENSORY_LAYER_2_INPUT_SIZE = SENSORY_LAYER_1_SIZE + 1
SENSORY_LAYER_2_SIZE = 8
R = 20.0                          # neuron operating range
F_MAX = 10.0                      # max force, theta_max for the force synapse
DT = 0.1                          # integration step of the leaky integrator

CHUNK = 16                        # timesteps packed per lane-dense output row
                                  # (CHUNK * SENSORY_LAYER_2_SIZE = 128 lanes)


# ---------------------------------------------------------------------------
# Pallas kernel: one grid step == BLOCK_T timesteps of the recurrence
# ---------------------------------------------------------------------------
def _sns_sensory_kernel(x_ref, w1_ref, invth1_ref, w2s_ref, w2f_ref,
                        invth2s_ref, invth2f_ref, scale_ref, bias_ref,
                        o_ref, s1_ref, s2_ref, i1_buf, f2_buf,
                        *, pos_size, b_pad, block_t, chunk, dt):
    nb = pl.program_id(0)

    # Layer states persist in VMEM scratch across grid steps (time recurrence);
    # zero them once at the start of the sequence.
    @pl.when(nb == 0)
    def _():
        s1_ref[...] = jnp.zeros_like(s1_ref)
        s2_ref[...] = jnp.zeros_like(s2_ref)

    # --- prologue: all input-only work for the whole time block, batched -----
    xb = x_ref[...]                                   # (block_t*b_pad, F)
    pos = xb[:, :pos_size]                            # (block_t*b_pad, P)
    force = xb[:, pos_size:pos_size + 1]              # (block_t*b_pad, 1)

    # layer-1 drive: dt*R * clip(pos/theta1) @ W1   (dt*R folded into w1_ref)
    act1 = jnp.clip(pos * invth1_ref[...], 0.0, 1.0)
    i1_buf[...] = jnp.dot(act1, w1_ref[...],
                          preferred_element_type=jnp.float32)

    # layer-2 force drive: dt*R * clip(force/F_MAX) * w2_force  (rank-1, VPU)
    actf = jnp.clip(force * invth2f_ref[...], 0.0, 1.0)
    f2_buf[...] = actf * w2f_ref[...]                 # (block_t*b_pad, N2)

    # loop-invariant operands, loaded once per block
    w2s = w2s_ref[...]                                # (N1, N2), dt*R folded in
    invth2s = invth2s_ref[...]                        # (1, N1)
    scale = scale_ref[...]                            # (1, N2)  = 1/(2*sigma)
    bias = bias_ref[...]                              # (1, N2)  = (sigma-mu)/(2*sigma)
    decay = jnp.float32(1.0 - dt)

    def chunk_body(c, carry):
        s1, s2 = carry                                # (b_pad, N1), (b_pad, N2)
        ys = []
        for j in range(chunk):                        # static unroll
            row = pl.multiple_of((c * chunk + j) * b_pad, b_pad)
            # leaky integrator, layer 1 (drive precomputed in the prologue)
            s1 = s1 * decay + i1_buf[pl.ds(row, b_pad), :]
            # layer 2 uses the *updated* layer-1 state plus the force drive
            act2 = jnp.clip(s1 * invth2s, 0.0, 1.0)
            # TODO(synk): with batch this small a VPU mul+reduce formulation of
            # this (b_pad,16)x(16,8) product may beat the MXU; keep jnp.dot.
            s2 = (s2 * decay
                  + jnp.dot(act2, w2s, preferred_element_type=jnp.float32)
                  + f2_buf[pl.ds(row, b_pad), :])
            # folded output "sigmoid": clamp(s2*scale + bias, 0, 1)
            ys.append(jnp.clip(s2 * scale + bias, 0.0, 1.0))
        # pack `chunk` timesteps into one lane-dense (b_pad, chunk*N2) slab and
        # write it with a single unmasked store.
        o_ref[c] = jnp.concatenate(ys, axis=-1)
        return s1, s2

    s1_fin, s2_fin = jax.lax.fori_loop(
        0, block_t // chunk, chunk_body, (s1_ref[...], s2_ref[...]))
    s1_ref[...] = s1_fin
    s2_ref[...] = s2_fin


# ---------------------------------------------------------------------------
# Wrapper
# ---------------------------------------------------------------------------
def sns_sensory_layer_forward(x, params, *, block_t=128):
    """x: (B, T, IN_FEATURES) float32. Returns (B, T, SENSORY_LAYER_2_SIZE)."""
    w1_eff, invth1, w2_eff, invth2, mu, sigma = params
    B, T, F = x.shape
    pos_size = F - 1
    n1 = w1_eff.shape[1]
    n2 = w2_eff.shape[1]

    chunk = CHUNK
    b_pad = max(8, -(-B // 8) * 8)                       # sublane-aligned batch
    block_t = max(chunk, (int(block_t) // chunk) * chunk)
    block_t = min(block_t, -(-T // chunk) * chunk)
    nb = -(-T // block_t)
    t_pad = nb * block_t
    n_chunks = block_t // chunk
    lane_out = chunk * n2                                # 128 for n2 == 8

    f32 = jnp.float32
    dtr = f32(DT * R)
    # fold dt*R into the conductance matrices, split layer-2 weights into the
    # recurrent (state) part and the force row, and fold the output sigmoid
    # into a single scale/bias pair.
    w1_k = (dtr * w1_eff).astype(f32)                    # (P, N1)
    w2s_k = (dtr * w2_eff[:n1, :]).astype(f32)           # (N1, N2)
    w2f_k = (dtr * w2_eff[n1:n1 + 1, :]).astype(f32)     # (1, N2)
    invth1_k = jnp.reshape(invth1.astype(f32), (1, pos_size))
    invth2_k = jnp.reshape(invth2.astype(f32), (1, n1 + 1))
    invth2s_k = invth2_k[:, :n1]                         # (1, N1)
    invth2f_k = invth2_k[:, n1:n1 + 1]                   # (1, 1)
    sigma_k = jnp.reshape(sigma.astype(f32), (1, n2))
    mu_k = jnp.reshape(mu.astype(f32), (1, n2))
    scale_k = 1.0 / (2.0 * sigma_k)
    bias_k = (sigma_k - mu_k) * scale_k

    # pad batch to b_pad and time to t_pad, then flatten to (t_pad*b_pad, F)
    # time-major so each grid step sees a sublane-aligned 2-D slab.
    xf = x.astype(f32)
    if b_pad != B or t_pad != T:
        xf = jnp.pad(xf, ((0, b_pad - B), (0, t_pad - T), (0, 0)))
    x_flat = jnp.transpose(xf, (1, 0, 2)).reshape(t_pad * b_pad, F)

    kernel = functools.partial(
        _sns_sensory_kernel, pos_size=pos_size, b_pad=b_pad,
        block_t=block_t, chunk=chunk, dt=DT)

    out_packed = pl.pallas_call(
        kernel,
        out_shape=jax.ShapeDtypeStruct((t_pad // chunk, b_pad, lane_out), f32),
        grid_spec=pltpu.PrefetchScalarGridSpec(
            num_scalar_prefetch=0,
            grid=(nb,),
            in_specs=[
                pl.BlockSpec((block_t * b_pad, F), lambda t: (t, 0)),  # x block
                pl.BlockSpec(w1_k.shape, lambda t: (0, 0)),      # dt*R*W1
                pl.BlockSpec(invth1_k.shape, lambda t: (0, 0)),  # 1/theta1
                pl.BlockSpec(w2s_k.shape, lambda t: (0, 0)),     # dt*R*W2[:N1]
                pl.BlockSpec(w2f_k.shape, lambda t: (0, 0)),     # dt*R*W2[N1]
                pl.BlockSpec(invth2s_k.shape, lambda t: (0, 0)), # 1/theta2[:N1]
                pl.BlockSpec(invth2f_k.shape, lambda t: (0, 0)), # 1/F_MAX
                pl.BlockSpec(scale_k.shape, lambda t: (0, 0)),   # 1/(2*sigma)
                pl.BlockSpec(bias_k.shape, lambda t: (0, 0)),    # (sig-mu)/(2sig)
            ],
            out_specs=pl.BlockSpec((n_chunks, b_pad, lane_out),
                                   lambda t: (t, 0, 0)),
            scratch_shapes=[
                pltpu.VMEM((b_pad, n1), f32),                 # layer-1 state
                pltpu.VMEM((b_pad, n2), f32),                 # layer-2 state
                pltpu.VMEM((block_t * b_pad, n1), f32),       # hoisted layer-1 drive
                pltpu.VMEM((block_t * b_pad, n2), f32),       # hoisted force drive
            ],
        ),
        compiler_params=pltpu.CompilerParams(
            dimension_semantics=("arbitrary",)),     # time recurrence: sequential
    )(x_flat, w1_k, invth1_k, w2s_k, w2f_k, invth2s_k, invth2f_k,
      scale_k, bias_k)

    # undo the lane-dense packing: (t_pad/chunk, b_pad, chunk*n2) -> (B, T, n2)
    out = out_packed.reshape(t_pad // chunk, b_pad, chunk, n2)
    out = jnp.transpose(out, (1, 0, 2, 3)).reshape(b_pad, t_pad, n2)
    return out[:B, :T, :]


# ---------------------------------------------------------------------------
# Pure-JAX reference (mirrors the PyTorch forward loop, for validation)
# ---------------------------------------------------------------------------
def sns_sensory_layer_reference(x, params):
    w1_eff, invth1, w2_eff, invth2, mu, sigma = params
    B, T, F = x.shape
    n1 = w1_eff.shape[1]
    n2 = w2_eff.shape[1]
    hp = jax.lax.Precision.HIGHEST

    def step(carry, xt):
        s1, s2 = carry
        pos = xt[:, :F - 1]
        force = xt[:, F - 1:]
        act1 = jnp.clip(pos * invth1, 0.0, 1.0)
        s1 = s1 + DT * (-s1 + R * jnp.dot(act1, w1_eff, precision=hp))
        inp2 = jnp.concatenate([s1, force], axis=1)
        act2 = jnp.clip(inp2 * invth2, 0.0, 1.0)
        s2 = s2 + DT * (-s2 + R * jnp.dot(act2, w2_eff, precision=hp))
        y = jnp.clip((s2 - mu + sigma) / (2.0 * sigma), 0.0, 1.0)
        return (s1, s2), y

    s1_0 = jnp.zeros((B, n1), jnp.float32)
    s2_0 = jnp.zeros((B, n2), jnp.float32)
    _, ys = jax.lax.scan(step, (s1_0, s2_0), jnp.transpose(x, (1, 0, 2)))
    return jnp.transpose(ys, (1, 0, 2))


# ---------------------------------------------------------------------------
# Deterministic parameter construction (synthetic, no checkpoint)
# ---------------------------------------------------------------------------
def make_params():
    key = jax.random.PRNGKey(0)
    k1, k2 = jax.random.split(key, 2)

    # layer 1 conductances + (all-ones) sparsity mask, folded together
    w1 = jax.random.uniform(k1, (POS_SIZE, SENSORY_LAYER_1_SIZE),
                            dtype=jnp.float32) / POS_SIZE
    w1_eff = w1 * jnp.ones_like(w1)

    # layer 2 conductances + sparsity mask (ones so the kernel has real compute)
    w2 = jax.random.uniform(k2, (SENSORY_LAYER_2_INPUT_SIZE, SENSORY_LAYER_2_SIZE),
                            dtype=jnp.float32) / SENSORY_LAYER_2_INPUT_SIZE
    w2_eff = w2 * jnp.ones_like(w2)

    # theta_max_in: layer 1 uses R per position input;
    # layer 2 uses concat(R * ones(L1_SIZE), F_MAX) -- exactly as in the source.
    theta1 = R * jnp.ones((1, POS_SIZE), dtype=jnp.float32)
    theta2 = jnp.concatenate(
        [R * jnp.ones((1, SENSORY_LAYER_1_SIZE), dtype=jnp.float32),
         F_MAX * jnp.ones((1, 1), dtype=jnp.float32)], axis=1)
    invth1 = 1.0 / theta1
    invth2 = 1.0 / theta2

    # output_mu = 10 * ones, output_sigma = 10 * ones  (as in the source)
    mu = 10.0 * jnp.ones((1, SENSORY_LAYER_2_SIZE), dtype=jnp.float32)
    sigma = 10.0 * jnp.ones((1, SENSORY_LAYER_2_SIZE), dtype=jnp.float32)

    return (w1_eff, invth1, w2_eff, invth2, mu, sigma)


if __name__ == "__main__":
    batch, seq = 2, 100
    key = jax.random.PRNGKey(0)
    kx, kf = jax.random.split(key)
    pos = jax.random.uniform(kx, (batch, seq, POS_SIZE), dtype=jnp.float32) * R
    frc = jax.random.uniform(kf, (batch, seq, 1), dtype=jnp.float32) * F_MAX
    x = jnp.concatenate([pos, frc], axis=-1)          # (B, T, POS_SIZE + 1)

    params = make_params()
    out = sns_sensory_layer_forward(x, params, block_t=32)
    out = jax.block_until_ready(out)

    ref = jax.block_until_ready(sns_sensory_layer_reference(x, params))

    assert out.shape == (batch, seq, SENSORY_LAYER_2_SIZE)
    assert bool(jnp.all(jnp.isfinite(out)))
    assert bool(jnp.all(out >= 0.0)) and bool(jnp.all(out <= 1.0))
    max_err = float(jnp.max(jnp.abs(out - ref)))
    assert max_err < 2e-2, f"max abs err vs reference: {max_err}"
    print("KERNEL_OK")
</pallas_src>

<mosaic_0001>
module attributes {stable_mosaic.version = 11 : i64} {
  func.func @_sns_sensory_kernel(%arg0: i32, %arg1: memref<256x9xf32, #tpu.memory_space<vmem>>, %arg2: memref<8x16xf32, #tpu.memory_space<vmem>>, %arg3: memref<1x8xf32, #tpu.memory_space<vmem>>, %arg4: memref<16x8xf32, #tpu.memory_space<vmem>>, %arg5: memref<1x8xf32, #tpu.memory_space<vmem>>, %arg6: memref<1x16xf32, #tpu.memory_space<vmem>>, %arg7: memref<1x1xf32, #tpu.memory_space<vmem>>, %arg8: memref<1x8xf32, #tpu.memory_space<vmem>>, %arg9: memref<1x8xf32, #tpu.memory_space<vmem>>, %arg10: memref<2x8x128xf32, #tpu.memory_space<vmem>>, %arg11: memref<8x16xf32, #tpu.memory_space<vmem>>, %arg12: memref<8x8xf32, #tpu.memory_space<vmem>>, %arg13: memref<256x16xf32, #tpu.memory_space<vmem>>, %arg14: memref<256x8xf32, #tpu.memory_space<vmem>>) attributes {dimension_semantics = [#tpu.dimension_semantics<arbitrary>], iteration_bounds = array<i64: 4>, scalar_prefetch = 0 : i64, scratch_operands = 4 : i64, tpu.core_type = #tpu.core_type<tc>, window_params = [{transform_indices = @transform_0, window_bounds = array<i64: 256, 9>}, {pipeline_mode = #tpu.pipeline_mode<synchronous>, transform_indices = @transform_1, window_bounds = array<i64: 8, 16>}, {pipeline_mode = #tpu.pipeline_mode<synchronous>, transform_indices = @transform_2, window_bounds = array<i64: 1, 8>}, {pipeline_mode = #tpu.pipeline_mode<synchronous>, transform_indices = @transform_3, window_bounds = array<i64: 16, 8>}, {pipeline_mode = #tpu.pipeline_mode<synchronous>, transform_indices = @transform_4, window_bounds = array<i64: 1, 8>}, {pipeline_mode = #tpu.pipeline_mode<synchronous>, transform_indices = @transform_5, window_bounds = array<i64: 1, 16>}, {pipeline_mode = #tpu.pipeline_mode<synchronous>, transform_indices = @transform_6, window_bounds = array<i64: 1, 1>}, {pipeline_mode = #tpu.pipeline_mode<synchronous>, transform_indices = @transform_7, window_bounds = array<i64: 1, 8>}, {pipeline_mode = #tpu.pipeline_mode<synchronous>, transform_indices = @transform_8, window_bounds = array<i64: 1, 8>}, {transform_indices = @transform_9, window_bounds = array<i64: 2, 8, 128>}]} {
    %c0_i32 = arith.constant 0 : i32
    %0 = arith.cmpi eq, %arg0, %c0_i32 : i32
    %1 = arith.extui %0 : i1 to i32
    %c0_i32_0 = arith.constant 0 : i32
    %2 = arith.cmpi ne, %1, %c0_i32_0 : i32
    scf.if %2 {
      %cst_37 = arith.constant 0.000000e+00 : f32
      %38 = vector.broadcast %cst_37 : f32 to vector<8x16xf32>
      %c0_38 = arith.constant 0 : index
      %c0_39 = arith.constant 0 : index
      %39 = vector.load %arg11[%c0_38, %c0_39] : memref<8x16xf32, #tpu.memory_space<vmem>>, vector<8x16xf32>
      tpu.vector_store %arg11[%c0_38, %c0_39], %38 {strides = array<i32>} : memref<8x16xf32, #tpu.memory_space<vmem>>, vector<8x16xf32>,
      %cst_40 = arith.constant 0.000000e+00 : f32
      %40 = vector.broadcast %cst_40 : f32 to vector<8x8xf32>
      %c0_41 = arith.constant 0 : index
      %c0_42 = arith.constant 0 : index
      %41 = vector.load %arg12[%c0_41, %c0_42] : memref<8x8xf32, #tpu.memory_space<vmem>>, vector<8x8xf32>
      tpu.vector_store %arg12[%c0_41, %c0_42], %40 {strides = array<i32>} : memref<8x8xf32, #tpu.memory_space<vmem>>, vector<8x8xf32>,
    } else {
    }
    %c0 = arith.constant 0 : index
    %c0_1 = arith.constant 0 : index
    %3 = vector.load %arg1[%c0, %c0_1] : memref<256x9xf32, #tpu.memory_space<vmem>>, vector<256x9xf32>
    %4 = vector.extract_strided_slice %3 {offsets = [0, 0], sizes = [256, 8], strides = [1, 1]} : vector<256x9xf32> to vector<256x8xf32>
    %5 = vector.extract_strided_slice %3 {offsets = [0, 8], sizes = [256, 1], strides = [1, 1]} : vector<256x9xf32> to vector<256x1xf32>
    %c0_2 = arith.constant 0 : index
    %c0_3 = arith.constant 0 : index
    %6 = vector.load %arg3[%c0_2, %c0_3] : memref<1x8xf32, #tpu.memory_space<vmem>>, vector<1x8xf32>
    %7 = vector.broadcast %6 : vector<1x8xf32> to vector<256x8xf32>
    %8 = arith.mulf %4, %7 : vector<256x8xf32>
    %cst = arith.constant 0.000000e+00 : f32
    %cst_4 = arith.constant 1.000000e+00 : f32
    %9 = vector.broadcast %cst : f32 to vector<256x8xf32>
    %10 = arith.maximumf %9, %8 : vector<256x8xf32>
    %11 = vector.broadcast %cst_4 : f32 to vector<256x8xf32>
    %12 = arith.minimumf %11, %10 : vector<256x8xf32>
    %c0_5 = arith.constant 0 : index
    %c0_6 = arith.constant 0 : index
    %13 = vector.load %arg2[%c0_5, %c0_6] : memref<8x16xf32, #tpu.memory_space<vmem>>, vector<8x16xf32>
    %cst_7 = arith.constant dense<0.000000e+00> : vector<256x16xf32>
    %14 = tpu.matmul %12, %13, %cst_7 {dimension_numbers = #tpu.dot_dimension_numbers<[1], [0], [0], [1], [0, 0, 1, 1], [], []>} : vector<256x8xf32>, vector<8x16xf32>, vector<256x16xf32> -> vector<256x16xf32>
    %c0_8 = arith.constant 0 : index
    %c0_9 = arith.constant 0 : index
    %15 = vector.load %arg13[%c0_8, %c0_9] : memref<256x16xf32, #tpu.memory_space<vmem>>, vector<256x16xf32>
    tpu.vector_store %arg13[%c0_8, %c0_9], %14 {strides = array<i32>} : memref<256x16xf32, #tpu.memory_space<vmem>>, vector<256x16xf32>,
    %c0_10 = arith.constant 0 : index
    %c0_11 = arith.constant 0 : index
    %16 = vector.load %arg7[%c0_10, %c0_11] : memref<1x1xf32, #tpu.memory_space<vmem>>, vector<1x1xf32>
    %17 = vector.broadcast %16 : vector<1x1xf32> to vector<256x1xf32>
    %18 = arith.mulf %5, %17 : vector<256x1xf32>
    %cst_12 = arith.constant 0.000000e+00 : f32
    %cst_13 = arith.constant 1.000000e+00 : f32
    %19 = vector.broadcast %cst_12 : f32 to vector<256x1xf32>
    %20 = arith.maximumf %19, %18 : vector<256x1xf32>
    %21 = vector.broadcast %cst_13 : f32 to vector<256x1xf32>
    %22 = arith.minimumf %21, %20 : vector<256x1xf32>
    %c0_14 = arith.constant 0 : index
    %c0_15 = arith.constant 0 : index
    %23 = vector.load %arg5[%c0_14, %c0_15] : memref<1x8xf32, #tpu.memory_space<vmem>>, vector<1x8xf32>
    %24 = vector.broadcast %22 : vector<256x1xf32> to vector<256x8xf32>
    %25 = vector.broadcast %23 : vector<1x8xf32> to vector<256x8xf32>
    %26 = arith.mulf %24, %25 : vector<256x8xf32>
    %c0_16 = arith.constant 0 : index
    %c0_17 = arith.constant 0 : index
    %27 = vector.load %arg14[%c0_16, %c0_17] : memref<256x8xf32, #tpu.memory_space<vmem>>, vector<256x8xf32>
    tpu.vector_store %arg14[%c0_16, %c0_17], %26 {strides = array<i32>} : memref<256x8xf32, #tpu.memory_space<vmem>>, vector<256x8xf32>,
    %c0_18 = arith.constant 0 : index
    %c0_19 = arith.constant 0 : index
    %28 = vector.load %arg4[%c0_18, %c0_19] : memref<16x8xf32, #tpu.memory_space<vmem>>, vector<16x8xf32>
    %c0_20 = arith.constant 0 : index
    %c0_21 = arith.constant 0 : index
    %29 = vector.load %arg6[%c0_20, %c0_21] : memref<1x16xf32, #tpu.memory_space<vmem>>, vector<1x16xf32>
    %c0_22 = arith.constant 0 : index
    %c0_23 = arith.constant 0 : index
    %30 = vector.load %arg8[%c0_22, %c0_23] : memref<1x8xf32, #tpu.memory_space<vmem>>, vector<1x8xf32>
    %c0_24 = arith.constant 0 : index
    %c0_25 = arith.constant 0 : index
    %31 = vector.load %arg9[%c0_24, %c0_25] : memref<1x8xf32, #tpu.memory_space<vmem>>, vector<1x8xf32>
    %c0_26 = arith.constant 0 : index
    %c0_27 = arith.constant 0 : index
    %32 = vector.load %arg11[%c0_26, %c0_27] : memref<8x16xf32, #tpu.memory_space<vmem>>, vector<8x16xf32>
    %c0_28 = arith.constant 0 : index
    %c0_29 = arith.constant 0 : index
    %33 = vector.load %arg12[%c0_28, %c0_29] : memref<8x8xf32, #tpu.memory_space<vmem>>, vector<8x8xf32>
    %cst_30 = arith.constant 0.899999976 : f32
    %c0_i32_31 = arith.constant 0 : i32
    %c2_i32 = arith.constant 2 : i32
    %34 = arith.addi %c0_i32_31, %c2_i32 : i32
    %c1_i32 = arith.constant 1 : i32
    %35:2 = scf.for %arg15 = %c0_i32_31 to %34 step %c1_i32 iter_args(%arg16 = %32, %arg17 = %33) -> (vector<8x16xf32>, vector<8x8xf32>)  : i32 {
      %c16_i32 = arith.constant 16 : i32
      %38 = arith.muli %arg15, %c16_i32 : i32
      %c0_i32_37 = arith.constant 0 : i32
      %39 = arith.addi %38, %c0_i32_37 : i32
      %c8_i32 = arith.constant 8 : i32
      %40 = arith.muli %39, %c8_i32 : i32
      %41 = tpu.assume_multiple %40, 8 : i32
      %42 = vector.broadcast %cst_30 : f32 to vector<8x16xf32>
      %43 = arith.mulf %arg16, %42 : vector<8x16xf32>
      %44 = arith.index_cast %41 : i32 to index
      %c0_38 = arith.constant 0 : index
      %45 = vector.load %arg13[%44, %c0_38] : memref<256x16xf32, #tpu.memory_space<vmem>>, vector<8x16xf32>
      %46 = arith.addf %43, %45 : vector<8x16xf32>
      %47 = vector.broadcast %29 : vector<1x16xf32> to vector<8x16xf32>
      %48 = arith.mulf %46, %47 : vector<8x16xf32>
      %cst_39 = arith.constant 0.000000e+00 : f32
      %cst_40 = arith.constant 1.000000e+00 : f32
      %49 = vector.broadcast %cst_39 : f32 to vector<8x16xf32>
      %50 = arith.maximumf %49, %48 : vector<8x16xf32>
      %51 = vector.broadcast %cst_40 : f32 to vector<8x16xf32>
      %52 = arith.minimumf %51, %50 : vector<8x16xf32>
      %53 = vector.broadcast %cst_30 : f32 to vector<8x8xf32>
      %54 = arith.mulf %arg17, %53 : vector<8x8xf32>
      %cst_41 = arith.constant dense<0.000000e+00> : vector<8x8xf32>
      %55 = tpu.matmul %52, %28, %cst_41 {dimension_numbers = #tpu.dot_dimension_numbers<[1], [0], [0], [1], [0, 0, 1, 1], [], []>} : vector<8x16xf32>, vector<16x8xf32>, vector<8x8xf32> -> vector<8x8xf32>
      %56 = arith.addf %54, %55 : vector<8x8xf32>
      %57 = arith.index_cast %41 : i32 to index
      %c0_42 = arith.constant 0 : index
      %58 = vector.load %arg14[%57, %c0_42] : memref<256x8xf32, #tpu.memory_space<vmem>>, vector<8x8xf32>
      %59 = arith.addf %56, %58 : vector<8x8xf32>
      %60 = vector.broadcast %30 : vector<1x8xf32> to vector<8x8xf32>
      %61 = arith.mulf %59, %60 : vector<8x8xf32>
      %62 = vector.broadcast %31 : vector<1x8xf32> to vector<8x8xf32>
      %63 = arith.addf %61, %62 : vector<8x8xf32>
      %cst_43 = arith.constant 0.000000e+00 : f32
      %cst_44 = arith.constant 1.000000e+00 : f32
      %64 = vector.broadcast %cst_43 : f32 to vector<8x8xf32>
      %65 = arith.maximumf %64, %63 : vector<8x8xf32>
      %66 = vector.broadcast %cst_44 : f32 to vector<8x8xf32>
      %67 = arith.minimumf %66, %65 : vector<8x8xf32>
      %c16_i32_45 = arith.constant 16 : i32
      %68 = arith.muli %arg15, %c16_i32_45 : i32
      %c1_i32_46 = arith.constant 1 : i32
      %69 = arith.addi %68, %c1_i32_46 : i32
      %c8_i32_47 = arith.constant 8 : i32
      %70 = arith.muli %69, %c8_i32_47 : i32
      %71 = tpu.assume_multiple %70, 8 : i32
      %72 = vector.broadcast %cst_30 : f32 to vector<8x16xf32>
      %73 = arith.mulf %46, %72 : vector<8x16xf32>
      %74 = arith.index_cast %71 : i32 to index
      %c0_48 = arith.constant 0 : index
      %75 = vector.load %arg13[%74, %c0_48] : memref<256x16xf32, #tpu.memory_space<vmem>>, vector<8x16xf32>
      %76 = arith.addf %73, %75 : vector<8x16xf32>
      %77 = vector.broadcast %29 : vector<1x16xf32> to vector<8x16xf32>
      %78 = arith.mulf %76, %77 : vector<8x16xf32>
      %cst_49 = arith.constant 0.000000e+00 : f32
      %cst_50 = arith.constant 1.000000e+00 : f32
      %79 = vector.broadcast %cst_49 : f32 to vector<8x16xf32>
      %80 = arith.maximumf %79, %78 : vector<8x16xf32>
      %81 = vector.broadcast %cst_50 : f32 to vector<8x16xf32>
      %82 = arith.minimumf %81, %80 : vector<8x16xf32>
      %83 = vector.broadcast %cst_30 : f32 to vector<8x8xf32>
      %84 = arith.mulf %59, %83 : vector<8x8xf32>
      %cst_51 = arith.constant dense<0.000000e+00> : vector<8x8xf32>
      %85 = tpu.matmul %82, %28, %cst_51 {dimension_numbers = #tpu.dot_dimension_numbers<[1], [0], [0], [1], [0, 0, 1, 1], [], []>} : vector<8x16xf32>, vector<16x8xf32>, vector<8x8xf32> -> vector<8x8xf32>
      %86 = arith.addf %84, %85 : vector<8x8xf32>
      %87 = arith.index_cast %71 : i32 to index
      %c0_52 = arith.constant 0 : index
      %88 = vector.load %arg14[%87, %c0_52] : memref<256x8xf32, #tpu.memory_space<vmem>>, vector<8x8xf32>
      %89 = arith.addf %86, %88 : vector<8x8xf32>
      %90 = vector.broadcast %30 : vector<1x8xf32> to vector<8x8xf32>
      %91 = arith.mulf %89, %90 : vector<8x8xf32>
      %92 = vector.broadcast %31 : vector<1x8xf32> to vector<8x8xf32>
      %93 = arith.addf %91, %92 : vector<8x8xf32>
      %cst_53 = arith.constant 0.000000e+00 : f32
      %cst_54 = arith.constant 1.000000e+00 : f32
      %94 = vector.broadcast %cst_53 : f32 to vector<8x8xf32>
      %95 = arith.maximumf %94, %93 : vector<8x8xf32>
      %96 = vector.broadcast %cst_54 : f32 to vector<8x8xf32>
      %97 = arith.minimumf %96, %95 : vector<8x8xf32>
      %c16_i32_55 = arith.constant 16 : i32
      %98 = arith.muli %arg15, %c16_i32_55 : i32
      %c2_i32_56 = arith.constant 2 : i32
      %99 = arith.addi %98, %c2_i32_56 : i32
      %c8_i32_57 = arith.constant 8 : i32
      %100 = arith.muli %99, %c8_i32_57 : i32
      %101 = tpu.assume_multiple %100, 8 : i32
      %102 = vector.broadcast %cst_30 : f32 to vector<8x16xf32>
      %103 = arith.mulf %76, %102 : vector<8x16xf32>
      %104 = arith.index_cast %101 : i32 to index
      %c0_58 = arith.constant 0 : index
      %105 = vector.load %arg13[%104, %c0_58] : memref<256x16xf32, #tpu.memory_space<vmem>>, vector<8x16xf32>
      %106 = arith.addf %103, %105 : vector<8x16xf32>
      %107 = vector.broadcast %29 : vector<1x16xf32> to vector<8x16xf32>
      %108 = arith.mulf %106, %107 : vector<8x16xf32>
      %cst_59 = arith.constant 0.000000e+00 : f32
      %cst_60 = arith.constant 1.000000e+00 : f32
      %109 = vector.broadcast %cst_59 : f32 to vector<8x16xf32>
      %110 = arith.maximumf %109, %108 : vector<8x16xf32>
      %111 = vector.broadcast %cst_60 : f32 to vector<8x16xf32>
      %112 = arith.minimumf %111, %110 : vector<8x16xf32>
      %113 = vector.broadcast %cst_30 : f32 to vector<8x8xf32>
      %114 = arith.mulf %89, %113 : vector<8x8xf32>
      %cst_61 = arith.constant dense<0.000000e+00> : vector<8x8xf32>
      %115 = tpu.matmul %112, %28, %cst_61 {dimension_numbers = #tpu.dot_dimension_numbers<[1], [0], [0], [1], [0, 0, 1, 1], [], []>} : vector<8x16xf32>, vector<16x8xf32>, vector<8x8xf32> -> vector<8x8xf32>
      %116 = arith.addf %114, %115 : vector<8x8xf32>
      %117 = arith.index_cast %101 : i32 to index
      %c0_62 = arith.constant 0 : index
      %118 = vector.load %arg14[%117, %c0_62] : memref<256x8xf32, #tpu.memory_space<vmem>>, vector<8x8xf32>
      %119 = arith.addf %116, %118 : vector<8x8xf32>
      %120 = vector.broadcast %30 : vector<1x8xf32> to vector<8x8xf32>
      %121 = arith.mulf %119, %120 : vector<8x8xf32>
      %122 = vector.broadcast %31 : vector<1x8xf32> to vector<8x8xf32>
      %123 = arith.addf %121, %122 : vector<8x8xf32>
      %cst_63 = arith.constant 0.000000e+00 : f32
      %cst_64 = arith.constant 1.000000e+00 : f32
      %124 = vector.broadcast %cst_63 : f32 to vector<8x8xf32>
      %125 = arith.maximumf %124, %123 : vector<8x8xf32>
      %126 = vector.broadcast %cst_64 : f32 to vector<8x8xf32>
      %127 = arith.minimumf %126, %125 : vector<8x8xf32>
      %c16_i32_65 = arith.constant 16 : i32
      %128 = arith.muli %arg15, %c16_i32_65 : i32
      %c3_i32 = arith.constant 3 : i32
      %129 = arith.addi %128, %c3_i32 : i32
      %c8_i32_66 = arith.constant 8 : i32
      %130 = arith.muli %129, %c8_i32_66 : i32
      %131 = tpu.assume_multiple %130, 8 : i32
      %132 = vector.broadcast %cst_30 : f32 to vector<8x16xf32>
      %133 = arith.mulf %106, %132 : vector<8x16xf32>
      %134 = arith.index_cast %131 : i32 to index
      %c0_67 = arith.constant 0 : index
      %135 = vector.load %arg13[%134, %c0_67] : memref<256x16xf32, #tpu.memory_space<vmem>>, vector<8x16xf32>
      %136 = arith.addf %133, %135 : vector<8x16xf32>
      %137 = vector.broadcast %29 : vector<1x16xf32> to vector<8x16xf32>
      %138 = arith.mulf %136, %137 : vector<8x16xf32>
      %cst_68 = arith.constant 0.000000e+00 : f32
      %cst_69 = arith.constant 1.000000e+00 : f32
      %139 = vector.broadcast %cst_68 : f32 to vector<8x16xf32>
      %140 = arith.maximumf %139, %138 : vector<8x16xf32>
      %141 = vector.broadcast %cst_69 : f32 to vector<8x16xf32>
      %142 = arith.minimumf %141, %140 : vector<8x16xf32>
      %143 = vector.broadcast %cst_30 : f32 to vector<8x8xf32>
      %144 = arith.mulf %119, %143 : vector<8x8xf32>
      %cst_70 = arith.constant dense<0.000000e+00> : vector<8x8xf32>
      %145 = tpu.matmul %142, %28, %cst_70 {dimension_numbers = #tpu.dot_dimension_numbers<[1], [0], [0], [1], [0, 0, 1, 1], [], []>} : vector<8x16xf32>, vector<16x8xf32>, vector<8x8xf32> -> vector<8x8xf32>
      %146 = arith.addf %144, %145 : vector<8x8xf32>
      %147 = arith.index_cast %131 : i32 to index
      %c0_71 = arith.constant 0 : index
      %148 = vector.load %arg14[%147, %c0_71] : memref<256x8xf32, #tpu.memory_space<vmem>>, vector<8x8xf32>
      %149 = arith.addf %146, %148 : vector<8x8xf32>
      %150 = vector.broadcast %30 : vector<1x8xf32> to vector<8x8xf32>
      %151 = arith.mulf %149, %150 : vector<8x8xf32>
      %152 = vector.broadcast %31 : vector<1x8xf32> to vector<8x8xf32>
      %153 = arith.addf %151, %152 : vector<8x8xf32>
      %cst_72 = arith.constant 0.000000e+00 : f32
      %cst_73 = arith.constant 1.000000e+00 : f32
      %154 = vector.broadcast %cst_72 : f32 to vector<8x8xf32>
      %155 = arith.maximumf %154, %153 : vector<8x8xf32>
      %156 = vector.broadcast %cst_73 : f32 to vector<8x8xf32>
      %157 = arith.minimumf %156, %155 : vector<8x8xf32>
      %c16_i32_74 = arith.constant 16 : i32
      %158 = arith.muli %arg15, %c16_i32_74 : i32
      %c4_i32 = arith.constant 4 : i32
      %159 = arith.addi %158, %c4_i32 : i32
      %c8_i32_75 = arith.constant 8 : i32
      %160 = arith.muli %159, %c8_i32_75 : i32
      %161 = tpu.assume_multiple %160, 8 : i32
      %162 = vector.broadcast %cst_30 : f32 to vector<8x16xf32>
      %163 = arith.mulf %136, %162 : vector<8x16xf32>
      %164 = arith.index_cast %161 : i32 to index
      %c0_76 = arith.constant 0 : index
      %165 = vector.load %arg13[%164, %c0_76] : memref<256x16xf32, #tpu.memory_space<vmem>>, vector<8x16xf32>
      %166 = arith.addf %163, %165 : vector<8x16xf32>
      %167 = vector.broadcast %29 : vector<1x16xf32> to vector<8x16xf32>
      %168 = arith.mulf %166, %167 : vector<8x16xf32>
      %cst_77 = arith.constant 0.000000e+00 : f32
      %cst_78 = arith.constant 1.000000e+00 : f32
      %169 = vector.broadcast %cst_77 : f32 to vector<8x16xf32>
      %170 = arith.maximumf %169, %168 : vector<8x16xf32>
      %171 = vector.broadcast %cst_78 : f32 to vector<8x16xf32>
      %172 = arith.minimumf %171, %170 : vector<8x16xf32>
      %173 = vector.broadcast %cst_30 : f32 to vector<8x8xf32>
      %174 = arith.mulf %149, %173 : vector<8x8xf32>
      %cst_79 = arith.constant dense<0.000000e+00> : vector<8x8xf32>
      %175 = tpu.matmul %172, %28, %cst_79 {dimension_numbers = #tpu.dot_dimension_numbers<[1], [0], [0], [1], [0, 0, 1, 1], [], []>} : vector<8x16xf32>, vector<16x8xf32>, vector<8x8xf32> -> vector<8x8xf32>
      %176 = arith.addf %174, %175 : vector<8x8xf32>
      %177 = arith.index_cast %161 : i32 to index
      %c0_80 = arith.constant 0 : index
      %178 = vector.load %arg14[%177, %c0_80] : memref<256x8xf32, #tpu.memory_space<vmem>>, vector<8x8xf32>
      %179 = arith.addf %176, %178 : vector<8x8xf32>
      %180 = vector.broadcast %30 : vector<1x8xf32> to vector<8x8xf32>
      %181 = arith.mulf %179, %180 : vector<8x8xf32>
      %182 = vector.broadcast %31 : vector<1x8xf32> to vector<8x8xf32>
      %183 = arith.addf %181, %182 : vector<8x8xf32>
      %cst_81 = arith.constant 0.000000e+00 : f32
      %cst_82 = arith.constant 1.000000e+00 : f32
      %184 = vector.broadcast %cst_81 : f32 to vector<8x8xf32>
      %185 = arith.maximumf %184, %183 : vector<8x8xf32>
      %186 = vector.broadcast %cst_82 : f32 to vector<8x8xf32>
      %187 = arith.minimumf %186, %185 : vector<8x8xf32>
      %c16_i32_83 = arith.constant 16 : i32
      %188 = arith.muli %arg15, %c16_i32_83 : i32
      %c5_i32 = arith.constant 5 : i32
      %189 = arith.addi %188, %c5_i32 : i32
      %c8_i32_84 = arith.constant 8 : i32
      %190 = arith.muli %189, %c8_i32_84 : i32
      %191 = tpu.assume_multiple %190, 8 : i32
      %192 = vector.broadcast %cst_30 : f32 to vector<8x16xf32>
      %193 = arith.mulf %166, %192 : vector<8x16xf32>
      %194 = arith.index_cast %191 : i32 to index
      %c0_85 = arith.constant 0 : index
      %195 = vector.load %arg13[%194, %c0_85] : memref<256x16xf32, #tpu.memory_space<vmem>>, vector<8x16xf32>
      %196 = arith.addf %193, %195 : vector<8x16xf32>
      %197 = vector.broadcast %29 : vector<1x16xf32> to vector<8x16xf32>
      %198 = arith.mulf %196, %197 : vector<8x16xf32>
      %cst_86 = arith.constant 0.000000e+00 : f32
      %cst_87 = arith.constant 1.000000e+00 : f32
      %199 = vector.broadcast %cst_86 : f32 to vector<8x16xf32>
      %200 = arith.maximumf %199, %198 : vector<8x16xf32>
      %201 = vector.broadcast %cst_87 : f32 to vector<8x16xf32>
      %202 = arith.minimumf %201, %200 : vector<8x16xf32>
      %203 = vector.broadcast %cst_30 : f32 to vector<8x8xf32>
      %204 = arith.mulf %179, %203 : vector<8x8xf32>
      %cst_88 = arith.constant dense<0.000000e+00> : vector<8x8xf32>
      %205 = tpu.matmul %202, %28, %cst_88 {dimension_numbers = #tpu.dot_dimension_numbers<[1], [0], [0], [1], [0, 0, 1, 1], [], []>} : vector<8x16xf32>, vector<16x8xf32>, vector<8x8xf32> -> vector<8x8xf32>
      %206 = arith.addf %204, %205 : vector<8x8xf32>
      %207 = arith.index_cast %191 : i32 to index
      %c0_89 = arith.constant 0 : index
      %208 = vector.load %arg14[%207, %c0_89] : memref<256x8xf32, #tpu.memory_space<vmem>>, vector<8x8xf32>
      %209 = arith.addf %206, %208 : vector<8x8xf32>
      %210 = vector.broadcast %30 : vector<1x8xf32> to vector<8x8xf32>
      %211 = arith.mulf %209, %210 : vector<8x8xf32>
      %212 = vector.broadcast %31 : vector<1x8xf32> to vector<8x8xf32>
      %213 = arith.addf %211, %212 : vector<8x8xf32>
      %cst_90 = arith.constant 0.000000e+00 : f32
      %cst_91 = arith.constant 1.000000e+00 : f32
      %214 = vector.broadcast %cst_90 : f32 to vector<8x8xf32>
      %215 = arith.maximumf %214, %213 : vector<8x8xf32>
      %216 = vector.broadcast %cst_91 : f32 to vector<8x8xf32>
      %217 = arith.minimumf %216, %215 : vector<8x8xf32>
      %c16_i32_92 = arith.constant 16 : i32
      %218 = arith.muli %arg15, %c16_i32_92 : i32
      %c6_i32 = arith.constant 6 : i32
      %219 = arith.addi %218, %c6_i32 : i32
      %c8_i32_93 = arith.constant 8 : i32
      %220 = arith.muli %219, %c8_i32_93 : i32
      %221 = tpu.assume_multiple %220, 8 : i32
      %222 = vector.broadcast %cst_30 : f32 to vector<8x16xf32>
      %223 = arith.mulf %196, %222 : vector<8x16xf32>
      %224 = arith.index_cast %221 : i32 to index
      %c0_94 = arith.constant 0 : index
      %225 = vector.load %arg13[%224, %c0_94] : memref<256x16xf32, #tpu.memory_space<vmem>>, vector<8x16xf32>
      %226 = arith.addf %223, %225 : vector<8x16xf32>
      %227 = vector.broadcast %29 : vector<1x16xf32> to vector<8x16xf32>
      %228 = arith.mulf %226, %227 : vector<8x16xf32>
      %cst_95 = arith.constant 0.000000e+00 : f32
      %cst_96 = arith.constant 1.000000e+00 : f32
      %229 = vector.broadcast %cst_95 : f32 to vector<8x16xf32>
      %230 = arith.maximumf %229, %228 : vector<8x16xf32>
      %231 = vector.broadcast %cst_96 : f32 to vector<8x16xf32>
      %232 = arith.minimumf %231, %230 : vector<8x16xf32>
      %233 = vector.broadcast %cst_30 : f32 to vector<8x8xf32>
      %234 = arith.mulf %209, %233 : vector<8x8xf32>
      %cst_97 = arith.constant dense<0.000000e+00> : vector<8x8xf32>
      %235 = tpu.matmul %232, %28, %cst_97 {dimension_numbers = #tpu.dot_dimension_numbers<[1], [0], [0], [1], [0, 0, 1, 1], [], []>} : vector<8x16xf32>, vector<16x8xf32>, vector<8x8xf32> -> vector<8x8xf32>
      %236 = arith.addf %234, %235 : vector<8x8xf32>
      %237 = arith.index_cast %221 : i32 to index
      %c0_98 = arith.constant 0 : index
      %238 = vector.load %arg14[%237, %c0_98] : memref<256x8xf32, #tpu.memory_space<vmem>>, vector<8x8xf32>
      %239 = arith.addf %236, %238 : vector<8x8xf32>
      %240 = vector.broadcast %30 : vector<1x8xf32> to vector<8x8xf32>
      %241 = arith.mulf %239, %240 : vector<8x8xf32>
      %242 = vector.broadcast %31 : vector<1x8xf32> to vector<8x8xf32>
      %243 = arith.addf %241, %242 : vector<8x8xf32>
      %cst_99 = arith.constant 0.000000e+00 : f32
      %cst_100 = arith.constant 1.000000e+00 : f32
      %244 = vector.broadcast %cst_99 : f32 to vector<8x8xf32>
      %245 = arith.maximumf %244, %243 : vector<8x8xf32>
      %246 = vector.broadcast %cst_100 : f32 to vector<8x8xf32>
      %247 = arith.minimumf %246, %245 : vector<8x8xf32>
      %c16_i32_101 = arith.constant 16 : i32
      %248 = arith.muli %arg15, %c16_i32_101 : i32
      %c7_i32 = arith.constant 7 : i32
      %249 = arith.addi %248, %c7_i32 : i32
      %c8_i32_102 = arith.constant 8 : i32
      %250 = arith.muli %249, %c8_i32_102 : i32
      %251 = tpu.assume_multiple %250, 8 : i32
      %252 = vector.broadcast %cst_30 : f32 to vector<8x16xf32>
      %253 = arith.mulf %226, %252 : vector<8x16xf32>
      %254 = arith.index_cast %251 : i32 to index
      %c0_103 = arith.constant 0 : index
      %255 = vector.load %arg13[%254, %c0_103] : memref<256x16xf32, #tpu.memory_space<vmem>>, vector<8x16xf32>
      %256 = arith.addf %253, %255 : vector<8x16xf32>
      %257 = vector.broadcast %29 : vector<1x16xf32> to vector<8x16xf32>
      %258 = arith.mulf %256, %257 : vector<8x16xf32>
      %cst_104 = arith.constant 0.000000e+00 : f32
      %cst_105 = arith.constant 1.000000e+00 : f32
      %259 = vector.broadcast %cst_104 : f32 to vector<8x16xf32>
      %260 = arith.maximumf %259, %258 : vector<8x16xf32>
      %261 = vector.broadcast %cst_105 : f32 to vector<8x16xf32>
      %262 = arith.minimumf %261, %260 : vector<8x16xf32>
      %263 = vector.broadcast %cst_30 : f32 to vector<8x8xf32>
      %264 = arith.mulf %239, %263 : vector<8x8xf32>
      %cst_106 = arith.constant dense<0.000000e+00> : vector<8x8xf32>
      %265 = tpu.matmul %262, %28, %cst_106 {dimension_numbers = #tpu.dot_dimension_numbers<[1], [0], [0], [1], [0, 0, 1, 1], [], []>} : vector<8x16xf32>, vector<16x8xf32>, vector<8x8xf32> -> vector<8x8xf32>
      %266 = arith.addf %264, %265 : vector<8x8xf32>
      %267 = arith.index_cast %251 : i32 to index
      %c0_107 = arith.constant 0 : index
      %268 = vector.load %arg14[%267, %c0_107] : memref<256x8xf32, #tpu.memory_space<vmem>>, vector<8x8xf32>
      %269 = arith.addf %266, %268 : vector<8x8xf32>
      %270 = vector.broadcast %30 : vector<1x8xf32> to vector<8x8xf32>
      %271 = arith.mulf %269, %270 : vector<8x8xf32>
      %272 = vector.broadcast %31 : vector<1x8xf32> to vector<8x8xf32>
      %273 = arith.addf %271, %272 : vector<8x8xf32>
      %cst_108 = arith.constant 0.000000e+00 : f32
      %cst_109 = arith.constant 1.000000e+00 : f32
      %274 = vector.broadcast %cst_108 : f32 to vector<8x8xf32>
      %275 = arith.maximumf %274, %273 : vector<8x8xf32>
      %276 = vector.broadcast %cst_109 : f32 to vector<8x8xf32>
      %277 = arith.minimumf %276, %275 : vector<8x8xf32>
      %c16_i32_110 = arith.constant 16 : i32
      %278 = arith.muli %arg15, %c16_i32_110 : i32
      %c8_i32_111 = arith.constant 8 : i32
      %279 = arith.addi %278, %c8_i32_111 : i32
      %c8_i32_112 = arith.constant 8 : i32
      %280 = arith.muli %279, %c8_i32_112 : i32
      %281 = tpu.assume_multiple %280, 8 : i32
      %282 = vector.broadcast %cst_30 : f32 to vector<8x16xf32>
      %283 = arith.mulf %256, %282 : vector<8x16xf32>
      %284 = arith.index_cast %281 : i32 to index
      %c0_113 = arith.constant 0 : index
      %285 = vector.load %arg13[%284, %c0_113] : memref<256x16xf32, #tpu.memory_space<vmem>>, vector<8x16xf32>
      %286 = arith.addf %283, %285 : vector<8x16xf32>
      %287 = vector.broadcast %29 : vector<1x16xf32> to vector<8x16xf32>
      %288 = arith.mulf %286, %287 : vector<8x16xf32>
      %cst_114 = arith.constant 0.000000e+00 : f32
      %cst_115 = arith.constant 1.000000e+00 : f32
      %289 = vector.broadcast %cst_114 : f32 to vector<8x16xf32>
      %290 = arith.maximumf %289, %288 : vector<8x16xf32>
      %291 = vector.broadcast %cst_115 : f32 to vector<8x16xf32>
      %292 = arith.minimumf %291, %290 : vector<8x16xf32>
      %293 = vector.broadcast %cst_30 : f32 to vector<8x8xf32>
      %294 = arith.mulf %269, %293 : vector<8x8xf32>
      %cst_116 = arith.constant dense<0.000000e+00> : vector<8x8xf32>
      %295 = tpu.matmul %292, %28, %cst_116 {dimension_numbers = #tpu.dot_dimension_numbers<[1], [0], [0], [1], [0, 0, 1, 1], [], []>} : vector<8x16xf32>, vector<16x8xf32>, vector<8x8xf32> -> vector<8x8xf32>
      %296 = arith.addf %294, %295 : vector<8x8xf32>
      %297 = arith.index_cast %281 : i32 to index
      %c0_117 = arith.constant 0 : index
      %298 = vector.load %arg14[%297, %c0_117] : memref<256x8xf32, #tpu.memory_space<vmem>>, vector<8x8xf32>
      %299 = arith.addf %296, %298 : vector<8x8xf32>
      %300 = vector.broadcast %30 : vector<1x8xf32> to vector<8x8xf32>
      %301 = arith.mulf %299, %300 : vector<8x8xf32>
      %302 = vector.broadcast %31 : vector<1x8xf32> to vector<8x8xf32>
      %303 = arith.addf %301, %302 : vector<8x8xf32>
      %cst_118 = arith.constant 0.000000e+00 : f32
      %cst_119 = arith.constant 1.000000e+00 : f32
      %304 = vector.broadcast %cst_118 : f32 to vector<8x8xf32>
      %305 = arith.maximumf %304, %303 : vector<8x8xf32>
      %306 = vector.broadcast %cst_119 : f32 to vector<8x8xf32>
      %307 = arith.minimumf %306, %305 : vector<8x8xf32>
      %c16_i32_120 = arith.constant 16 : i32
      %308 = arith.muli %arg15, %c16_i32_120 : i32
      %c9_i32 = arith.constant 9 : i32
      %309 = arith.addi %308, %c9_i32 : i32
      %c8_i32_121 = arith.constant 8 : i32
      %310 = arith.muli %309, %c8_i32_121 : i32
      %311 = tpu.assume_multiple %310, 8 : i32
      %312 = vector.broadcast %cst_30 : f32 to vector<8x16xf32>
      %313 = arith.mulf %286, %312 : vector<8x16xf32>
      %314 = arith.index_cast %311 : i32 to index
      %c0_122 = arith.constant 0 : index
      %315 = vector.load %arg13[%314, %c0_122] : memref<256x16xf32, #tpu.memory_space<vmem>>, vector<8x16xf32>
      %316 = arith.addf %313, %315 : vector<8x16xf32>
      %317 = vector.broadcast %29 : vector<1x16xf32> to vector<8x16xf32>
      %318 = arith.mulf %316, %317 : vector<8x16xf32>
      %cst_123 = arith.constant 0.000000e+00 : f32
      %cst_124 = arith.constant 1.000000e+00 : f32
      %319 = vector.broadcast %cst_123 : f32 to vector<8x16xf32>
      %320 = arith.maximumf %319, %318 : vector<8x16xf32>
      %321 = vector.broadcast %cst_124 : f32 to vector<8x16xf32>
      %322 = arith.minimumf %321, %320 : vector<8x16xf32>
      %323 = vector.broadcast %cst_30 : f32 to vector<8x8xf32>
      %324 = arith.mulf %299, %323 : vector<8x8xf32>
      %cst_125 = arith.constant dense<0.000000e+00> : vector<8x8xf32>
      %325 = tpu.matmul %322, %28, %cst_125 {dimension_numbers = #tpu.dot_dimension_numbers<[1], [0], [0], [1], [0, 0, 1, 1], [], []>} : vector<8x16xf32>, vector<16x8xf32>, vector<8x8xf32> -> vector<8x8xf32>
      %326 = arith.addf %324, %325 : vector<8x8xf32>
      %327 = arith.index_cast %311 : i32 to index
      %c0_126 = arith.constant 0 : index
      %328 = vector.load %arg14[%327, %c0_126] : memref<256x8xf32, #tpu.memory_space<vmem>>, vector<8x8xf32>
      %329 = arith.addf %326, %328 : vector<8x8xf32>
      %330 = vector.broadcast %30 : vector<1x8xf32> to vector<8x8xf32>
      %331 = arith.mulf %329, %330 : vector<8x8xf32>
      %332 = vector.broadcast %31 : vector<1x8xf32> to vector<8x8xf32>
      %333 = arith.addf %331, %332 : vector<8x8xf32>
      %cst_127 = arith.constant 0.000000e+00 : f32
      %cst_128 = arith.constant 1.000000e+00 : f32
      %334 = vector.broadcast %cst_127 : f32 to vector<8x8xf32>
      %335 = arith.maximumf %334, %333 : vector<8x8xf32>
      %336 = vector.broadcast %cst_128 : f32 to vector<8x8xf32>
      %337 = arith.minimumf %336, %335 : vector<8x8xf32>
      %c16_i32_129 = arith.constant 16 : i32
      %338 = arith.muli %arg15, %c16_i32_129 : i32
      %c10_i32 = arith.constant 10 : i32
      %339 = arith.addi %338, %c10_i32 : i32
      %c8_i32_130 = arith.constant 8 : i32
      %340 = arith.muli %339, %c8_i32_130 : i32
      %341 = tpu.assume_multiple %340, 8 : i32
      %342 = vector.broadcast %cst_30 : f32 to vector<8x16xf32>
      %343 = arith.mulf %316, %342 : vector<8x16xf32>
      %344 = arith.index_cast %341 : i32 to index
      %c0_131 = arith.constant 0 : index
      %345 = vector.load %arg13[%344, %c0_131] : memref<256x16xf32, #tpu.memory_space<vmem>>, vector<8x16xf32>
      %346 = arith.addf %343, %345 : vector<8x16xf32>
      %347 = vector.broadcast %29 : vector<1x16xf32> to vector<8x16xf32>
      %348 = arith.mulf %346, %347 : vector<8x16xf32>
      %cst_132 = arith.constant 0.000000e+00 : f32
      %cst_133 = arith.constant 1.000000e+00 : f32
      %349 = vector.broadcast %cst_132 : f32 to vector<8x16xf32>
      %350 = arith.maximumf %349, %348 : vector<8x16xf32>
      %351 = vector.broadcast %cst_133 : f32 to vector<8x16xf32>
      %352 = arith.minimumf %351, %350 : vector<8x16xf32>
      %353 = vector.broadcast %cst_30 : f32 to vector<8x8xf32>
      %354 = arith.mulf %329, %353 : vector<8x8xf32>
      %cst_134 = arith.constant dense<0.000000e+00> : vector<8x8xf32>
      %355 = tpu.matmul %352, %28, %cst_134 {dimension_numbers = #tpu.dot_dimension_numbers<[1], [0], [0], [1], [0, 0, 1, 1], [], []>} : vector<8x16xf32>, vector<16x8xf32>, vector<8x8xf32> -> vector<8x8xf32>
      %356 = arith.addf %354, %355 : vector<8x8xf32>
      %357 = arith.index_cast %341 : i32 to index
      %c0_135 = arith.constant 0 : index
      %358 = vector.load %arg14[%357, %c0_135] : memref<256x8xf32, #tpu.memory_space<vmem>>, vector<8x8xf32>
      %359 = arith.addf %356, %358 : vector<8x8xf32>
      %360 = vector.broadcast %30 : vector<1x8xf32> to vector<8x8xf32>
      %361 = arith.mulf %359, %360 : vector<8x8xf32>
      %362 = vector.broadcast %31 : vector<1x8xf32> to vector<8x8xf32>
      %363 = arith.addf %361, %362 : vector<8x8xf32>
      %cst_136 = arith.constant 0.000000e+00 : f32
      %cst_137 = arith.constant 1.000000e+00 : f32
      %364 = vector.broadcast %cst_136 : f32 to vector<8x8xf32>
      %365 = arith.maximumf %364, %363 : vector<8x8xf32>
      %366 = vector.broadcast %cst_137 : f32 to vector<8x8xf32>
      %367 = arith.minimumf %366, %365 : vector<8x8xf32>
      %c16_i32_138 = arith.constant 16 : i32
      %368 = arith.muli %arg15, %c16_i32_138 : i32
      %c11_i32 = arith.constant 11 : i32
      %369 = arith.addi %368, %c11_i32 : i32
      %c8_i32_139 = arith.constant 8 : i32
      %370 = arith.muli %369, %c8_i32_139 : i32
      %371 = tpu.assume_multiple %370, 8 : i32
      %372 = vector.broadcast %cst_30 : f32 to vector<8x16xf32>
      %373 = arith.mulf %346, %372 : vector<8x16xf32>
      %374 = arith.index_cast %371 : i32 to index
      %c0_140 = arith.constant 0 : index
      %375 = vector.load %arg13[%374, %c0_140] : memref<256x16xf32, #tpu.memory_space<vmem>>, vector<8x16xf32>
      %376 = arith.addf %373, %375 : vector<8x16xf32>
      %377 = vector.broadcast %29 : vector<1x16xf32> to vector<8x16xf32>
      %378 = arith.mulf %376, %377 : vector<8x16xf32>
      %cst_141 = arith.constant 0.000000e+00 : f32
      %cst_142 = arith.constant 1.000000e+00 : f32
      %379 = vector.broadcast %cst_141 : f32 to vector<8x16xf32>
      %380 = arith.maximumf %379, %378 : vector<8x16xf32>
      %381 = vector.broadcast %cst_142 : f32 to vector<8x16xf32>
      %382 = arith.minimumf %381, %380 : vector<8x16xf32>
      %383 = vector.broadcast %cst_30 : f32 to vector<8x8xf32>
      %384 = arith.mulf %359, %383 : vector<8x8xf32>
      %cst_143 = arith.constant dense<0.000000e+00> : vector<8x8xf32>
      %385 = tpu.matmul %382, %28, %cst_143 {dimension_numbers = #tpu.dot_dimension_numbers<[1], [0], [0], [1], [0, 0, 1, 1], [], []>} : vector<8x16xf32>, vector<16x8xf32>, vector<8x8xf32> -> vector<8x8xf32>
      %386 = arith.addf %384, %385 : vector<8x8xf32>
      %387 = arith.index_cast %371 : i32 to index
      %c0_144 = arith.constant 0 : index
      %388 = vector.load %arg14[%387, %c0_144] : memref<256x8xf32, #tpu.memory_space<vmem>>, vector<8x8xf32>
      %389 = arith.addf %386, %388 : vector<8x8xf32>
      %390 = vector.broadcast %30 : vector<1x8xf32> to vector<8x8xf32>
      %391 = arith.mulf %389, %390 : vector<8x8xf32>
      %392 = vector.broadcast %31 : vector<1x8xf32> to vector<8x8xf32>
      %393 = arith.addf %391, %392 : vector<8x8xf32>
      %cst_145 = arith.constant 0.000000e+00 : f32
      %cst_146 = arith.constant 1.000000e+00 : f32
      %394 = vector.broadcast %cst_145 : f32 to vector<8x8xf32>
      %395 = arith.maximumf %394, %393 : vector<8x8xf32>
      %396 = vector.broadcast %cst_146 : f32 to vector<8x8xf32>
      %397 = arith.minimumf %396, %395 : vector<8x8xf32>
      %c16_i32_147 = arith.constant 16 : i32
      %398 = arith.muli %arg15, %c16_i32_147 : i32
      %c12_i32 = arith.constant 12 : i32
      %399 = arith.addi %398, %c12_i32 : i32
      %c8_i32_148 = arith.constant 8 : i32
      %400 = arith.muli %399, %c8_i32_148 : i32
      %401 = tpu.assume_multiple %400, 8 : i32
      %402 = vector.broadcast %cst_30 : f32 to vector<8x16xf32>
      %403 = arith.mulf %376, %402 : vector<8x16xf32>
      %404 = arith.index_cast %401 : i32 to index
      %c0_149 = arith.constant 0 : index
      %405 = vector.load %arg13[%404, %c0_149] : memref<256x16xf32, #tpu.memory_space<vmem>>, vector<8x16xf32>
      %406 = arith.addf %403, %405 : vector<8x16xf32>
      %407 = vector.broadcast %29 : vector<1x16xf32> to vector<8x16xf32>
      %408 = arith.mulf %406, %407 : vector<8x16xf32>
      %cst_150 = arith.constant 0.000000e+00 : f32
      %cst_151 = arith.constant 1.000000e+00 : f32
      %409 = vector.broadcast %cst_150 : f32 to vector<8x16xf32>
      %410 = arith.maximumf %409, %408 : vector<8x16xf32>
      %411 = vector.broadcast %cst_151 : f32 to vector<8x16xf32>
      %412 = arith.minimumf %411, %410 : vector<8x16xf32>
      %413 = vector.broadcast %cst_30 : f32 to vector<8x8xf32>
      %414 = arith.mulf %389, %413 : vector<8x8xf32>
      %cst_152 = arith.constant dense<0.000000e+00> : vector<8x8xf32>
      %415 = tpu.matmul %412, %28, %cst_152 {dimension_numbers = #tpu.dot_dimension_numbers<[1], [0], [0], [1], [0, 0, 1, 1], [], []>} : vector<8x16xf32>, vector<16x8xf32>, vector<8x8xf32> -> vector<8x8xf32>
      %416 = arith.addf %414, %415 : vector<8x8xf32>
      %417 = arith.index_cast %401 : i32 to index
      %c0_153 = arith.constant 0 : index
      %418 = vector.load %arg14[%417, %c0_153] : memref<256x8xf32, #tpu.memory_space<vmem>>, vector<8x8xf32>
      %419 = arith.addf %416, %418 : vector<8x8xf32>
      %420 = vector.broadcast %30 : vector<1x8xf32> to vector<8x8xf32>
      %421 = arith.mulf %419, %420 : vector<8x8xf32>
      %422 = vector.broadcast %31 : vector<1x8xf32> to vector<8x8xf32>
      %423 = arith.addf %421, %422 : vector<8x8xf32>
      %cst_154 = arith.constant 0.000000e+00 : f32
      %cst_155 = arith.constant 1.000000e+00 : f32
      %424 = vector.broadcast %cst_154 : f32 to vector<8x8xf32>
      %425 = arith.maximumf %424, %423 : vector<8x8xf32>
      %426 = vector.broadcast %cst_155 : f32 to vector<8x8xf32>
      %427 = arith.minimumf %426, %425 : vector<8x8xf32>
      %c16_i32_156 = arith.constant 16 : i32
      %428 = arith.muli %arg15, %c16_i32_156 : i32
      %c13_i32 = arith.constant 13 : i32
      %429 = arith.addi %428, %c13_i32 : i32
      %c8_i32_157 = arith.constant 8 : i32
      %430 = arith.muli %429, %c8_i32_157 : i32
      %431 = tpu.assume_multiple %430, 8 : i32
      %432 = vector.broadcast %cst_30 : f32 to vector<8x16xf32>
      %433 = arith.mulf %406, %432 : vector<8x16xf32>
      %434 = arith.index_cast %431 : i32 to index
      %c0_158 = arith.constant 0 : index
      %435 = vector.load %arg13[%434, %c0_158] : memref<256x16xf32, #tpu.memory_space<vmem>>, vector<8x16xf32>
      %436 = arith.addf %433, %435 : vector<8x16xf32>
      %437 = vector.broadcast %29 : vector<1x16xf32> to vector<8x16xf32>
      %438 = arith.mulf %436, %437 : vector<8x16xf32>
      %cst_159 = arith.constant 0.000000e+00 : f32
      %cst_160 = arith.constant 1.000000e+00 : f32
      %439 = vector.broadcast %cst_159 : f32 to vector<8x16xf32>
      %440 = arith.maximumf %439, %438 : vector<8x16xf32>
      %441 = vector.broadcast %cst_160 : f32 to vector<8x16xf32>
      %442 = arith.minimumf %441, %440 : vector<8x16xf32>
      %443 = vector.broadcast %cst_30 : f32 to vector<8x8xf32>
      %444 = arith.mulf %419, %443 : vector<8x8xf32>
      %cst_161 = arith.constant dense<0.000000e+00> : vector<8x8xf32>
      %445 = tpu.matmul %442, %28, %cst_161 {dimension_numbers = #tpu.dot_dimension_numbers<[1], [0], [0], [1], [0, 0, 1, 1], [], []>} : vector<8x16xf32>, vector<16x8xf32>, vector<8x8xf32> -> vector<8x8xf32>
      %446 = arith.addf %444, %445 : vector<8x8xf32>
      %447 = arith.index_cast %431 : i32 to index
      %c0_162 = arith.constant 0 : index
      %448 = vector.load %arg14[%447, %c0_162] : memref<256x8xf32, #tpu.memory_space<vmem>>, vector<8x8xf32>
      %449 = arith.addf %446, %448 : vector<8x8xf32>
      %450 = vector.broadcast %30 : vector<1x8xf32> to vector<8x8xf32>
      %451 = arith.mulf %449, %450 : vector<8x8xf32>
      %452 = vector.broadcast %31 : vector<1x8xf32> to vector<8x8xf32>
      %453 = arith.addf %451, %452 : vector<8x8xf32>
      %cst_163 = arith.constant 0.000000e+00 : f32
      %cst_164 = arith.constant 1.000000e+00 : f32
      %454 = vector.broadcast %cst_163 : f32 to vector<8x8xf32>
      %455 = arith.maximumf %454, %453 : vector<8x8xf32>
      %456 = vector.broadcast %cst_164 : f32 to vector<8x8xf32>
      %457 = arith.minimumf %456, %455 : vector<8x8xf32>
      %c16_i32_165 = arith.constant 16 : i32
      %458 = arith.muli %arg15, %c16_i32_165 : i32
      %c14_i32 = arith.constant 14 : i32
      %459 = arith.addi %458, %c14_i32 : i32
      %c8_i32_166 = arith.constant 8 : i32
      %460 = arith.muli %459, %c8_i32_166 : i32
      %461 = tpu.assume_multiple %460, 8 : i32
      %462 = vector.broadcast %cst_30 : f32 to vector<8x16xf32>
      %463 = arith.mulf %436, %462 : vector<8x16xf32>
      %464 = arith.index_cast %461 : i32 to index
      %c0_167 = arith.constant 0 : index
      %465 = vector.load %arg13[%464, %c0_167] : memref<256x16xf32, #tpu.memory_space<vmem>>, vector<8x16xf32>
      %466 = arith.addf %463, %465 : vector<8x16xf32>
      %467 = vector.broadcast %29 : vector<1x16xf32> to vector<8x16xf32>
      %468 = arith.mulf %466, %467 : vector<8x16xf32>
      %cst_168 = arith.constant 0.000000e+00 : f32
      %cst_169 = arith.constant 1.000000e+00 : f32
      %469 = vector.broadcast %cst_168 : f32 to vector<8x16xf32>
      %470 = arith.maximumf %469, %468 : vector<8x16xf32>
      %471 = vector.broadcast %cst_169 : f32 to vector<8x16xf32>
      %472 = arith.minimumf %471, %470 : vector<8x16xf32>
      %473 = vector.broadcast %cst_30 : f32 to vector<8x8xf32>
      %474 = arith.mulf %449, %473 : vector<8x8xf32>
      %cst_170 = arith.constant dense<0.000000e+00> : vector<8x8xf32>
      %475 = tpu.matmul %472, %28, %cst_170 {dimension_numbers = #tpu.dot_dimension_numbers<[1], [0], [0], [1], [0, 0, 1, 1], [], []>} : vector<8x16xf32>, vector<16x8xf32>, vector<8x8xf32> -> vector<8x8xf32>
      %476 = arith.addf %474, %475 : vector<8x8xf32>
      %477 = arith.index_cast %461 : i32 to index
      %c0_171 = arith.constant 0 : index
      %478 = vector.load %arg14[%477, %c0_171] : memref<256x8xf32, #tpu.memory_space<vmem>>, vector<8x8xf32>
      %479 = arith.addf %476, %478 : vector<8x8xf32>
      %480 = vector.broadcast %30 : vector<1x8xf32> to vector<8x8xf32>
      %481 = arith.mulf %479, %480 : vector<8x8xf32>
      %482 = vector.broadcast %31 : vector<1x8xf32> to vector<8x8xf32>
      %483 = arith.addf %481, %482 : vector<8x8xf32>
      %cst_172 = arith.constant 0.000000e+00 : f32
      %cst_173 = arith.constant 1.000000e+00 : f32
      %484 = vector.broadcast %cst_172 : f32 to vector<8x8xf32>
      %485 = arith.maximumf %484, %483 : vector<8x8xf32>
      %486 = vector.broadcast %cst_173 : f32 to vector<8x8xf32>
      %487 = arith.minimumf %486, %485 : vector<8x8xf32>
      %c16_i32_174 = arith.constant 16 : i32
      %488 = arith.muli %arg15, %c16_i32_174 : i32
      %c15_i32 = arith.constant 15 : i32
      %489 = arith.addi %488, %c15_i32 : i32
      %c8_i32_175 = arith.constant 8 : i32
      %490 = arith.muli %489, %c8_i32_175 : i32
      %491 = tpu.assume_multiple %490, 8 : i32
      %492 = vector.broadcast %cst_30 : f32 to vector<8x16xf32>
      %493 = arith.mulf %466, %492 : vector<8x16xf32>
      %494 = arith.index_cast %491 : i32 to index
      %c0_176 = arith.constant 0 : index
      %495 = vector.load %arg13[%494, %c0_176] : memref<256x16xf32, #tpu.memory_space<vmem>>, vector<8x16xf32>
      %496 = arith.addf %493, %495 : vector<8x16xf32>
      %497 = vector.broadcast %29 : vector<1x16xf32> to vector<8x16xf32>
      %498 = arith.mulf %496, %497 : vector<8x16xf32>
      %cst_177 = arith.constant 0.000000e+00 : f32
      %cst_178 = arith.constant 1.000000e+00 : f32
      %499 = vector.broadcast %cst_177 : f32 to vector<8x16xf32>
      %500 = arith.maximumf %499, %498 : vector<8x16xf32>
      %501 = vector.broadcast %cst_178 : f32 to vector<8x16xf32>
      %502 = arith.minimumf %501, %500 : vector<8x16xf32>
      %503 = vector.broadcast %cst_30 : f32 to vector<8x8xf32>
      %504 = arith.mulf %479, %503 : vector<8x8xf32>
      %cst_179 = arith.constant dense<0.000000e+00> : vector<8x8xf32>
      %505 = tpu.matmul %502, %28, %cst_179 {dimension_numbers = #tpu.dot_dimension_numbers<[1], [0], [0], [1], [0, 0, 1, 1], [], []>} : vector<8x16xf32>, vector<16x8xf32>, vector<8x8xf32> -> vector<8x8xf32>
      %506 = arith.addf %504, %505 : vector<8x8xf32>
      %507 = arith.index_cast %491 : i32 to index
      %c0_180 = arith.constant 0 : index
      %508 = vector.load %arg14[%507, %c0_180] : memref<256x8xf32, #tpu.memory_space<vmem>>, vector<8x8xf32>
      %509 = arith.addf %506, %508 : vector<8x8xf32>
      %510 = vector.broadcast %30 : vector<1x8xf32> to vector<8x8xf32>
      %511 = arith.mulf %509, %510 : vector<8x8xf32>
      %512 = vector.broadcast %31 : vector<1x8xf32> to vector<8x8xf32>
      %513 = arith.addf %511, %512 : vector<8x8xf32>
      %cst_181 = arith.constant 0.000000e+00 : f32
      %cst_182 = arith.constant 1.000000e+00 : f32
      %514 = vector.broadcast %cst_181 : f32 to vector<8x8xf32>
      %515 = arith.maximumf %514, %513 : vector<8x8xf32>
      %516 = vector.broadcast %cst_182 : f32 to vector<8x8xf32>
      %517 = arith.minimumf %516, %515 : vector<8x8xf32>
      %518 = tpu.concatenate %67, %97, %127, %157, %187, %217, %247, %277, %307, %337, %367, %397, %427, %457, %487, %517 in 1 : vector<8x8xf32>, vector<8x8xf32>, vector<8x8xf32>, vector<8x8xf32>, vector<8x8xf32>, vector<8x8xf32>, vector<8x8xf32>, vector<8x8xf32>, vector<8x8xf32>, vector<8x8xf32>, vector<8x8xf32>, vector<8x8xf32>, vector<8x8xf32>, vector<8x8xf32>, vector<8x8xf32>, vector<8x8xf32> -> vector<8x128xf32>
      %519 = arith.index_cast %arg15 : i32 to index
      %c0_183 = arith.constant 0 : index
      %c0_184 = arith.constant 0 : index
      %520 = vector.load %arg10[%519, %c0_183, %c0_184] : memref<2x8x128xf32, #tpu.memory_space<vmem>>, vector<1x8x128xf32>
      %521 = vector.shape_cast %520 : vector<1x8x128xf32> to vector<8x128xf32>
      %522 = vector.shape_cast %518 : vector<8x128xf32> to vector<1x8x128xf32>
      tpu.vector_store %arg10[%519, %c0_183, %c0_184], %522 {strides = array<i32>} : memref<2x8x128xf32, #tpu.memory_space<vmem>>, vector<1x8x128xf32>,
      scf.yield %496, %509 : vector<8x16xf32>, vector<8x8xf32>
    }
    %c2_i32_32 = arith.constant 2 : i32
    %c0_33 = arith.constant 0 : index
    %c0_34 = arith.constant 0 : index
    %36 = vector.load %arg11[%c0_33, %c0_34] : memref<8x16xf32, #tpu.memory_space<vmem>>, vector<8x16xf32>
    tpu.vector_store %arg11[%c0_33, %c0_34], %35#0 {strides = array<i32>} : memref<8x16xf32, #tpu.memory_space<vmem>>, vector<8x16xf32>,
    %c0_35 = arith.constant 0 : index
    %c0_36 = arith.constant 0 : index
    %37 = vector.load %arg12[%c0_35, %c0_36] : memref<8x8xf32, #tpu.memory_space<vmem>>, vector<8x8xf32>
    tpu.vector_store %arg12[%c0_35, %c0_36], %35#1 {strides = array<i32>} : memref<8x8xf32, #tpu.memory_space<vmem>>, vector<8x8xf32>,
    return
  }
  func.func @transform_0(%arg0: i32) -> (i32, i32) {
    %c0_i32 = arith.constant 0 : i32
    %c0_i32_0 = arith.constant 0 : i32
    return %arg0, %c0_i32 : i32, i32
  }
  func.func @transform_1(%arg0: i32) -> (i32, i32) {
    %c0_i32 = arith.constant 0 : i32
    %c0_i32_0 = arith.constant 0 : i32
    %c0_i32_1 = arith.constant 0 : i32
    return %c0_i32, %c0_i32_0 : i32, i32
  }
  func.func @transform_2(%arg0: i32) -> (i32, i32) {
    %c0_i32 = arith.constant 0 : i32
    %c0_i32_0 = arith.constant 0 : i32
    %c0_i32_1 = arith.constant 0 : i32
    return %c0_i32, %c0_i32_0 : i32, i32
  }
  func.func @transform_3(%arg0: i32) -> (i32, i32) {
    %c0_i32 = arith.constant 0 : i32
    %c0_i32_0 = arith.constant 0 : i32
    %c0_i32_1 = arith.constant 0 : i32
    return %c0_i32, %c0_i32_0 : i32, i32
  }
  func.func @transform_4(%arg0: i32) -> (i32, i32) {
    %c0_i32 = arith.constant 0 : i32
    %c0_i32_0 = arith.constant 0 : i32
    %c0_i32_1 = arith.constant 0 : i32
    return %c0_i32, %c0_i32_0 : i32, i32
  }
  func.func @transform_5(%arg0: i32) -> (i32, i32) {
    %c0_i32 = arith.constant 0 : i32
    %c0_i32_0 = arith.constant 0 : i32
    %c0_i32_1 = arith.constant 0 : i32
    return %c0_i32, %c0_i32_0 : i32, i32
  }
  func.func @transform_6(%arg0: i32) -> (i32, i32) {
    %c0_i32 = arith.constant 0 : i32
    %c0_i32_0 = arith.constant 0 : i32
    %c0_i32_1 = arith.constant 0 : i32
    return %c0_i32, %c0_i32_0 : i32, i32
  }
  func.func @transform_7(%arg0: i32) -> (i32, i32) {
    %c0_i32 = arith.constant 0 : i32
    %c0_i32_0 = arith.constant 0 : i32
    %c0_i32_1 = arith.constant 0 : i32
    return %c0_i32, %c0_i32_0 : i32, i32
  }
  func.func @transform_8(%arg0: i32) -> (i32, i32) {
    %c0_i32 = arith.constant 0 : i32
    %c0_i32_0 = arith.constant 0 : i32
    %c0_i32_1 = arith.constant 0 : i32
    return %c0_i32, %c0_i32_0 : i32, i32
  }
  func.func @transform_9(%arg0: i32) -> (i32, i32, i32) {
    %c0_i32 = arith.constant 0 : i32
    %c0_i32_0 = arith.constant 0 : i32
    %c0_i32_1 = arith.constant 0 : i32
    return %arg0, %c0_i32, %c0_i32_0 : i32, i32, i32
  }
}

</mosaic_0001>

<llo_original>
// kernel: tpu_custom_call.1
$region0: #{tpu_custom_call.1}
  #allocation0 [shape = 'u32[]', space=smem, size = 0x4, offset = 0x4, fixed_abs, tag = 'smem constant byte address 0x4 - core index']
  #allocation1 [shape = 'u32[144,128]{1,0:T(1,128)}', space=vmem, size = 0x12000, scoped, tag = 'internal scratch']
  #allocation2 [shape = 'f32[8,16]{1,0:T(8,128)}', space=vmem, size = 0x1000, scoped, tag = 'scratch operand']
  #allocation3 [shape = 'f32[8,8]{1,0:T(8,128)}', space=vmem, size = 0x1000, scoped, tag = 'scratch operand']
  #allocation4 [shape = 'f32[256,16]{1,0:T(8,128)}', space=vmem, size = 0x20000, scoped, tag = 'scratch operand']
  #allocation5 [shape = 'f32[256,8]{1,0:T(8,128)}', space=vmem, size = 0x20000, scoped, tag = 'scratch operand']
  #allocation6 [shape = 'f32[1,1]{1,0:T(1,128)S(1)}', space=vmem, size = 0x200, scoped, tag = 'scoped memory for tpu_custom_call.1']
  %s0 = inlined_call_operand.vmem [shape: f32[1024,9], index: 0, kind: input, shape index: {}]
  %s1 = inlined_call_operand.vmem [shape: f32[8,16], index: 1, kind: input, shape index: {}]
  %s2 = inlined_call_operand.vmem [shape: f32[1,8], index: 2, kind: input, shape index: {}]
  %s3 = inlined_call_operand.vmem [shape: f32[16,8], index: 3, kind: input, shape index: {}]
  %s4 = inlined_call_operand.vmem [shape: f32[1,8], index: 4, kind: input, shape index: {}]
  %s5 = inlined_call_operand.vmem [shape: f32[1,16], index: 5, kind: input, shape index: {}]
  %s6 = inlined_call_operand.<no memory space> [shape: f32[1,1], index: 6, kind: input, shape index: {}]
  %s7 = inlined_call_operand.vmem [shape: f32[1,8], index: 7, kind: input, shape index: {}]
  %s8 = inlined_call_operand.vmem [shape: f32[1,8], index: 8, kind: input, shape index: {}]
  %s9 = inlined_call_operand.hbm [shape: f32[8,8,128], index: 9, kind: output, shape index: {}]
  %s10 = sld [smem:[#allocation0]]
  $region80: #{tpu_custom_call.1} parent=0
    _
  %s12 = ssub.s32 1, %s10
  %s13 = scalar_select 0, %s12, %s10
  %v14 = vstv %s6
  %15 = vst [vmem:[#allocation6] sm:$0x1] %v14
  $region1: #{tpu_custom_call.1} parent=0
    #allocation7 [shape = 'u8[16384]{0}', space=vmem, size = 0x4000, scoped, tag = 'output window, operand 0']
    #allocation8 [shape = 's32[2]{0}', space=sflag, size = 0x8, scoped, tag = 'scoped memory for tpu_custom_call.1']
    %16 = vsyncpa [#allocation8], 0
    %s17 = scalar_lea.sflag [#allocation8], 1
    %18 = vsyncpa %s17, 0
    loop: start=0, step=1, limit=6
    $region2: #{tpu_custom_call.1} parent=1 // loop_pre_header
      _
    $region3: #{tpu_custom_call.1} parent=1 // loop_header
      %s20 = sphi 0, %s24
      %p21 = scmp.ge.s32.totalorder %s20, 6
      %s30 = sphi 0, %s32
      %s33 = sphi 0, %s30
      %s34 = sphi 0, %s33
      %s50 = sphi 0, %s34
      %s54 = sphi 0, %s54
      %s56 = sphi 0, %s54
      %s57 = sphi 0, %s56
      %s71 = sphi 0, %s57
      %s75 = sphi 0, %s75
      %s77 = sphi 0, %s75
      %s78 = sphi 0, %s77
      %s92 = sphi 0, %s78
      %s96 = sphi 0, %s96
      %s98 = sphi 0, %s96
      %s99 = sphi 0, %s98
      %s113 = sphi 0, %s99
      %s117 = sphi 0, %s117
      %s119 = sphi 0, %s117
      %s120 = sphi 0, %s119
      %s134 = sphi 0, %s120
      %s138 = sphi 0, %s138
      %s140 = sphi 0, %s138
      %s141 = sphi 0, %s140
      %s155 = sphi 0, %s141
      %s159 = sphi 0, %s159
      %s161 = sphi 0, %s159
      %s162 = sphi 0, %s161
      %s176 = sphi 0, %s162
      %s180 = sphi 0, %s180
      %s182 = sphi 0, %s180
      %s183 = sphi 0, %s182
      %s197 = sphi 0, %s183
      %s201 = sphi 0, %s201
      %s203 = sphi 0, %s201
      %s204 = sphi 0, %s203
      %s218 = sphi 0, %s204
      %s224 = sphi 0, %s226
      %s227 = sphi 0, %s224
      %s228 = sphi 0, %s227
      %s244 = sphi 0, %s228
    $region4: #{tpu_custom_call.1} parent=1 // loop_header_branch
      %23 = sbr.rel (%p21) target = $region8
    $region5: #{tpu_custom_call.1} parent=1 // loop_body
      %s25 = ssub.s32 %s20, 1
      %s26 = ssub.s32 %s20, 2
      %s27 = sadd.s32 %s20, 1
      %s28 = ssub.s32 %s20, %s27
      %p29 = scmp.eq.s32.totalorder %s28, 0
      %s31 = sadd.s32 %s30, 1
      %s32 = scalar_select %p29, %s30, %s31
      %p35 = pneg %p29
      %p36 = scmp.eq.s32.totalorder %s20, 3
      %p37 = por %p35, %p36
      %p38 = scmp.ne.s32.totalorder %s30, %s33
      %p39 = scmp.eq.s32.totalorder %s20, 0
      %p40 = por %p38, %p39
      %p41 = scmp.ne.s32.totalorder %s30, %s33
      %p42 = scmp.eq.s32.totalorder %s25, 3
      %p43 = por %p41, %p42
      %p44 = scmp.ne.s32.totalorder %s33, %s34
      %p45 = scmp.eq.s32.totalorder %s25, 0
      %p46 = por %p44, %p45
      %p47 = scmp.ne.s32.totalorder %s33, %s34
      %p48 = scmp.eq.s32.totalorder %s26, 3
      %p49 = por %p47, %p48
      %p51 = scmp.ne.s32.totalorder %s34, %s50
      %p52 = scmp.eq.s32.totalorder %s26, 0
      %p53 = por %p51, %p52
      %s55 = sadd.s32 %s54, 1
      %p58 = scmp.eq.s32.totalorder %s20, 3
      %p59 = scmp.ne.s32.totalorder %s54, %s56
      %p60 = scmp.eq.s32.totalorder %s20, 0
      %p61 = por %p59, %p60
      %p62 = scmp.ne.s32.totalorder %s54, %s56
      %p63 = scmp.eq.s32.totalorder %s25, 3
      %p64 = por %p62, %p63
      %p65 = scmp.ne.s32.totalorder %s56, %s57
      %p66 = scmp.eq.s32.totalorder %s25, 0
      %p67 = por %p65, %p66
      %p68 = scmp.ne.s32.totalorder %s56, %s57
      %p69 = scmp.eq.s32.totalorder %s26, 3
      %p70 = por %p68, %p69
      %p72 = scmp.ne.s32.totalorder %s57, %s71
      %p73 = scmp.eq.s32.totalorder %s26, 0
      %p74 = por %p72, %p73
      %s76 = sadd.s32 %s75, 1
      %p79 = scmp.eq.s32.totalorder %s20, 3
      %p80 = scmp.ne.s32.totalorder %s75, %s77
      %p81 = scmp.eq.s32.totalorder %s20, 0
      %p82 = por %p80, %p81
      %p83 = scmp.ne.s32.totalorder %s75, %s77
      %p84 = scmp.eq.s32.totalorder %s25, 3
      %p85 = por %p83, %p84
      %p86 = scmp.ne.s32.totalorder %s77, %s78
      %p87 = scmp.eq.s32.totalorder %s25, 0
      %p88 = por %p86, %p87
      %p89 = scmp.ne.s32.totalorder %s77, %s78
      %p90 = scmp.eq.s32.totalorder %s26, 3
      %p91 = por %p89, %p90
      %p93 = scmp.ne.s32.totalorder %s78, %s92
      %p94 = scmp.eq.s32.totalorder %s26, 0
      %p95 = por %p93, %p94
      %s97 = sadd.s32 %s96, 1
      %p100 = scmp.eq.s32.totalorder %s20, 3
      %p101 = scmp.ne.s32.totalorder %s96, %s98
      %p102 = scmp.eq.s32.totalorder %s20, 0
      %p103 = por %p101, %p102
      %p104 = scmp.ne.s32.totalorder %s96, %s98
      %p105 = scmp.eq.s32.totalorder %s25, 3
      %p106 = por %p104, %p105
      %p107 = scmp.ne.s32.totalorder %s98, %s99
      %p108 = scmp.eq.s32.totalorder %s25, 0
      %p109 = por %p107, %p108
      %p110 = scmp.ne.s32.totalorder %s98, %s99
      %p111 = scmp.eq.s32.totalorder %s26, 3
      %p112 = por %p110, %p111
      %p114 = scmp.ne.s32.totalorder %s99, %s113
      %p115 = scmp.eq.s32.totalorder %s26, 0
      %p116 = por %p114, %p115
      %s118 = sadd.s32 %s117, 1
      %p121 = scmp.eq.s32.totalorder %s20, 3
      %p122 = scmp.ne.s32.totalorder %s117, %s119
      %p123 = scmp.eq.s32.totalorder %s20, 0
      %p124 = por %p122, %p123
      %p125 = scmp.ne.s32.totalorder %s117, %s119
      %p126 = scmp.eq.s32.totalorder %s25, 3
      %p127 = por %p125, %p126
      %p128 = scmp.ne.s32.totalorder %s119, %s120
      %p129 = scmp.eq.s32.totalorder %s25, 0
      %p130 = por %p128, %p129
      %p131 = scmp.ne.s32.totalorder %s119, %s120
      %p132 = scmp.eq.s32.totalorder %s26, 3
      %p133 = por %p131, %p132
      %p135 = scmp.ne.s32.totalorder %s120, %s134
      %p136 = scmp.eq.s32.totalorder %s26, 0
      %p137 = por %p135, %p136
      %s139 = sadd.s32 %s138, 1
      %p142 = scmp.eq.s32.totalorder %s20, 3
      %p143 = scmp.ne.s32.totalorder %s138, %s140
      %p144 = scmp.eq.s32.totalorder %s20, 0
      %p145 = por %p143, %p144
      %p146 = scmp.ne.s32.totalorder %s138, %s140
      %p147 = scmp.eq.s32.totalorder %s25, 3
      %p148 = por %p146, %p147
      %p149 = scmp.ne.s32.totalorder %s140, %s141
      %p150 = scmp.eq.s32.totalorder %s25, 0
      %p151 = por %p149, %p150
      %p152 = scmp.ne.s32.totalorder %s140, %s141
      %p153 = scmp.eq.s32.totalorder %s26, 3
      %p154 = por %p152, %p153
      %p156 = scmp.ne.s32.totalorder %s141, %s155
      %p157 = scmp.eq.s32.totalorder %s26, 0
      %p158 = por %p156, %p157
      %s160 = sadd.s32 %s159, 1
      %p163 = scmp.eq.s32.totalorder %s20, 3
      %p164 = scmp.ne.s32.totalorder %s159, %s161
      %p165 = scmp.eq.s32.totalorder %s20, 0
      %p166 = por %p164, %p165
      %p167 = scmp.ne.s32.totalorder %s159, %s161
      %p168 = scmp.eq.s32.totalorder %s25, 3
      %p169 = por %p167, %p168
      %p170 = scmp.ne.s32.totalorder %s161, %s162
      %p171 = scmp.eq.s32.totalorder %s25, 0
      %p172 = por %p170, %p171
      %p173 = scmp.ne.s32.totalorder %s161, %s162
      %p174 = scmp.eq.s32.totalorder %s26, 3
      %p175 = por %p173, %p174
      %p177 = scmp.ne.s32.totalorder %s162, %s176
      %p178 = scmp.eq.s32.totalorder %s26, 0
      %p179 = por %p177, %p178
      %s181 = sadd.s32 %s180, 1
      %p184 = scmp.eq.s32.totalorder %s20, 3
      %p185 = scmp.ne.s32.totalorder %s180, %s182
      %p186 = scmp.eq.s32.totalorder %s20, 0
      %p187 = por %p185, %p186
      %p188 = scmp.ne.s32.totalorder %s180, %s182
      %p189 = scmp.eq.s32.totalorder %s25, 3
      %p190 = por %p188, %p189
      %p191 = scmp.ne.s32.totalorder %s182, %s183
      %p192 = scmp.eq.s32.totalorder %s25, 0
      %p193 = por %p191, %p192
      %p194 = scmp.ne.s32.totalorder %s182, %s183
      %p195 = scmp.eq.s32.totalorder %s26, 3
      %p196 = por %p194, %p195
      %p198 = scmp.ne.s32.totalorder %s183, %s197
      %p199 = scmp.eq.s32.totalorder %s26, 0
      %p200 = por %p198, %p199
      %s202 = sadd.s32 %s201, 1
      %p205 = scmp.eq.s32.totalorder %s20, 3
      %p206 = scmp.ne.s32.totalorder %s201, %s203
      %p207 = scmp.eq.s32.totalorder %s20, 0
      %p208 = por %p206, %p207
      %p209 = scmp.ne.s32.totalorder %s201, %s203
      %p210 = scmp.eq.s32.totalorder %s25, 3
      %p211 = por %p209, %p210
      %p212 = scmp.ne.s32.totalorder %s203, %s204
      %p213 = scmp.eq.s32.totalorder %s25, 0
      %p214 = por %p212, %p213
      %p215 = scmp.ne.s32.totalorder %s203, %s204
      %p216 = scmp.eq.s32.totalorder %s26, 3
      %p217 = por %p215, %p216
      %p219 = scmp.ne.s32.totalorder %s204, %s218
      %p220 = scmp.eq.s32.totalorder %s26, 0
      %p221 = por %p219, %p220
      %s222 = ssub.s32 %s20, %s27
      %p223 = scmp.eq.s32.totalorder %s222, 0
      %s225 = sadd.s32 %s224, 1
      %s226 = scalar_select %p223, %s224, %s225
      %p229 = pneg %p223
      %p230 = scmp.eq.s32.totalorder %s20, 3
      %p231 = por %p229, %p230
      %p232 = scmp.ne.s32.totalorder %s224, %s227
      %p233 = scmp.eq.s32.totalorder %s20, 0
      %p234 = por %p232, %p233
      %p235 = scmp.ne.s32.totalorder %s224, %s227
      %p236 = scmp.eq.s32.totalorder %s25, 3
      %p237 = por %p235, %p236
      %p238 = scmp.ne.s32.totalorder %s227, %s228
      %p239 = scmp.eq.s32.totalorder %s25, 0
      %p240 = por %p238, %p239
      %p241 = scmp.ne.s32.totalorder %s227, %s228
      %p242 = scmp.eq.s32.totalorder %s26, 3
      %p243 = por %p241, %p242
      %p245 = scmp.ne.s32.totalorder %s228, %s244
      %p246 = scmp.eq.s32.totalorder %s26, 0
      %p247 = por %p245, %p246
      %p248 = scmp.le.s32.totalorder 1, %s20
      %p249 = scmp.lt.s32.totalorder %s20, 5
      %p250 = pnand %p248, %p249
      %p251 = pneg %p250
      // Predicated region
      $region9: #{tpu_custom_call.1} parent=5 // pred_check
        _
      $region10: #{tpu_custom_call.1} parent=5 // pred_check_branch
        %253 = sbr.rel (%p250) target = $region12
      $region11: #{tpu_custom_call.1} parent=5 // pred_region
        %s254 = ssub.s32 %s20, 1
        // Predicated region
        $region13: #{tpu_custom_call.1} parent=11 // pred_check
          %p255 = pneg %p67
        $region14: #{tpu_custom_call.1} parent=11 // pred_check_branch
          %257 = sbr.rel (%p255) target = $region16
        $region15: #{tpu_custom_call.1} parent=11 // pred_region
          _
        $region16: #{tpu_custom_call.1} parent=11 // pred_fallthru
          _
        // Predicated region
        $region17: #{tpu_custom_call.1} parent=11 // pred_check
          %p258 = pneg %p88
        $region18: #{tpu_custom_call.1} parent=11 // pred_check_branch
          %260 = sbr.rel (%p258) target = $region20
        $region19: #{tpu_custom_call.1} parent=11 // pred_region
          _
        $region20: #{tpu_custom_call.1} parent=11 // pred_fallthru
          _
        // Predicated region
        $region21: #{tpu_custom_call.1} parent=11 // pred_check
          %p261 = pneg %p109
        $region22: #{tpu_custom_call.1} parent=11 // pred_check_branch
          %263 = sbr.rel (%p261) target = $region24
        $region23: #{tpu_custom_call.1} parent=11 // pred_region
          _
        $region24: #{tpu_custom_call.1} parent=11 // pred_fallthru
          _
        // Predicated region
        $region25: #{tpu_custom_call.1} parent=11 // pred_check
          %p264 = pneg %p130
        $region26: #{tpu_custom_call.1} parent=11 // pred_check_branch
          %266 = sbr.rel (%p264) target = $region28
        $region27: #{tpu_custom_call.1} parent=11 // pred_region
          _
        $region28: #{tpu_custom_call.1} parent=11 // pred_fallthru
          _
        // Predicated region
        $region29: #{tpu_custom_call.1} parent=11 // pred_check
          %p267 = pneg %p151
        $region30: #{tpu_custom_call.1} parent=11 // pred_check_branch
          %269 = sbr.rel (%p267) target = $region32
        $region31: #{tpu_custom_call.1} parent=11 // pred_region
          _
        $region32: #{tpu_custom_call.1} parent=11 // pred_fallthru
          _
        // Predicated region
        $region33: #{tpu_custom_call.1} parent=11 // pred_check
          %p270 = pneg %p172
        $region34: #{tpu_custom_call.1} parent=11 // pred_check_branch
          %272 = sbr.rel (%p270) target = $region36
        $region35: #{tpu_custom_call.1} parent=11 // pred_region
          _
        $region36: #{tpu_custom_call.1} parent=11 // pred_fallthru
          _
        // Predicated region
        $region37: #{tpu_custom_call.1} parent=11 // pred_check
          %p273 = pneg %p193
        $region38: #{tpu_custom_call.1} parent=11 // pred_check_branch
          %275 = sbr.rel (%p273) target = $region40
        $region39: #{tpu_custom_call.1} parent=11 // pred_region
          _
        $region40: #{tpu_custom_call.1} parent=11 // pred_fallthru
          _
        // Predicated region
        $region41: #{tpu_custom_call.1} parent=11 // pred_check
          %p276 = pneg %p214
        $region42: #{tpu_custom_call.1} parent=11 // pred_check_branch
          %278 = sbr.rel (%p276) target = $region44
        $region43: #{tpu_custom_call.1} parent=11 // pred_region
          _
        $region44: #{tpu_custom_call.1} parent=11 // pred_fallthru
          _
      $region12: #{tpu_custom_call.1} parent=5 // pred_fallthru
        _
      %p279 = scmp.lt.s32.totalorder %s20, 4
      // Predicated region
      $region45: #{tpu_custom_call.1} parent=5 // pred_check
        %p280 = pneg %p279
      $region46: #{tpu_custom_call.1} parent=5 // pred_check_branch
        %282 = sbr.rel (%p280) target = $region48
      $region47: #{tpu_custom_call.1} parent=5 // pred_region
        // Predicated region
        $region49: #{tpu_custom_call.1} parent=47 // pred_check
          %p283 = pneg %p40
        $region50: #{tpu_custom_call.1} parent=47 // pred_check_branch
          %285 = sbr.rel (%p283) target = $region52
        $region51: #{tpu_custom_call.1} parent=47 // pred_region
          %s286 = smul.u32 32, %s20
          %p287 = scmp.lt.s32.totalorder %s286, 127
          %s288 = scalar_select %p287, %s286, 127
          %s289 = smul.addr %s288, 8
          %s290 = scalar_lea.vmem %s0, %s289
          %s291 = smul.u32 32, %s20
        $region52: #{tpu_custom_call.1} parent=47 // pred_fallthru
          _
      $region48: #{tpu_custom_call.1} parent=5 // pred_fallthru
        _
      %p292 = scmp.le.s32.totalorder 1, %s20
      %p293 = scmp.lt.s32.totalorder %s20, 5
      %p294 = pnand %p292, %p293
      %p295 = pneg %p294
      // Predicated region
      $region53: #{tpu_custom_call.1} parent=5 // pred_check
        _
      $region54: #{tpu_custom_call.1} parent=5 // pred_check_branch
        %297 = sbr.rel (%p294) target = $region56
      $region55: #{tpu_custom_call.1} parent=5 // pred_region
        %s298 = ssub.s32 %s20, 1
        %s299 = smul.u32 32, %s25
        %p300 = scmp.lt.s32.totalorder %s299, 127
        %s301 = scalar_select %p300, %s299, 127
        %s302 = smul.addr %s301, 8
        %s303 = scalar_lea.vmem %s0, %s302
        %p304 = pneg %p46
        %p305 = pneg %p43
        %p306 = pneg %p67
        %p307 = pneg %p64
        %p308 = pneg %p88
        %p309 = pneg %p85
        %p310 = pneg %p109
        %p311 = pneg %p106
        %p312 = pneg %p130
        %p313 = pneg %p127
        %p314 = pneg %p151
        %p315 = pneg %p148
        %p316 = pneg %p172
        %p317 = pneg %p169
        %p318 = pneg %p193
        %p319 = pneg %p190
        %p320 = pneg %p214
        %p321 = pneg %p211
        %p322 = pneg %p240
        %p323 = pneg %p237
        %s324 = sand.u32 %s227, 1
        %s325 = scalar_lea.sflag [#allocation8], %s324
        %s326 = sand.u32 %s227, 1
        %s327 = smul.addr %s326, 16
        %s328 = scalar_lea.vmem [#allocation7], %s327
        %s329 = smul.u32 32, %s25
        %p330 = scmp.lt.s32.totalorder %s329, 127
        %s331 = scalar_select %p330, %s329, 127
        %s332 = smul.addr %s331, 8
        %s333 = scalar_lea.vmem %s0, %s332
        %s334 = smul.u32 32, %s25
        %s335 = smul.u32 2, %s25
        %p336 = scmp.eq.s32.totalorder %s25, 0
        // Predicated region
        $region57: #{tpu_custom_call.1} parent=55 // pred_check
          %p337 = pneg %p336
        $region58: #{tpu_custom_call.1} parent=55 // pred_check_branch
          %339 = sbr.rel (%p337) target = $region60
        $region59: #{tpu_custom_call.1} parent=55 // pred_region
          %vm340 = vcmask 130048
          %341 = vst.msk [vmem:[#allocation2] sm:$0xff] %vm340, 0.0
          %vm342 = vcmask 64512
          %343 = vst.msk [vmem:[#allocation3] sm:$0xff] %vm342, 0.0
        $region60: #{tpu_custom_call.1} parent=55 // pred_fallthru
          _
        %v344 = vld [vmem:[%s333] sm:$0xff]
        %v345 = vld [vmem:[%s333 + $0x8] sm:$0xff]
        %v346 = vld [vmem:[%s333 + $0x10] sm:$0xff]
        %v347 = vld [vmem:[%s333 + $0x18] sm:$0xff]
        %v348 = vld [vmem:[%s333 + $0x20] sm:$0xff]
        %v349 = vld [vmem:[%s333 + $0x28] sm:$0xff]
        %v350 = vld [vmem:[%s333 + $0x30] sm:$0xff]
        %v351 = vld [vmem:[%s333 + $0x38] sm:$0xff]
        %v352 = vld [vmem:[%s333 + $0x40] sm:$0xff]
        %v353 = vld [vmem:[%s333 + $0x48] sm:$0xff]
        %v354 = vld [vmem:[%s333 + $0x50] sm:$0xff]
        %v355 = vld [vmem:[%s333 + $0x58] sm:$0xff]
        %v356 = vld [vmem:[%s333 + $0x60] sm:$0xff]
        %v357 = vld [vmem:[%s333 + $0x68] sm:$0xff]
        %v358 = vld [vmem:[%s333 + $0x70] sm:$0xff]
        %v359 = vld [vmem:[%s333 + $0x78] sm:$0xff]
        %v360 = vld [vmem:[%s333 + $0x80] sm:$0xff]
        %v361 = vld [vmem:[%s333 + $0x88] sm:$0xff]
        %v362 = vld [vmem:[%s333 + $0x90] sm:$0xff]
        %v363 = vld [vmem:[%s333 + $0x98] sm:$0xff]
        %v364 = vld [vmem:[%s333 + $0xa0] sm:$0xff]
        %v365 = vld [vmem:[%s333 + $0xa8] sm:$0xff]
        %v366 = vld [vmem:[%s333 + $0xb0] sm:$0xff]
        %v367 = vld [vmem:[%s333 + $0xb8] sm:$0xff]
        %v368 = vld [vmem:[%s333 + $0xc0] sm:$0xff]
        %v369 = vld [vmem:[%s333 + $0xc8] sm:$0xff]
        %v370 = vld [vmem:[%s333 + $0xd0] sm:$0xff]
        %v371 = vld [vmem:[%s333 + $0xd8] sm:$0xff]
        %v372 = vld [vmem:[%s333 + $0xe0] sm:$0xff]
        %v373 = vld [vmem:[%s333 + $0xe8] sm:$0xff]
        %v374 = vld [vmem:[%s333 + $0xf0] sm:$0xff]
        %v375 = vld [vmem:[%s333 + $0xf8] sm:$0xff]
        %v376 = vld [vmem:[%s2] sm:$0x1]
        %v378 = vlaneseq
        %v379 = vshrl.u32 %v378, 7
        %v380 = vsub.s32 0, %v379
        %v381 = vrot.slane %v376, %v380
        %v383 = vmul.f32 %v344, %v381
        %v384 = vmul.f32 %v345, %v381
        %v385 = vmul.f32 %v346, %v381
        %v386 = vmul.f32 %v347, %v381
        %v387 = vmul.f32 %v348, %v381
        %v388 = vmul.f32 %v349, %v381
        %v389 = vmul.f32 %v350, %v381
        %v390 = vmul.f32 %v351, %v381
        %v391 = vmul.f32 %v352, %v381
        %v392 = vmul.f32 %v353, %v381
        %v393 = vmul.f32 %v354, %v381
        %v394 = vmul.f32 %v355, %v381
        %v395 = vmul.f32 %v356, %v381
        %v396 = vmul.f32 %v357, %v381
        %v397 = vmul.f32 %v358, %v381
        %v398 = vmul.f32 %v359, %v381
        %v399 = vmul.f32 %v360, %v381
        %v400 = vmul.f32 %v361, %v381
        %v401 = vmul.f32 %v362, %v381
        %v402 = vmul.f32 %v363, %v381
        %v403 = vmul.f32 %v364, %v381
        %v404 = vmul.f32 %v365, %v381
        %v405 = vmul.f32 %v366, %v381
        %v406 = vmul.f32 %v367, %v381
        %v407 = vmul.f32 %v368, %v381
        %v408 = vmul.f32 %v369, %v381
        %v409 = vmul.f32 %v370, %v381
        %v410 = vmul.f32 %v371, %v381
        %v411 = vmul.f32 %v372, %v381
        %v412 = vmul.f32 %v373, %v381
        %v413 = vmul.f32 %v374, %v381
        %v414 = vmul.f32 %v375, %v381
        %v415 = vmax.f32 %v383, 0.0
        %v416 = vmax.f32 %v384, 0.0
        %v417 = vmax.f32 %v385, 0.0
        %v418 = vmax.f32 %v386, 0.0
        %v419 = vmax.f32 %v387, 0.0
        %v420 = vmax.f32 %v388, 0.0
        %v421 = vmax.f32 %v389, 0.0
        %v422 = vmax.f32 %v390, 0.0
        %v423 = vmax.f32 %v391, 0.0
        %v424 = vmax.f32 %v392, 0.0
        %v425 = vmax.f32 %v393, 0.0
        %v426 = vmax.f32 %v394, 0.0
        %v427 = vmax.f32 %v395, 0.0
        %v428 = vmax.f32 %v396, 0.0
        %v429 = vmax.f32 %v397, 0.0
        %v430 = vmax.f32 %v398, 0.0
        %v431 = vmax.f32 %v399, 0.0
        %v432 = vmax.f32 %v400, 0.0
        %v433 = vmax.f32 %v401, 0.0
        %v434 = vmax.f32 %v402, 0.0
        %v435 = vmax.f32 %v403, 0.0
        %v436 = vmax.f32 %v404, 0.0
        %v437 = vmax.f32 %v405, 0.0
        %v438 = vmax.f32 %v406, 0.0
        %v439 = vmax.f32 %v407, 0.0
        %v440 = vmax.f32 %v408, 0.0
        %v441 = vmax.f32 %v409, 0.0
        %v442 = vmax.f32 %v410, 0.0
        %v443 = vmax.f32 %v411, 0.0
        %v444 = vmax.f32 %v412, 0.0
        %v445 = vmax.f32 %v413, 0.0
        %v446 = vmax.f32 %v414, 0.0
        %v447 = vmin.f32 %v415, 1.0
        %v448 = vmin.f32 %v416, 1.0
        %v449 = vmin.f32 %v417, 1.0
        %v450 = vmin.f32 %v418, 1.0
        %v451 = vmin.f32 %v419, 1.0
        %v452 = vmin.f32 %v420, 1.0
        %v453 = vmin.f32 %v421, 1.0
        %v454 = vmin.f32 %v422, 1.0
        %v455 = vmin.f32 %v423, 1.0
        %v456 = vmin.f32 %v424, 1.0
        %v457 = vmin.f32 %v425, 1.0
        %v458 = vmin.f32 %v426, 1.0
        %v459 = vmin.f32 %v427, 1.0
        %v460 = vmin.f32 %v428, 1.0
        %v461 = vmin.f32 %v429, 1.0
        %v462 = vmin.f32 %v430, 1.0
        %v463 = vmin.f32 %v431, 1.0
        %v464 = vmin.f32 %v432, 1.0
        %v465 = vmin.f32 %v433, 1.0
        %v466 = vmin.f32 %v434, 1.0
        %v467 = vmin.f32 %v435, 1.0
        %v468 = vmin.f32 %v436, 1.0
        %v469 = vmin.f32 %v437, 1.0
        %v470 = vmin.f32 %v438, 1.0
        %v471 = vmin.f32 %v439, 1.0
        %v472 = vmin.f32 %v440, 1.0
        %v473 = vmin.f32 %v441, 1.0
        %v474 = vmin.f32 %v442, 1.0
        %v475 = vmin.f32 %v443, 1.0
        %v476 = vmin.f32 %v444, 1.0
        %v477 = vmin.f32 %v445, 1.0
        %v478 = vmin.f32 %v446, 1.0
        %v479 = vld [vmem:[%s1] sm:$0xff]
        %vm480 = vcmask 64512
        %v482 = vsel %vm480, %v447, 0
        %v485 = vsel %vm480, %v448, 0
        %v488 = vsel %vm480, %v449, 0
        %v491 = vsel %vm480, %v450, 0
        %v494 = vsel %vm480, %v451, 0
        %v497 = vsel %vm480, %v452, 0
        %v500 = vsel %vm480, %v453, 0
        %v503 = vsel %vm480, %v454, 0
        %v506 = vsel %vm480, %v455, 0
        %v509 = vsel %vm480, %v456, 0
        %v512 = vsel %vm480, %v457, 0
        %v515 = vsel %vm480, %v458, 0
        %v518 = vsel %vm480, %v459, 0
        %v521 = vsel %vm480, %v460, 0
        %v524 = vsel %vm480, %v461, 0
        %v527 = vsel %vm480, %v462, 0
        %v530 = vsel %vm480, %v463, 0
        %v533 = vsel %vm480, %v464, 0
        %v536 = vsel %vm480, %v465, 0
        %v539 = vsel %vm480, %v466, 0
        %v542 = vsel %vm480, %v467, 0
        %v545 = vsel %vm480, %v468, 0
        %v548 = vsel %vm480, %v469, 0
        %v551 = vsel %vm480, %v470, 0
        %v554 = vsel %vm480, %v471, 0
        %v557 = vsel %vm480, %v472, 0
        %v560 = vsel %vm480, %v473, 0
        %v563 = vsel %vm480, %v474, 0
        %v566 = vsel %vm480, %v475, 0
        %v569 = vsel %vm480, %v476, 0
        %v572 = vsel %vm480, %v477, 0
        %v575 = vsel %vm480, %v478, 0
        %577 = vmatprep.subr.mxu0 0.0
        %578 = vmatpush1.msra.mxu0 0.0
        %579 = vmatprep.subr.mxu0 0.0
        %580 = vmatpush1.msra.mxu0 0.0
        %581 = vmatprep.subr.mxu0 0.0
        %582 = vmatpush1.msra.mxu0 0.0
        %583 = vmatprep.subr.mxu0 0.0
        %584 = vmatpush1.msra.mxu0 0.0
        %585 = vmatprep.subr.mxu0 0.0
        %586 = vmatpush1.msra.mxu0 0.0
        %587 = vmatprep.subr.mxu0 0.0
        %588 = vmatpush1.msra.mxu0 0.0
        %589 = vmatprep.subr.mxu0 0.0
        %590 = vmatpush1.msra.mxu0 0.0
        %591 = vmatprep.subr.mxu0 0.0
        %592 = vmatpush1.msra.mxu0 0.0
        %593 = vmatprep.subr.mxu0 0.0
        %594 = vmatpush1.msra.mxu0 0.0
        %595 = vmatprep.subr.mxu0 0.0
        %596 = vmatpush1.msra.mxu0 0.0
        %597 = vmatprep.subr.mxu0 0.0
        %598 = vmatpush1.msra.mxu0 0.0
        %599 = vmatprep.subr.mxu0 0.0
        %600 = vmatpush1.msra.mxu0 0.0
        %601 = vmatprep.subr.mxu0 0.0
        %602 = vmatpush1.msra.mxu0 0.0
        %603 = vmatprep.subr.mxu0 0.0
        %604 = vmatpush1.msra.mxu0 0.0
        %605 = vmatprep.subr.mxu0 0.0
        %606 = vmatpush1.msra.mxu0 0.0
        %607 = vmatprep.subr.mxu0 0.0
        %608 = vmatpush1.msra.mxu0 %v479
        %609 = vmatprep.subr.mxu0 0.0
        %610 = vmatpush2.msra.mxu0 0.0
        %611 = vmatprep.subr.mxu0 0.0
        %612 = vmatpush2.msra.mxu0 0.0
        %613 = vmatprep.subr.mxu0 0.0
        %614 = vmatpush2.msra.mxu0 0.0
        %615 = vmatprep.subr.mxu0 0.0
        %616 = vmatpush2.msra.mxu0 0.0
        %617 = vmatprep.subr.mxu0 0.0
        %618 = vmatpush2.msra.mxu0 0.0
        %619 = vmatprep.subr.mxu0 0.0
        %620 = vmatpush2.msra.mxu0 0.0
        %621 = vmatprep.subr.mxu0 0.0
        %622 = vmatpush2.msra.mxu0 0.0
        %623 = vmatprep.subr.mxu0 0.0
        %624 = vmatpush2.msra.mxu0 0.0
        %625 = vmatprep.subr.mxu0 0.0
        %626 = vmatpush2.msra.mxu0 0.0
        %627 = vmatprep.subr.mxu0 0.0
        %628 = vmatpush2.msra.mxu0 0.0
        %629 = vmatprep.subr.mxu0 0.0
        %630 = vmatpush2.msra.mxu0 0.0
        %631 = vmatprep.subr.mxu0 0.0
        %632 = vmatpush2.msra.mxu0 0.0
        %633 = vmatprep.subr.mxu0 0.0
        %634 = vmatpush2.msra.mxu0 0.0
        %635 = vmatprep.subr.mxu0 0.0
        %636 = vmatpush2.msra.mxu0 0.0
        %637 = vmatprep.subr.mxu0 0.0
        %638 = vmatpush2.msra.mxu0 0.0
        %639 = vmatprep.subr.mxu0 0.0
        %640 = vmatpush2.msra.mxu0 0.0
        %641 = vmatprep.mubr.f32.mxu0 0.0
        %642 = vmatmul.mubr.f32.gmra.mxu0 %v482
        %v643 = vpop.f32.mrf.mxu0
        %v644 = vadd.f32 0.0, %v643
        %v645 = vpop.f32.mrf.mxu0
        %646 = vmatprep.mubr.f32.mxu0 0.0
        %647 = vmatmul.mubr.f32.gmra.mxu0 %v485
        %v648 = vpop.f32.mrf.mxu0
        %v649 = vadd.f32 0.0, %v648
        %v650 = vpop.f32.mrf.mxu0
        %651 = vmatprep.mubr.f32.mxu0 0.0
        %652 = vmatmul.mubr.f32.gmra.mxu0 %v488
        %v653 = vpop.f32.mrf.mxu0
        %v654 = vadd.f32 0.0, %v653
        %v655 = vpop.f32.mrf.mxu0
        %656 = vmatprep.mubr.f32.mxu0 0.0
        %657 = vmatmul.mubr.f32.gmra.mxu0 %v491
        %v658 = vpop.f32.mrf.mxu0
        %v659 = vadd.f32 0.0, %v658
        %v660 = vpop.f32.mrf.mxu0
        %661 = vmatprep.mubr.f32.mxu0 0.0
        %662 = vmatmul.mubr.f32.gmra.mxu0 %v494
        %v663 = vpop.f32.mrf.mxu0
        %v664 = vadd.f32 0.0, %v663
        %v665 = vpop.f32.mrf.mxu0
        %666 = vmatprep.mubr.f32.mxu0 0.0
        %667 = vmatmul.mubr.f32.gmra.mxu0 %v497
        %v668 = vpop.f32.mrf.mxu0
        %v669 = vadd.f32 0.0, %v668
        %v670 = vpop.f32.mrf.mxu0
        %671 = vmatprep.mubr.f32.mxu0 0.0
        %672 = vmatmul.mubr.f32.gmra.mxu0 %v500
        %v673 = vpop.f32.mrf.mxu0
        %v674 = vadd.f32 0.0, %v673
        %v675 = vpop.f32.mrf.mxu0
        %676 = vmatprep.mubr.f32.mxu0 0.0
        %677 = vmatmul.mubr.f32.gmra.mxu0 %v503
        %v678 = vpop.f32.mrf.mxu0
        %v679 = vadd.f32 0.0, %v678
        %v680 = vpop.f32.mrf.mxu0
        %681 = vmatprep.mubr.f32.mxu0 0.0
        %682 = vmatmul.mubr.f32.gmra.mxu0 %v506
        %v683 = vpop.f32.mrf.mxu0
        %v684 = vadd.f32 0.0, %v683
        %v685 = vpop.f32.mrf.mxu0
        %686 = vmatprep.mubr.f32.mxu0 0.0
        %687 = vmatmul.mubr.f32.gmra.mxu0 %v509
        %v688 = vpop.f32.mrf.mxu0
        %v689 = vadd.f32 0.0, %v688
        %v690 = vpop.f32.mrf.mxu0
        %691 = vmatprep.mubr.f32.mxu0 0.0
        %692 = vmatmul.mubr.f32.gmra.mxu0 %v512
        %v693 = vpop.f32.mrf.mxu0
        %v694 = vadd.f32 0.0, %v693
        %v695 = vpop.f32.mrf.mxu0
        %696 = vmatprep.mubr.f32.mxu0 0.0
        %697 = vmatmul.mubr.f32.gmra.mxu0 %v515
        %v698 = vpop.f32.mrf.mxu0
        %v699 = vadd.f32 0.0, %v698
        %v700 = vpop.f32.mrf.mxu0
        %701 = vmatprep.mubr.f32.mxu0 0.0
        %702 = vmatmul.mubr.f32.gmra.mxu0 %v518
        %v703 = vpop.f32.mrf.mxu0
        %v704 = vadd.f32 0.0, %v703
        %v705 = vpop.f32.mrf.mxu0
        %706 = vmatprep.mubr.f32.mxu0 0.0
        %707 = vmatmul.mubr.f32.gmra.mxu0 %v521
        %v708 = vpop.f32.mrf.mxu0
        %v709 = vadd.f32 0.0, %v708
        %v710 = vpop.f32.mrf.mxu0
        %711 = vmatprep.mubr.f32.mxu0 0.0
        %712 = vmatmul.mubr.f32.gmra.mxu0 %v524
        %v713 = vpop.f32.mrf.mxu0
        %v714 = vadd.f32 0.0, %v713
        %v715 = vpop.f32.mrf.mxu0
        %716 = vmatprep.mubr.f32.mxu0 0.0
        %717 = vmatmul.mubr.f32.gmra.mxu0 %v527
        %v718 = vpop.f32.mrf.mxu0
        %v719 = vadd.f32 0.0, %v718
        %v720 = vpop.f32.mrf.mxu0
        %721 = vmatprep.mubr.f32.mxu0 0.0
        %722 = vmatmul.mubr.f32.gmra.mxu0 %v530
        %v723 = vpop.f32.mrf.mxu0
        %v724 = vadd.f32 0.0, %v723
        %v725 = vpop.f32.mrf.mxu0
        %726 = vmatprep.mubr.f32.mxu0 0.0
        %727 = vmatmul.mubr.f32.gmra.mxu0 %v533
        %v728 = vpop.f32.mrf.mxu0
        %v729 = vadd.f32 0.0, %v728
        %v730 = vpop.f32.mrf.mxu0
        %731 = vmatprep.mubr.f32.mxu0 0.0
        %732 = vmatmul.mubr.f32.gmra.mxu0 %v536
        %v733 = vpop.f32.mrf.mxu0
        %v734 = vadd.f32 0.0, %v733
        %v735 = vpop.f32.mrf.mxu0
        %736 = vmatprep.mubr.f32.mxu0 0.0
        %737 = vmatmul.mubr.f32.gmra.mxu0 %v539
        %v738 = vpop.f32.mrf.mxu0
        %v739 = vadd.f32 0.0, %v738
        %v740 = vpop.f32.mrf.mxu0
        %741 = vmatprep.mubr.f32.mxu0 0.0
        %742 = vmatmul.mubr.f32.gmra.mxu0 %v542
        %v743 = vpop.f32.mrf.mxu0
        %v744 = vadd.f32 0.0, %v743
        %v745 = vpop.f32.mrf.mxu0
        %746 = vmatprep.mubr.f32.mxu0 0.0
        %747 = vmatmul.mubr.f32.gmra.mxu0 %v545
        %v748 = vpop.f32.mrf.mxu0
        %v749 = vadd.f32 0.0, %v748
        %v750 = vpop.f32.mrf.mxu0
        %751 = vmatprep.mubr.f32.mxu0 0.0
        %752 = vmatmul.mubr.f32.gmra.mxu0 %v548
        %v753 = vpop.f32.mrf.mxu0
        %v754 = vadd.f32 0.0, %v753
        %v755 = vpop.f32.mrf.mxu0
        %756 = vmatprep.mubr.f32.mxu0 0.0
        %757 = vmatmul.mubr.f32.gmra.mxu0 %v551
        %v758 = vpop.f32.mrf.mxu0
        %v759 = vadd.f32 0.0, %v758
        %v760 = vpop.f32.mrf.mxu0
        %761 = vmatprep.mubr.f32.mxu0 0.0
        %762 = vmatmul.mubr.f32.gmra.mxu0 %v554
        %v763 = vpop.f32.mrf.mxu0
        %v764 = vadd.f32 0.0, %v763
        %v765 = vpop.f32.mrf.mxu0
        %766 = vmatprep.mubr.f32.mxu0 0.0
        %767 = vmatmul.mubr.f32.gmra.mxu0 %v557
        %v768 = vpop.f32.mrf.mxu0
        %v769 = vadd.f32 0.0, %v768
        %v770 = vpop.f32.mrf.mxu0
        %771 = vmatprep.mubr.f32.mxu0 0.0
        %772 = vmatmul.mubr.f32.gmra.mxu0 %v560
        %v773 = vpop.f32.mrf.mxu0
        %v774 = vadd.f32 0.0, %v773
        %v775 = vpop.f32.mrf.mxu0
        %776 = vmatprep.mubr.f32.mxu0 0.0
        %777 = vmatmul.mubr.f32.gmra.mxu0 %v563
        %v778 = vpop.f32.mrf.mxu0
        %v779 = vadd.f32 0.0, %v778
        %v780 = vpop.f32.mrf.mxu0
        %781 = vmatprep.mubr.f32.mxu0 0.0
        %782 = vmatmul.mubr.f32.gmra.mxu0 %v566
        %v783 = vpop.f32.mrf.mxu0
        %v784 = vadd.f32 0.0, %v783
        %v785 = vpop.f32.mrf.mxu0
        %786 = vmatprep.mubr.f32.mxu0 0.0
        %787 = vmatmul.mubr.f32.gmra.mxu0 %v569
        %v788 = vpop.f32.mrf.mxu0
        %v789 = vadd.f32 0.0, %v788
        %v790 = vpop.f32.mrf.mxu0
        %791 = vmatprep.mubr.f32.mxu0 0.0
        %792 = vmatmul.mubr.f32.gmra.mxu0 %v572
        %v793 = vpop.f32.mrf.mxu0
        %v794 = vadd.f32 0.0, %v793
        %v795 = vpop.f32.mrf.mxu0
        %796 = vmatprep.mubr.f32.mxu0 0.0
        %797 = vmatmul.mubr.f32.gmra.mxu0 %v575
        %v798 = vpop.f32.mrf.mxu0
        %v799 = vadd.f32 0.0, %v798
        %v800 = vpop.f32.mrf.mxu0
        %801 = vdwg.mxu0
        %vm802 = vcmask 130048
        %803 = vst.msk [vmem:[#allocation4] sm:$0xff] %vm802, %v644
        %804 = vst.msk [vmem:[#allocation4 + $0x8] sm:$0xff] %vm802, %v649
        %805 = vst.msk [vmem:[#allocation4 + $0x10] sm:$0xff] %vm802, %v654
        %806 = vst.msk [vmem:[#allocation4 + $0x18] sm:$0xff] %vm802, %v659
        %807 = vst.msk [vmem:[#allocation4 + $0x20] sm:$0xff] %vm802, %v664
        %808 = vst.msk [vmem:[#allocation4 + $0x28] sm:$0xff] %vm802, %v669
        %809 = vst.msk [vmem:[#allocation4 + $0x30] sm:$0xff] %vm802, %v674
        %810 = vst.msk [vmem:[#allocation4 + $0x38] sm:$0xff] %vm802, %v679
        %811 = vst.msk [vmem:[#allocation4 + $0x40] sm:$0xff] %vm802, %v684
        %812 = vst.msk [vmem:[#allocation4 + $0x48] sm:$0xff] %vm802, %v689
        %813 = vst.msk [vmem:[#allocation4 + $0x50] sm:$0xff] %vm802, %v694
        %814 = vst.msk [vmem:[#allocation4 + $0x58] sm:$0xff] %vm802, %v699
        %815 = vst.msk [vmem:[#allocation4 + $0x60] sm:$0xff] %vm802, %v704
        %816 = vst.msk [vmem:[#allocation4 + $0x68] sm:$0xff] %vm802, %v709
        %817 = vst.msk [vmem:[#allocation4 + $0x70] sm:$0xff] %vm802, %v714
        %818 = vst.msk [vmem:[#allocation4 + $0x78] sm:$0xff] %vm802, %v719
        %819 = vst.msk [vmem:[#allocation4 + $0x80] sm:$0xff] %vm802, %v724
        %820 = vst.msk [vmem:[#allocation4 + $0x88] sm:$0xff] %vm802, %v729
        %821 = vst.msk [vmem:[#allocation4 + $0x90] sm:$0xff] %vm802, %v734
        %822 = vst.msk [vmem:[#allocation4 + $0x98] sm:$0xff] %vm802, %v739
        %823 = vst.msk [vmem:[#allocation4 + $0xa0] sm:$0xff] %vm802, %v744
        %824 = vst.msk [vmem:[#allocation4 + $0xa8] sm:$0xff] %vm802, %v749
        %825 = vst.msk [vmem:[#allocation4 + $0xb0] sm:$0xff] %vm802, %v754
        %826 = vst.msk [vmem:[#allocation4 + $0xb8] sm:$0xff] %vm802, %v759
        %827 = vst.msk [vmem:[#allocation4 + $0xc0] sm:$0xff] %vm802, %v764
        %828 = vst.msk [vmem:[#allocation4 + $0xc8] sm:$0xff] %vm802, %v769
        %829 = vst.msk [vmem:[#allocation4 + $0xd0] sm:$0xff] %vm802, %v774
        %830 = vst.msk [vmem:[#allocation4 + $0xd8] sm:$0xff] %vm802, %v779
        %831 = vst.msk [vmem:[#allocation4 + $0xe0] sm:$0xff] %vm802, %v784
        %832 = vst.msk [vmem:[#allocation4 + $0xe8] sm:$0xff] %vm802, %v789
        %833 = vst.msk [vmem:[#allocation4 + $0xf0] sm:$0xff] %vm802, %v794
        %834 = vst.msk [vmem:[#allocation4 + $0xf8] sm:$0xff] %vm802, %v799
        %v835 = vld [vmem:[#allocation6] sm:$0x1]
        %v837 = vlaneseq
        %v838 = vshrl.u32 %v837, 7
        %v839 = vsub.s32 0, %v838
        %v840 = vrot.slane %v835, %v839
        %841 = vrot.lane.b32.xlu0 %v840, 8
        %v842 = vpop.permute.xlu0 %841
        %v844 = vmul.f32 %v344, %v842
        %v845 = vmul.f32 %v345, %v842
        %v846 = vmul.f32 %v346, %v842
        %v847 = vmul.f32 %v347, %v842
        %v848 = vmul.f32 %v348, %v842
        %v849 = vmul.f32 %v349, %v842
        %v850 = vmul.f32 %v350, %v842
        %v851 = vmul.f32 %v351, %v842
        %v852 = vmul.f32 %v352, %v842
        %v853 = vmul.f32 %v353, %v842
        %v854 = vmul.f32 %v354, %v842
        %v855 = vmul.f32 %v355, %v842
        %v856 = vmul.f32 %v356, %v842
        %v857 = vmul.f32 %v357, %v842
        %v858 = vmul.f32 %v358, %v842
        %v859 = vmul.f32 %v359, %v842
        %v860 = vmul.f32 %v360, %v842
        %v861 = vmul.f32 %v361, %v842
        %v862 = vmul.f32 %v362, %v842
        %v863 = vmul.f32 %v363, %v842
        %v864 = vmul.f32 %v364, %v842
        %v865 = vmul.f32 %v365, %v842
        %v866 = vmul.f32 %v366, %v842
        %v867 = vmul.f32 %v367, %v842
        %v868 = vmul.f32 %v368, %v842
        %v869 = vmul.f32 %v369, %v842
        %v870 = vmul.f32 %v370, %v842
        %v871 = vmul.f32 %v371, %v842
        %v872 = vmul.f32 %v372, %v842
        %v873 = vmul.f32 %v373, %v842
        %v874 = vmul.f32 %v374, %v842
        %v875 = vmul.f32 %v375, %v842
        %v876 = vmax.f32 %v844, 0.0
        %v877 = vmax.f32 %v845, 0.0
        %v878 = vmax.f32 %v846, 0.0
        %v879 = vmax.f32 %v847, 0.0
        %v880 = vmax.f32 %v848, 0.0
        %v881 = vmax.f32 %v849, 0.0
        %v882 = vmax.f32 %v850, 0.0
        %v883 = vmax.f32 %v851, 0.0
        %v884 = vmax.f32 %v852, 0.0
        %v885 = vmax.f32 %v853, 0.0
        %v886 = vmax.f32 %v854, 0.0
        %v887 = vmax.f32 %v855, 0.0
        %v888 = vmax.f32 %v856, 0.0
        %v889 = vmax.f32 %v857, 0.0
        %v890 = vmax.f32 %v858, 0.0
        %v891 = vmax.f32 %v859, 0.0
        %v892 = vmax.f32 %v860, 0.0
        %v893 = vmax.f32 %v861, 0.0
        %v894 = vmax.f32 %v862, 0.0
        %v895 = vmax.f32 %v863, 0.0
        %v896 = vmax.f32 %v864, 0.0
        %v897 = vmax.f32 %v865, 0.0
        %v898 = vmax.f32 %v866, 0.0
        %v899 = vmax.f32 %v867, 0.0
        %v900 = vmax.f32 %v868, 0.0
        %v901 = vmax.f32 %v869, 0.0
        %v902 = vmax.f32 %v870, 0.0
        %v903 = vmax.f32 %v871, 0.0
        %v904 = vmax.f32 %v872, 0.0
        %v905 = vmax.f32 %v873, 0.0
        %v906 = vmax.f32 %v874, 0.0
        %v907 = vmax.f32 %v875, 0.0
        %v908 = vmin.f32 %v876, 1.0
        %v909 = vmin.f32 %v877, 1.0
        %v910 = vmin.f32 %v878, 1.0
        %v911 = vmin.f32 %v879, 1.0
        %v912 = vmin.f32 %v880, 1.0
        %v913 = vmin.f32 %v881, 1.0
        %v914 = vmin.f32 %v882, 1.0
        %v915 = vmin.f32 %v883, 1.0
        %v916 = vmin.f32 %v884, 1.0
        %v917 = vmin.f32 %v885, 1.0
        %v918 = vmin.f32 %v886, 1.0
        %v919 = vmin.f32 %v887, 1.0
        %v920 = vmin.f32 %v888, 1.0
        %v921 = vmin.f32 %v889, 1.0
        %v922 = vmin.f32 %v890, 1.0
        %v923 = vmin.f32 %v891, 1.0
        %v924 = vmin.f32 %v892, 1.0
        %v925 = vmin.f32 %v893, 1.0
        %v926 = vmin.f32 %v894, 1.0
        %v927 = vmin.f32 %v895, 1.0
        %v928 = vmin.f32 %v896, 1.0
        %v929 = vmin.f32 %v897, 1.0
        %v930 = vmin.f32 %v898, 1.0
        %v931 = vmin.f32 %v899, 1.0
        %v932 = vmin.f32 %v900, 1.0
        %v933 = vmin.f32 %v901, 1.0
        %v934 = vmin.f32 %v902, 1.0
        %v935 = vmin.f32 %v903, 1.0
        %v936 = vmin.f32 %v904, 1.0
        %v937 = vmin.f32 %v905, 1.0
        %v938 = vmin.f32 %v906, 1.0
        %v939 = vmin.f32 %v907, 1.0
        %v940 = vld [vmem:[%s4] sm:$0x1]
        %942 = vset.pattern.permute.xlu0 8
        %943 = vperm.xlu0 %942, %v908
        %v944 = vpop.permute.xlu0 %943
        %947 = vset.pattern.permute.xlu0 8
        %948 = vperm.xlu0 %947, %v909
        %v949 = vpop.permute.xlu0 %948
        %952 = vset.pattern.permute.xlu0 8
        %953 = vperm.xlu0 %952, %v910
        %v954 = vpop.permute.xlu0 %953
        %957 = vset.pattern.permute.xlu0 8
        %958 = vperm.xlu0 %957, %v911
        %v959 = vpop.permute.xlu0 %958
        %962 = vset.pattern.permute.xlu0 8
        %963 = vperm.xlu0 %962, %v912
        %v964 = vpop.permute.xlu0 %963
        %967 = vset.pattern.permute.xlu0 8
        %968 = vperm.xlu0 %967, %v913
        %v969 = vpop.permute.xlu0 %968
        %972 = vset.pattern.permute.xlu0 8
        %973 = vperm.xlu0 %972, %v914
        %v974 = vpop.permute.xlu0 %973
        %977 = vset.pattern.permute.xlu0 8
        %978 = vperm.xlu0 %977, %v915
        %v979 = vpop.permute.xlu0 %978
        %982 = vset.pattern.permute.xlu0 8
        %983 = vperm.xlu0 %982, %v916
        %v984 = vpop.permute.xlu0 %983
        %987 = vset.pattern.permute.xlu0 8
        %988 = vperm.xlu0 %987, %v917
        %v989 = vpop.permute.xlu0 %988
        %992 = vset.pattern.permute.xlu0 8
        %993 = vperm.xlu0 %992, %v918
        %v994 = vpop.permute.xlu0 %993
        %997 = vset.pattern.permute.xlu0 8
        %998 = vperm.xlu0 %997, %v919
        %v999 = vpop.permute.xlu0 %998
        %1002 = vset.pattern.permute.xlu0 8
        %1003 = vperm.xlu0 %1002, %v920
        %v1004 = vpop.permute.xlu0 %1003
        %1007 = vset.pattern.permute.xlu0 8
        %1008 = vperm.xlu0 %1007, %v921
        %v1009 = vpop.permute.xlu0 %1008
        %1012 = vset.pattern.permute.xlu0 8
        %1013 = vperm.xlu0 %1012, %v922
        %v1014 = vpop.permute.xlu0 %1013
        %1017 = vset.pattern.permute.xlu0 8
        %1018 = vperm.xlu0 %1017, %v923
        %v1019 = vpop.permute.xlu0 %1018
        %1022 = vset.pattern.permute.xlu0 8
        %1023 = vperm.xlu0 %1022, %v924
        %v1024 = vpop.permute.xlu0 %1023
        %1027 = vset.pattern.permute.xlu0 8
        %1028 = vperm.xlu0 %1027, %v925
        %v1029 = vpop.permute.xlu0 %1028
        %1032 = vset.pattern.permute.xlu0 8
        %1033 = vperm.xlu0 %1032, %v926
        %v1034 = vpop.permute.xlu0 %1033
        %1037 = vset.pattern.permute.xlu0 8
        %1038 = vperm.xlu0 %1037, %v927
        %v1039 = vpop.permute.xlu0 %1038
        %1042 = vset.pattern.permute.xlu0 8
        %1043 = vperm.xlu0 %1042, %v928
        %v1044 = vpop.permute.xlu0 %1043
        %1047 = vset.pattern.permute.xlu0 8
        %1048 = vperm.xlu0 %1047, %v929
        %v1049 = vpop.permute.xlu0 %1048
        %1052 = vset.pattern.permute.xlu0 8
        %1053 = vperm.xlu0 %1052, %v930
        %v1054 = vpop.permute.xlu0 %1053
        %1057 = vset.pattern.permute.xlu0 8
        %1058 = vperm.xlu0 %1057, %v931
        %v1059 = vpop.permute.xlu0 %1058
        %1062 = vset.pattern.permute.xlu0 8
        %1063 = vperm.xlu0 %1062, %v932
        %v1064 = vpop.permute.xlu0 %1063
        %1067 = vset.pattern.permute.xlu0 8
        %1068 = vperm.xlu0 %1067, %v933
        %v1069 = vpop.permute.xlu0 %1068
        %1072 = vset.pattern.permute.xlu0 8
        %1073 = vperm.xlu0 %1072, %v934
        %v1074 = vpop.permute.xlu0 %1073
        %1077 = vset.pattern.permute.xlu0 8
        %1078 = vperm.xlu0 %1077, %v935
        %v1079 = vpop.permute.xlu0 %1078
        %1082 = vset.pattern.permute.xlu0 8
        %1083 = vperm.xlu0 %1082, %v936
        %v1084 = vpop.permute.xlu0 %1083
        %1087 = vset.pattern.permute.xlu0 8
        %1088 = vperm.xlu0 %1087, %v937
        %v1089 = vpop.permute.xlu0 %1088
        %1092 = vset.pattern.permute.xlu0 8
        %1093 = vperm.xlu0 %1092, %v938
        %v1094 = vpop.permute.xlu0 %1093
        %1097 = vset.pattern.permute.xlu0 8
        %1098 = vperm.xlu0 %1097, %v939
        %v1099 = vpop.permute.xlu0 %1098
        %v1102 = vlaneseq
        %v1103 = vshrl.u32 %v1102, 7
        %v1104 = vsub.s32 0, %v1103
        %v1105 = vrot.slane %v940, %v1104
        %v1107 = vmul.f32 %v944, %v1105
        %v1108 = vmul.f32 %v949, %v1105
        %v1109 = vmul.f32 %v954, %v1105
        %v1110 = vmul.f32 %v959, %v1105
        %v1111 = vmul.f32 %v964, %v1105
        %v1112 = vmul.f32 %v969, %v1105
        %v1113 = vmul.f32 %v974, %v1105
        %v1114 = vmul.f32 %v979, %v1105
        %v1115 = vmul.f32 %v984, %v1105
        %v1116 = vmul.f32 %v989, %v1105
        %v1117 = vmul.f32 %v994, %v1105
        %v1118 = vmul.f32 %v999, %v1105
        %v1119 = vmul.f32 %v1004, %v1105
        %v1120 = vmul.f32 %v1009, %v1105
        %v1121 = vmul.f32 %v1014, %v1105
        %v1122 = vmul.f32 %v1019, %v1105
        %v1123 = vmul.f32 %v1024, %v1105
        %v1124 = vmul.f32 %v1029, %v1105
        %v1125 = vmul.f32 %v1034, %v1105
        %v1126 = vmul.f32 %v1039, %v1105
        %v1127 = vmul.f32 %v1044, %v1105
        %v1128 = vmul.f32 %v1049, %v1105
        %v1129 = vmul.f32 %v1054, %v1105
        %v1130 = vmul.f32 %v1059, %v1105
        %v1131 = vmul.f32 %v1064, %v1105
        %v1132 = vmul.f32 %v1069, %v1105
        %v1133 = vmul.f32 %v1074, %v1105
        %v1134 = vmul.f32 %v1079, %v1105
        %v1135 = vmul.f32 %v1084, %v1105
        %v1136 = vmul.f32 %v1089, %v1105
        %v1137 = vmul.f32 %v1094, %v1105
        %v1138 = vmul.f32 %v1099, %v1105
        %1139 = vst.msk [vmem:[#allocation5] sm:$0xff] %vm480, %v1107
        %1140 = vst.msk [vmem:[#allocation5 + $0x8] sm:$0xff] %vm480, %v1108
        %1141 = vst.msk [vmem:[#allocation5 + $0x10] sm:$0xff] %vm480, %v1109
        %1142 = vst.msk [vmem:[#allocation5 + $0x18] sm:$0xff] %vm480, %v1110
        %1143 = vst.msk [vmem:[#allocation5 + $0x20] sm:$0xff] %vm480, %v1111
        %1144 = vst.msk [vmem:[#allocation5 + $0x28] sm:$0xff] %vm480, %v1112
        %1145 = vst.msk [vmem:[#allocation5 + $0x30] sm:$0xff] %vm480, %v1113
        %1146 = vst.msk [vmem:[#allocation5 + $0x38] sm:$0xff] %vm480, %v1114
        %1147 = vst.msk [vmem:[#allocation5 + $0x40] sm:$0xff] %vm480, %v1115
        %1148 = vst.msk [vmem:[#allocation5 + $0x48] sm:$0xff] %vm480, %v1116
        %1149 = vst.msk [vmem:[#allocation5 + $0x50] sm:$0xff] %vm480, %v1117
        %1150 = vst.msk [vmem:[#allocation5 + $0x58] sm:$0xff] %vm480, %v1118
        %1151 = vst.msk [vmem:[#allocation5 + $0x60] sm:$0xff] %vm480, %v1119
        %1152 = vst.msk [vmem:[#allocation5 + $0x68] sm:$0xff] %vm480, %v1120
        %1153 = vst.msk [vmem:[#allocation5 + $0x70] sm:$0xff] %vm480, %v1121
        %1154 = vst.msk [vmem:[#allocation5 + $0x78] sm:$0xff] %vm480, %v1122
        %1155 = vst.msk [vmem:[#allocation5 + $0x80] sm:$0xff] %vm480, %v1123
        %1156 = vst.msk [vmem:[#allocation5 + $0x88] sm:$0xff] %vm480, %v1124
        %1157 = vst.msk [vmem:[#allocation5 + $0x90] sm:$0xff] %vm480, %v1125
        %1158 = vst.msk [vmem:[#allocation5 + $0x98] sm:$0xff] %vm480, %v1126
        %1159 = vst.msk [vmem:[#allocation5 + $0xa0] sm:$0xff] %vm480, %v1127
        %1160 = vst.msk [vmem:[#allocation5 + $0xa8] sm:$0xff] %vm480, %v1128
        %1161 = vst.msk [vmem:[#allocation5 + $0xb0] sm:$0xff] %vm480, %v1129
        %1162 = vst.msk [vmem:[#allocation5 + $0xb8] sm:$0xff] %vm480, %v1130
        %1163 = vst.msk [vmem:[#allocation5 + $0xc0] sm:$0xff] %vm480, %v1131
        %1164 = vst.msk [vmem:[#allocation5 + $0xc8] sm:$0xff] %vm480, %v1132
        %1165 = vst.msk [vmem:[#allocation5 + $0xd0] sm:$0xff] %vm480, %v1133
        %1166 = vst.msk [vmem:[#allocation5 + $0xd8] sm:$0xff] %vm480, %v1134
        %1167 = vst.msk [vmem:[#allocation5 + $0xe0] sm:$0xff] %vm480, %v1135
        %1168 = vst.msk [vmem:[#allocation5 + $0xe8] sm:$0xff] %vm480, %v1136
        %1169 = vst.msk [vmem:[#allocation5 + $0xf0] sm:$0xff] %vm480, %v1137
        %1170 = vst.msk [vmem:[#allocation5 + $0xf8] sm:$0xff] %vm480, %v1138
        %v1171 = vld [vmem:[%s3] sm:$0xff]
        %v1172 = vld [vmem:[%s3 + $0x8] sm:$0xff]
        %v1173 = vld [vmem:[%s5] sm:$0x1]
        %v1174 = vld [vmem:[%s7] sm:$0x1]
        %v1175 = vld [vmem:[%s8] sm:$0x1]
        %v1176 = vld [vmem:[#allocation2] sm:$0xff]
        %v1177 = vld [vmem:[#allocation3] sm:$0xff]
        loop: start=0, step=1, limit=2
        $region61: #{tpu_custom_call.1} parent=55 // loop_pre_header
          _
        $region62: #{tpu_custom_call.1} parent=55 // loop_header
          %s1179 = sphi 0, %s1183
          %p1180 = scmp.ge.s32.totalorder %s1179, 2
          %v1184 = vphi %v1176, %v2574
          %v1185 = vphi %v1177, %v2655
        $region63: #{tpu_custom_call.1} parent=55 // loop_header_branch
          %1182 = sbr.rel (%p1180) target = $region67
        $region64: #{tpu_custom_call.1} parent=55 // loop_body
          %s1186 = smul.u32 %s1179, 128
          %v1187 = vmul.f32 %v1184, 0.9
          %s1188 = scalar_lea.vmem [#allocation4], %s1186
          %v1189 = vld [vmem:[%s1188] sm:$0xff]
          %v1190 = vadd.f32 %v1187, %v1189
          %v1192 = vlaneseq
          %v1193 = vshrl.u32 %v1192, 7
          %v1194 = vsub.s32 0, %v1193
          %v1195 = vrot.slane %v1173, %v1194
          %v1197 = vmul.f32 %v1190, %v1195
          %v1198 = vmax.f32 %v1197, 0.0
          %v1199 = vmin.f32 %v1198, 1.0
          %v1200 = vmul.f32 %v1185, 0.9
          %v1202 = vsel %vm802, %v1199, 0
          %1204 = vmatprep.subr.mxu0 0.0
          %1205 = vmatpush1.msra.mxu0 0.0
          %1206 = vmatprep.subr.mxu0 0.0
          %1207 = vmatpush1.msra.mxu0 0.0
          %1208 = vmatprep.subr.mxu0 0.0
          %1209 = vmatpush1.msra.mxu0 0.0
          %1210 = vmatprep.subr.mxu0 0.0
          %1211 = vmatpush1.msra.mxu0 0.0
          %1212 = vmatprep.subr.mxu0 0.0
          %1213 = vmatpush1.msra.mxu0 0.0
          %1214 = vmatprep.subr.mxu0 0.0
          %1215 = vmatpush1.msra.mxu0 0.0
          %1216 = vmatprep.subr.mxu0 0.0
          %1217 = vmatpush1.msra.mxu0 0.0
          %1218 = vmatprep.subr.mxu0 0.0
          %1219 = vmatpush1.msra.mxu0 0.0
          %1220 = vmatprep.subr.mxu0 0.0
          %1221 = vmatpush1.msra.mxu0 0.0
          %1222 = vmatprep.subr.mxu0 0.0
          %1223 = vmatpush1.msra.mxu0 0.0
          %1224 = vmatprep.subr.mxu0 0.0
          %1225 = vmatpush1.msra.mxu0 0.0
          %1226 = vmatprep.subr.mxu0 0.0
          %1227 = vmatpush1.msra.mxu0 0.0
          %1228 = vmatprep.subr.mxu0 0.0
          %1229 = vmatpush1.msra.mxu0 0.0
          %1230 = vmatprep.subr.mxu0 0.0
          %1231 = vmatpush1.msra.mxu0 0.0
          %1232 = vmatprep.subr.mxu0 0.0
          %1233 = vmatpush1.msra.mxu0 %v1172
          %1234 = vmatprep.subr.mxu0 0.0
          %1235 = vmatpush1.msra.mxu0 %v1171
          %1236 = vmatprep.subr.mxu0 0.0
          %1237 = vmatpush2.msra.mxu0 0.0
          %1238 = vmatprep.subr.mxu0 0.0
          %1239 = vmatpush2.msra.mxu0 0.0
          %1240 = vmatprep.subr.mxu0 0.0
          %1241 = vmatpush2.msra.mxu0 0.0
          %1242 = vmatprep.subr.mxu0 0.0
          %1243 = vmatpush2.msra.mxu0 0.0
          %1244 = vmatprep.subr.mxu0 0.0
          %1245 = vmatpush2.msra.mxu0 0.0
          %1246 = vmatprep.subr.mxu0 0.0
          %1247 = vmatpush2.msra.mxu0 0.0
          %1248 = vmatprep.subr.mxu0 0.0
          %1249 = vmatpush2.msra.mxu0 0.0
          %1250 = vmatprep.subr.mxu0 0.0
          %1251 = vmatpush2.msra.mxu0 0.0
          %1252 = vmatprep.subr.mxu0 0.0
          %1253 = vmatpush2.msra.mxu0 0.0
          %1254 = vmatprep.subr.mxu0 0.0
          %1255 = vmatpush2.msra.mxu0 0.0
          %1256 = vmatprep.subr.mxu0 0.0
          %1257 = vmatpush2.msra.mxu0 0.0
          %1258 = vmatprep.subr.mxu0 0.0
          %1259 = vmatpush2.msra.mxu0 0.0
          %1260 = vmatprep.subr.mxu0 0.0
          %1261 = vmatpush2.msra.mxu0 0.0
          %1262 = vmatprep.subr.mxu0 0.0
          %1263 = vmatpush2.msra.mxu0 0.0
          %1264 = vmatprep.subr.mxu0 0.0
          %1265 = vmatpush2.msra.mxu0 0.0
          %1266 = vmatprep.subr.mxu0 0.0
          %1267 = vmatpush2.msra.mxu0 0.0
          %1268 = vmatprep.mubr.f32.mxu0 0.0
          %1269 = vmatmul.mubr.f32.gmra.mxu0 %v1202
          %v1270 = vpop.f32.mrf.mxu0
          %v1271 = vadd.f32 0.0, %v1270
          %v1272 = vpop.f32.mrf.mxu0
          %1273 = vdwg.mxu0
          %v1274 = vadd.f32 %v1200, %v1271
          %s1275 = scalar_lea.vmem [#allocation5], %s1186
          %v1276 = vld [vmem:[%s1275] sm:$0xff]
          %v1277 = vadd.f32 %v1274, %v1276
          %v1279 = vlaneseq
          %v1280 = vshrl.u32 %v1279, 7
          %v1281 = vsub.s32 0, %v1280
          %v1282 = vrot.slane %v1174, %v1281
          %v1284 = vmul.f32 %v1277, %v1282
          %v1286 = vlaneseq
          %v1287 = vshrl.u32 %v1286, 7
          %v1288 = vsub.s32 0, %v1287
          %v1289 = vrot.slane %v1175, %v1288
          %v1291 = vadd.f32 %v1284, %v1289
          %v1292 = vmax.f32 %v1291, 0.0
          %v1293 = vmin.f32 %v1292, 1.0
          %s1294 = smul.u32 %s1179, 16
          %s1295 = sadd.s32 %s1294, 1
          %s1296 = smul.u32 %s1295, 8
          %v1297 = vmul.f32 %v1190, 0.9
          %s1298 = scalar_lea.vmem [#allocation4], %s1296
          %v1299 = vld [vmem:[%s1298] sm:$0xff]
          %v1300 = vadd.f32 %v1297, %v1299
          %v1301 = vmul.f32 %v1300, %v1195
          %v1302 = vmax.f32 %v1301, 0.0
          %v1303 = vmin.f32 %v1302, 1.0
          %v1304 = vmul.f32 %v1277, 0.9
          %v1306 = vsel %vm802, %v1303, 0
          %1308 = vmatprep.subr.mxu0 0.0
          %1309 = vmatpush1.msra.mxu0 0.0
          %1310 = vmatprep.subr.mxu0 0.0
          %1311 = vmatpush1.msra.mxu0 0.0
          %1312 = vmatprep.subr.mxu0 0.0
          %1313 = vmatpush1.msra.mxu0 0.0
          %1314 = vmatprep.subr.mxu0 0.0
          %1315 = vmatpush1.msra.mxu0 0.0
          %1316 = vmatprep.subr.mxu0 0.0
          %1317 = vmatpush1.msra.mxu0 0.0
          %1318 = vmatprep.subr.mxu0 0.0
          %1319 = vmatpush1.msra.mxu0 0.0
          %1320 = vmatprep.subr.mxu0 0.0
          %1321 = vmatpush1.msra.mxu0 0.0
          %1322 = vmatprep.subr.mxu0 0.0
          %1323 = vmatpush1.msra.mxu0 0.0
          %1324 = vmatprep.subr.mxu0 0.0
          %1325 = vmatpush1.msra.mxu0 0.0
          %1326 = vmatprep.subr.mxu0 0.0
          %1327 = vmatpush1.msra.mxu0 0.0
          %1328 = vmatprep.subr.mxu0 0.0
          %1329 = vmatpush1.msra.mxu0 0.0
          %1330 = vmatprep.subr.mxu0 0.0
          %1331 = vmatpush1.msra.mxu0 0.0
          %1332 = vmatprep.subr.mxu0 0.0
          %1333 = vmatpush1.msra.mxu0 0.0
          %1334 = vmatprep.subr.mxu0 0.0
          %1335 = vmatpush1.msra.mxu0 0.0
          %1336 = vmatprep.subr.mxu0 0.0
          %1337 = vmatpush1.msra.mxu0 %v1172
          %1338 = vmatprep.subr.mxu0 0.0
          %1339 = vmatpush1.msra.mxu0 %v1171
          %1340 = vmatprep.subr.mxu0 0.0
          %1341 = vmatpush2.msra.mxu0 0.0
          %1342 = vmatprep.subr.mxu0 0.0
          %1343 = vmatpush2.msra.mxu0 0.0
          %1344 = vmatprep.subr.mxu0 0.0
          %1345 = vmatpush2.msra.mxu0 0.0
          %1346 = vmatprep.subr.mxu0 0.0
          %1347 = vmatpush2.msra.mxu0 0.0
          %1348 = vmatprep.subr.mxu0 0.0
          %1349 = vmatpush2.msra.mxu0 0.0
          %1350 = vmatprep.subr.mxu0 0.0
          %1351 = vmatpush2.msra.mxu0 0.0
          %1352 = vmatprep.subr.mxu0 0.0
          %1353 = vmatpush2.msra.mxu0 0.0
          %1354 = vmatprep.subr.mxu0 0.0
          %1355 = vmatpush2.msra.mxu0 0.0
          %1356 = vmatprep.subr.mxu0 0.0
          %1357 = vmatpush2.msra.mxu0 0.0
          %1358 = vmatprep.subr.mxu0 0.0
          %1359 = vmatpush2.msra.mxu0 0.0
          %1360 = vmatprep.subr.mxu0 0.0
          %1361 = vmatpush2.msra.mxu0 0.0
          %1362 = vmatprep.subr.mxu0 0.0
          %1363 = vmatpush2.msra.mxu0 0.0
          %1364 = vmatprep.subr.mxu0 0.0
          %1365 = vmatpush2.msra.mxu0 0.0
          %1366 = vmatprep.subr.mxu0 0.0
          %1367 = vmatpush2.msra.mxu0 0.0
          %1368 = vmatprep.subr.mxu0 0.0
          %1369 = vmatpush2.msra.mxu0 0.0
          %1370 = vmatprep.subr.mxu0 0.0
          %1371 = vmatpush2.msra.mxu0 0.0
          %1372 = vmatprep.mubr.f32.mxu0 0.0
          %1373 = vmatmul.mubr.f32.gmra.mxu0 %v1306
          %v1374 = vpop.f32.mrf.mxu0
          %v1375 = vadd.f32 0.0, %v1374
          %v1376 = vpop.f32.mrf.mxu0
          %1377 = vdwg.mxu0
          %v1378 = vadd.f32 %v1304, %v1375
          %s1379 = scalar_lea.vmem [#allocation5], %s1296
          %v1380 = vld [vmem:[%s1379] sm:$0xff]
          %v1381 = vadd.f32 %v1378, %v1380
          %v1382 = vmul.f32 %v1381, %v1282
          %v1383 = vadd.f32 %v1382, %v1289
          %v1384 = vmax.f32 %v1383, 0.0
          %v1385 = vmin.f32 %v1384, 1.0
          %s1386 = sadd.s32 %s1294, 2
          %s1387 = smul.u32 %s1386, 8
          %v1388 = vmul.f32 %v1300, 0.9
          %s1389 = scalar_lea.vmem [#allocation4], %s1387
          %v1390 = vld [vmem:[%s1389] sm:$0xff]
          %v1391 = vadd.f32 %v1388, %v1390
          %v1392 = vmul.f32 %v1391, %v1195
          %v1393 = vmax.f32 %v1392, 0.0
          %v1394 = vmin.f32 %v1393, 1.0
          %v1395 = vmul.f32 %v1381, 0.9
          %v1397 = vsel %vm802, %v1394, 0
          %1399 = vmatprep.subr.mxu0 0.0
          %1400 = vmatpush1.msra.mxu0 0.0
          %1401 = vmatprep.subr.mxu0 0.0
          %1402 = vmatpush1.msra.mxu0 0.0
          %1403 = vmatprep.subr.mxu0 0.0
          %1404 = vmatpush1.msra.mxu0 0.0
          %1405 = vmatprep.subr.mxu0 0.0
          %1406 = vmatpush1.msra.mxu0 0.0
          %1407 = vmatprep.subr.mxu0 0.0
          %1408 = vmatpush1.msra.mxu0 0.0
          %1409 = vmatprep.subr.mxu0 0.0
          %1410 = vmatpush1.msra.mxu0 0.0
          %1411 = vmatprep.subr.mxu0 0.0
          %1412 = vmatpush1.msra.mxu0 0.0
          %1413 = vmatprep.subr.mxu0 0.0
          %1414 = vmatpush1.msra.mxu0 0.0
          %1415 = vmatprep.subr.mxu0 0.0
          %1416 = vmatpush1.msra.mxu0 0.0
          %1417 = vmatprep.subr.mxu0 0.0
          %1418 = vmatpush1.msra.mxu0 0.0
          %1419 = vmatprep.subr.mxu0 0.0
          %1420 = vmatpush1.msra.mxu0 0.0
          %1421 = vmatprep.subr.mxu0 0.0
          %1422 = vmatpush1.msra.mxu0 0.0
          %1423 = vmatprep.subr.mxu0 0.0
          %1424 = vmatpush1.msra.mxu0 0.0
          %1425 = vmatprep.subr.mxu0 0.0
          %1426 = vmatpush1.msra.mxu0 0.0
          %1427 = vmatprep.subr.mxu0 0.0
          %1428 = vmatpush1.msra.mxu0 %v1172
          %1429 = vmatprep.subr.mxu0 0.0
          %1430 = vmatpush1.msra.mxu0 %v1171
          %1431 = vmatprep.subr.mxu0 0.0
          %1432 = vmatpush2.msra.mxu0 0.0
          %1433 = vmatprep.subr.mxu0 0.0
          %1434 = vmatpush2.msra.mxu0 0.0
          %1435 = vmatprep.subr.mxu0 0.0
          %1436 = vmatpush2.msra.mxu0 0.0
          %1437 = vmatprep.subr.mxu0 0.0
          %1438 = vmatpush2.msra.mxu0 0.0
          %1439 = vmatprep.subr.mxu0 0.0
          %1440 = vmatpush2.msra.mxu0 0.0
          %1441 = vmatprep.subr.mxu0 0.0
          %1442 = vmatpush2.msra.mxu0 0.0
          %1443 = vmatprep.subr.mxu0 0.0
          %1444 = vmatpush2.msra.mxu0 0.0
          %1445 = vmatprep.subr.mxu0 0.0
          %1446 = vmatpush2.msra.mxu0 0.0
          %1447 = vmatprep.subr.mxu0 0.0
          %1448 = vmatpush2.msra.mxu0 0.0
          %1449 = vmatprep.subr.mxu0 0.0
          %1450 = vmatpush2.msra.mxu0 0.0
          %1451 = vmatprep.subr.mxu0 0.0
          %1452 = vmatpush2.msra.mxu0 0.0
          %1453 = vmatprep.subr.mxu0 0.0
          %1454 = vmatpush2.msra.mxu0 0.0
          %1455 = vmatprep.subr.mxu0 0.0
          %1456 = vmatpush2.msra.mxu0 0.0
          %1457 = vmatprep.subr.mxu0 0.0
          %1458 = vmatpush2.msra.mxu0 0.0
          %1459 = vmatprep.subr.mxu0 0.0
          %1460 = vmatpush2.msra.mxu0 0.0
          %1461 = vmatprep.subr.mxu0 0.0
          %1462 = vmatpush2.msra.mxu0 0.0
          %1463 = vmatprep.mubr.f32.mxu0 0.0
          %1464 = vmatmul.mubr.f32.gmra.mxu0 %v1397
          %v1465 = vpop.f32.mrf.mxu0
          %v1466 = vadd.f32 0.0, %v1465
          %v1467 = vpop.f32.mrf.mxu0
          %1468 = vdwg.mxu0
          %v1469 = vadd.f32 %v1395, %v1466
          %s1470 = scalar_lea.vmem [#allocation5], %s1387
          %v1471 = vld [vmem:[%s1470] sm:$0xff]
          %v1472 = vadd.f32 %v1469, %v1471
          %v1473 = vmul.f32 %v1472, %v1282
          %v1474 = vadd.f32 %v1473, %v1289
          %v1475 = vmax.f32 %v1474, 0.0
          %v1476 = vmin.f32 %v1475, 1.0
          %s1477 = sadd.s32 %s1294, 3
          %s1478 = smul.u32 %s1477, 8
          %v1479 = vmul.f32 %v1391, 0.9
          %s1480 = scalar_lea.vmem [#allocation4], %s1478
          %v1481 = vld [vmem:[%s1480] sm:$0xff]
          %v1482 = vadd.f32 %v1479, %v1481
          %v1483 = vmul.f32 %v1482, %v1195
          %v1484 = vmax.f32 %v1483, 0.0
          %v1485 = vmin.f32 %v1484, 1.0
          %v1486 = vmul.f32 %v1472, 0.9
          %v1488 = vsel %vm802, %v1485, 0
          %1490 = vmatprep.subr.mxu0 0.0
          %1491 = vmatpush1.msra.mxu0 0.0
          %1492 = vmatprep.subr.mxu0 0.0
          %1493 = vmatpush1.msra.mxu0 0.0
          %1494 = vmatprep.subr.mxu0 0.0
          %1495 = vmatpush1.msra.mxu0 0.0
          %1496 = vmatprep.subr.mxu0 0.0
          %1497 = vmatpush1.msra.mxu0 0.0
          %1498 = vmatprep.subr.mxu0 0.0
          %1499 = vmatpush1.msra.mxu0 0.0
          %1500 = vmatprep.subr.mxu0 0.0
          %1501 = vmatpush1.msra.mxu0 0.0
          %1502 = vmatprep.subr.mxu0 0.0
          %1503 = vmatpush1.msra.mxu0 0.0
          %1504 = vmatprep.subr.mxu0 0.0
          %1505 = vmatpush1.msra.mxu0 0.0
          %1506 = vmatprep.subr.mxu0 0.0
          %1507 = vmatpush1.msra.mxu0 0.0
          %1508 = vmatprep.subr.mxu0 0.0
          %1509 = vmatpush1.msra.mxu0 0.0
          %1510 = vmatprep.subr.mxu0 0.0
          %1511 = vmatpush1.msra.mxu0 0.0
          %1512 = vmatprep.subr.mxu0 0.0
          %1513 = vmatpush1.msra.mxu0 0.0
          %1514 = vmatprep.subr.mxu0 0.0
          %1515 = vmatpush1.msra.mxu0 0.0
          %1516 = vmatprep.subr.mxu0 0.0
          %1517 = vmatpush1.msra.mxu0 0.0
          %1518 = vmatprep.subr.mxu0 0.0
          %1519 = vmatpush1.msra.mxu0 %v1172
          %1520 = vmatprep.subr.mxu0 0.0
          %1521 = vmatpush1.msra.mxu0 %v1171
          %1522 = vmatprep.subr.mxu0 0.0
          %1523 = vmatpush2.msra.mxu0 0.0
          %1524 = vmatprep.subr.mxu0 0.0
          %1525 = vmatpush2.msra.mxu0 0.0
          %1526 = vmatprep.subr.mxu0 0.0
          %1527 = vmatpush2.msra.mxu0 0.0
          %1528 = vmatprep.subr.mxu0 0.0
          %1529 = vmatpush2.msra.mxu0 0.0
          %1530 = vmatprep.subr.mxu0 0.0
          %1531 = vmatpush2.msra.mxu0 0.0
          %1532 = vmatprep.subr.mxu0 0.0
          %1533 = vmatpush2.msra.mxu0 0.0
          %1534 = vmatprep.subr.mxu0 0.0
          %1535 = vmatpush2.msra.mxu0 0.0
          %1536 = vmatprep.subr.mxu0 0.0
          %1537 = vmatpush2.msra.mxu0 0.0
          %1538 = vmatprep.subr.mxu0 0.0
          %1539 = vmatpush2.msra.mxu0 0.0
          %1540 = vmatprep.subr.mxu0 0.0
          %1541 = vmatpush2.msra.mxu0 0.0
          %1542 = vmatprep.subr.mxu0 0.0
          %1543 = vmatpush2.msra.mxu0 0.0
          %1544 = vmatprep.subr.mxu0 0.0
          %1545 = vmatpush2.msra.mxu0 0.0
          %1546 = vmatprep.subr.mxu0 0.0
          %1547 = vmatpush2.msra.mxu0 0.0
          %1548 = vmatprep.subr.mxu0 0.0
          %1549 = vmatpush2.msra.mxu0 0.0
          %1550 = vmatprep.subr.mxu0 0.0
          %1551 = vmatpush2.msra.mxu0 0.0
          %1552 = vmatprep.subr.mxu0 0.0
          %1553 = vmatpush2.msra.mxu0 0.0
          %1554 = vmatprep.mubr.f32.mxu0 0.0
          %1555 = vmatmul.mubr.f32.gmra.mxu0 %v1488
          %v1556 = vpop.f32.mrf.mxu0
          %v1557 = vadd.f32 0.0, %v1556
          %v1558 = vpop.f32.mrf.mxu0
          %1559 = vdwg.mxu0
          %v1560 = vadd.f32 %v1486, %v1557
          %s1561 = scalar_lea.vmem [#allocation5], %s1478
          %v1562 = vld [vmem:[%s1561] sm:$0xff]
          %v1563 = vadd.f32 %v1560, %v1562
          %v1564 = vmul.f32 %v1563, %v1282
          %v1565 = vadd.f32 %v1564, %v1289
          %v1566 = vmax.f32 %v1565, 0.0
          %v1567 = vmin.f32 %v1566, 1.0
          %s1568 = sadd.s32 %s1294, 4
          %s1569 = smul.u32 %s1568, 8
          %v1570 = vmul.f32 %v1482, 0.9
          %s1571 = scalar_lea.vmem [#allocation4], %s1569
          %v1572 = vld [vmem:[%s1571] sm:$0xff]
          %v1573 = vadd.f32 %v1570, %v1572
          %v1574 = vmul.f32 %v1573, %v1195
          %v1575 = vmax.f32 %v1574, 0.0
          %v1576 = vmin.f32 %v1575, 1.0
          %v1577 = vmul.f32 %v1563, 0.9
          %v1579 = vsel %vm802, %v1576, 0
          %1581 = vmatprep.subr.mxu0 0.0
          %1582 = vmatpush1.msra.mxu0 0.0
          %1583 = vmatprep.subr.mxu0 0.0
          %1584 = vmatpush1.msra.mxu0 0.0
          %1585 = vmatprep.subr.mxu0 0.0
          %1586 = vmatpush1.msra.mxu0 0.0
          %1587 = vmatprep.subr.mxu0 0.0
          %1588 = vmatpush1.msra.mxu0 0.0
          %1589 = vmatprep.subr.mxu0 0.0
          %1590 = vmatpush1.msra.mxu0 0.0
          %1591 = vmatprep.subr.mxu0 0.0
          %1592 = vmatpush1.msra.mxu0 0.0
          %1593 = vmatprep.subr.mxu0 0.0
          %1594 = vmatpush1.msra.mxu0 0.0
          %1595 = vmatprep.subr.mxu0 0.0
          %1596 = vmatpush1.msra.mxu0 0.0
          %1597 = vmatprep.subr.mxu0 0.0
          %1598 = vmatpush1.msra.mxu0 0.0
          %1599 = vmatprep.subr.mxu0 0.0
          %1600 = vmatpush1.msra.mxu0 0.0
          %1601 = vmatprep.subr.mxu0 0.0
          %1602 = vmatpush1.msra.mxu0 0.0
          %1603 = vmatprep.subr.mxu0 0.0
          %1604 = vmatpush1.msra.mxu0 0.0
          %1605 = vmatprep.subr.mxu0 0.0
          %1606 = vmatpush1.msra.mxu0 0.0
          %1607 = vmatprep.subr.mxu0 0.0
          %1608 = vmatpush1.msra.mxu0 0.0
          %1609 = vmatprep.subr.mxu0 0.0
          %1610 = vmatpush1.msra.mxu0 %v1172
          %1611 = vmatprep.subr.mxu0 0.0
          %1612 = vmatpush1.msra.mxu0 %v1171
          %1613 = vmatprep.subr.mxu0 0.0
          %1614 = vmatpush2.msra.mxu0 0.0
          %1615 = vmatprep.subr.mxu0 0.0
          %1616 = vmatpush2.msra.mxu0 0.0
          %1617 = vmatprep.subr.mxu0 0.0
          %1618 = vmatpush2.msra.mxu0 0.0
          %1619 = vmatprep.subr.mxu0 0.0
          %1620 = vmatpush2.msra.mxu0 0.0
          %1621 = vmatprep.subr.mxu0 0.0
          %1622 = vmatpush2.msra.mxu0 0.0
          %1623 = vmatprep.subr.mxu0 0.0
          %1624 = vmatpush2.msra.mxu0 0.0
          %1625 = vmatprep.subr.mxu0 0.0
          %1626 = vmatpush2.msra.mxu0 0.0
          %1627 = vmatprep.subr.mxu0 0.0
          %1628 = vmatpush2.msra.mxu0 0.0
          %1629 = vmatprep.subr.mxu0 0.0
          %1630 = vmatpush2.msra.mxu0 0.0
          %1631 = vmatprep.subr.mxu0 0.0
          %1632 = vmatpush2.msra.mxu0 0.0
          %1633 = vmatprep.subr.mxu0 0.0
          %1634 = vmatpush2.msra.mxu0 0.0
          %1635 = vmatprep.subr.mxu0 0.0
          %1636 = vmatpush2.msra.mxu0 0.0
          %1637 = vmatprep.subr.mxu0 0.0
          %1638 = vmatpush2.msra.mxu0 0.0
          %1639 = vmatprep.subr.mxu0 0.0
          %1640 = vmatpush2.msra.mxu0 0.0
          %1641 = vmatprep.subr.mxu0 0.0
          %1642 = vmatpush2.msra.mxu0 0.0
          %1643 = vmatprep.subr.mxu0 0.0
          %1644 = vmatpush2.msra.mxu0 0.0
          %1645 = vmatprep.mubr.f32.mxu0 0.0
          %1646 = vmatmul.mubr.f32.gmra.mxu0 %v1579
          %v1647 = vpop.f32.mrf.mxu0
          %v1648 = vadd.f32 0.0, %v1647
          %v1649 = vpop.f32.mrf.mxu0
          %1650 = vdwg.mxu0
          %v1651 = vadd.f32 %v1577, %v1648
          %s1652 = scalar_lea.vmem [#allocation5], %s1569
          %v1653 = vld [vmem:[%s1652] sm:$0xff]
          %v1654 = vadd.f32 %v1651, %v1653
          %v1655 = vmul.f32 %v1654, %v1282
          %v1656 = vadd.f32 %v1655, %v1289
          %v1657 = vmax.f32 %v1656, 0.0
          %v1658 = vmin.f32 %v1657, 1.0
          %s1659 = sadd.s32 %s1294, 5
          %s1660 = smul.u32 %s1659, 8
          %v1661 = vmul.f32 %v1573, 0.9
          %s1662 = scalar_lea.vmem [#allocation4], %s1660
          %v1663 = vld [vmem:[%s1662] sm:$0xff]
          %v1664 = vadd.f32 %v1661, %v1663
          %v1665 = vmul.f32 %v1664, %v1195
          %v1666 = vmax.f32 %v1665, 0.0
          %v1667 = vmin.f32 %v1666, 1.0
          %v1668 = vmul.f32 %v1654, 0.9
          %v1670 = vsel %vm802, %v1667, 0
          %1672 = vmatprep.subr.mxu0 0.0
          %1673 = vmatpush1.msra.mxu0 0.0
          %1674 = vmatprep.subr.mxu0 0.0
          %1675 = vmatpush1.msra.mxu0 0.0
          %1676 = vmatprep.subr.mxu0 0.0
          %1677 = vmatpush1.msra.mxu0 0.0
          %1678 = vmatprep.subr.mxu0 0.0
          %1679 = vmatpush1.msra.mxu0 0.0
          %1680 = vmatprep.subr.mxu0 0.0
          %1681 = vmatpush1.msra.mxu0 0.0
          %1682 = vmatprep.subr.mxu0 0.0
          %1683 = vmatpush1.msra.mxu0 0.0
          %1684 = vmatprep.subr.mxu0 0.0
          %1685 = vmatpush1.msra.mxu0 0.0
          %1686 = vmatprep.subr.mxu0 0.0
          %1687 = vmatpush1.msra.mxu0 0.0
          %1688 = vmatprep.subr.mxu0 0.0
          %1689 = vmatpush1.msra.mxu0 0.0
          %1690 = vmatprep.subr.mxu0 0.0
          %1691 = vmatpush1.msra.mxu0 0.0
          %1692 = vmatprep.subr.mxu0 0.0
          %1693 = vmatpush1.msra.mxu0 0.0
          %1694 = vmatprep.subr.mxu0 0.0
          %1695 = vmatpush1.msra.mxu0 0.0
          %1696 = vmatprep.subr.mxu0 0.0
          %1697 = vmatpush1.msra.mxu0 0.0
          %1698 = vmatprep.subr.mxu0 0.0
          %1699 = vmatpush1.msra.mxu0 0.0
          %1700 = vmatprep.subr.mxu0 0.0
          %1701 = vmatpush1.msra.mxu0 %v1172
          %1702 = vmatprep.subr.mxu0 0.0
          %1703 = vmatpush1.msra.mxu0 %v1171
          %1704 = vmatprep.subr.mxu0 0.0
          %1705 = vmatpush2.msra.mxu0 0.0
          %1706 = vmatprep.subr.mxu0 0.0
          %1707 = vmatpush2.msra.mxu0 0.0
          %1708 = vmatprep.subr.mxu0 0.0
          %1709 = vmatpush2.msra.mxu0 0.0
          %1710 = vmatprep.subr.mxu0 0.0
          %1711 = vmatpush2.msra.mxu0 0.0
          %1712 = vmatprep.subr.mxu0 0.0
          %1713 = vmatpush2.msra.mxu0 0.0
          %1714 = vmatprep.subr.mxu0 0.0
          %1715 = vmatpush2.msra.mxu0 0.0
          %1716 = vmatprep.subr.mxu0 0.0
          %1717 = vmatpush2.msra.mxu0 0.0
          %1718 = vmatprep.subr.mxu0 0.0
          %1719 = vmatpush2.msra.mxu0 0.0
          %1720 = vmatprep.subr.mxu0 0.0
          %1721 = vmatpush2.msra.mxu0 0.0
          %1722 = vmatprep.subr.mxu0 0.0
          %1723 = vmatpush2.msra.mxu0 0.0
          %1724 = vmatprep.subr.mxu0 0.0
          %1725 = vmatpush2.msra.mxu0 0.0
          %1726 = vmatprep.subr.mxu0 0.0
          %1727 = vmatpush2.msra.mxu0 0.0
          %1728 = vmatprep.subr.mxu0 0.0
          %1729 = vmatpush2.msra.mxu0 0.0
          %1730 = vmatprep.subr.mxu0 0.0
          %1731 = vmatpush2.msra.mxu0 0.0
          %1732 = vmatprep.subr.mxu0 0.0
          %1733 = vmatpush2.msra.mxu0 0.0
          %1734 = vmatprep.subr.mxu0 0.0
          %1735 = vmatpush2.msra.mxu0 0.0
          %1736 = vmatprep.mubr.f32.mxu0 0.0
          %1737 = vmatmul.mubr.f32.gmra.mxu0 %v1670
          %v1738 = vpop.f32.mrf.mxu0
          %v1739 = vadd.f32 0.0, %v1738
          %v1740 = vpop.f32.mrf.mxu0
          %1741 = vdwg.mxu0
          %v1742 = vadd.f32 %v1668, %v1739
          %s1743 = scalar_lea.vmem [#allocation5], %s1660
          %v1744 = vld [vmem:[%s1743] sm:$0xff]
          %v1745 = vadd.f32 %v1742, %v1744
          %v1746 = vmul.f32 %v1745, %v1282
          %v1747 = vadd.f32 %v1746, %v1289
          %v1748 = vmax.f32 %v1747, 0.0
          %v1749 = vmin.f32 %v1748, 1.0
          %s1750 = sadd.s32 %s1294, 6
          %s1751 = smul.u32 %s1750, 8
          %v1752 = vmul.f32 %v1664, 0.9
          %s1753 = scalar_lea.vmem [#allocation4], %s1751
          %v1754 = vld [vmem:[%s1753] sm:$0xff]
          %v1755 = vadd.f32 %v1752, %v1754
          %v1756 = vmul.f32 %v1755, %v1195
          %v1757 = vmax.f32 %v1756, 0.0
          %v1758 = vmin.f32 %v1757, 1.0
          %v1759 = vmul.f32 %v1745, 0.9
          %v1761 = vsel %vm802, %v1758, 0
          %1763 = vmatprep.subr.mxu0 0.0
          %1764 = vmatpush1.msra.mxu0 0.0
          %1765 = vmatprep.subr.mxu0 0.0
          %1766 = vmatpush1.msra.mxu0 0.0
          %1767 = vmatprep.subr.mxu0 0.0
          %1768 = vmatpush1.msra.mxu0 0.0
          %1769 = vmatprep.subr.mxu0 0.0
          %1770 = vmatpush1.msra.mxu0 0.0
          %1771 = vmatprep.subr.mxu0 0.0
          %1772 = vmatpush1.msra.mxu0 0.0
          %1773 = vmatprep.subr.mxu0 0.0
          %1774 = vmatpush1.msra.mxu0 0.0
          %1775 = vmatprep.subr.mxu0 0.0
          %1776 = vmatpush1.msra.mxu0 0.0
          %1777 = vmatprep.subr.mxu0 0.0
          %1778 = vmatpush1.msra.mxu0 0.0
          %1779 = vmatprep.subr.mxu0 0.0
          %1780 = vmatpush1.msra.mxu0 0.0
          %1781 = vmatprep.subr.mxu0 0.0
          %1782 = vmatpush1.msra.mxu0 0.0
          %1783 = vmatprep.subr.mxu0 0.0
          %1784 = vmatpush1.msra.mxu0 0.0
          %1785 = vmatprep.subr.mxu0 0.0
          %1786 = vmatpush1.msra.mxu0 0.0
          %1787 = vmatprep.subr.mxu0 0.0
          %1788 = vmatpush1.msra.mxu0 0.0
          %1789 = vmatprep.subr.mxu0 0.0
          %1790 = vmatpush1.msra.mxu0 0.0
          %1791 = vmatprep.subr.mxu0 0.0
          %1792 = vmatpush1.msra.mxu0 %v1172
          %1793 = vmatprep.subr.mxu0 0.0
          %1794 = vmatpush1.msra.mxu0 %v1171
          %1795 = vmatprep.subr.mxu0 0.0
          %1796 = vmatpush2.msra.mxu0 0.0
          %1797 = vmatprep.subr.mxu0 0.0
          %1798 = vmatpush2.msra.mxu0 0.0
          %1799 = vmatprep.subr.mxu0 0.0
          %1800 = vmatpush2.msra.mxu0 0.0
          %1801 = vmatprep.subr.mxu0 0.0
          %1802 = vmatpush2.msra.mxu0 0.0
          %1803 = vmatprep.subr.mxu0 0.0
          %1804 = vmatpush2.msra.mxu0 0.0
          %1805 = vmatprep.subr.mxu0 0.0
          %1806 = vmatpush2.msra.mxu0 0.0
          %1807 = vmatprep.subr.mxu0 0.0
          %1808 = vmatpush2.msra.mxu0 0.0
          %1809 = vmatprep.subr.mxu0 0.0
          %1810 = vmatpush2.msra.mxu0 0.0
          %1811 = vmatprep.subr.mxu0 0.0
          %1812 = vmatpush2.msra.mxu0 0.0
          %1813 = vmatprep.subr.mxu0 0.0
          %1814 = vmatpush2.msra.mxu0 0.0
          %1815 = vmatprep.subr.mxu0 0.0
          %1816 = vmatpush2.msra.mxu0 0.0
          %1817 = vmatprep.subr.mxu0 0.0
          %1818 = vmatpush2.msra.mxu0 0.0
          %1819 = vmatprep.subr.mxu0 0.0
          %1820 = vmatpush2.msra.mxu0 0.0
          %1821 = vmatprep.subr.mxu0 0.0
          %1822 = vmatpush2.msra.mxu0 0.0
          %1823 = vmatprep.subr.mxu0 0.0
          %1824 = vmatpush2.msra.mxu0 0.0
          %1825 = vmatprep.subr.mxu0 0.0
          %1826 = vmatpush2.msra.mxu0 0.0
          %1827 = vmatprep.mubr.f32.mxu0 0.0
          %1828 = vmatmul.mubr.f32.gmra.mxu0 %v1761
          %v1829 = vpop.f32.mrf.mxu0
          %v1830 = vadd.f32 0.0, %v1829
          %v1831 = vpop.f32.mrf.mxu0
          %1832 = vdwg.mxu0
          %v1833 = vadd.f32 %v1759, %v1830
          %s1834 = scalar_lea.vmem [#allocation5], %s1751
          %v1835 = vld [vmem:[%s1834] sm:$0xff]
          %v1836 = vadd.f32 %v1833, %v1835
          %v1837 = vmul.f32 %v1836, %v1282
          %v1838 = vadd.f32 %v1837, %v1289
          %v1839 = vmax.f32 %v1838, 0.0
          %v1840 = vmin.f32 %v1839, 1.0
          %s1841 = sadd.s32 %s1294, 7
          %s1842 = smul.u32 %s1841, 8
          %v1843 = vmul.f32 %v1755, 0.9
          %s1844 = scalar_lea.vmem [#allocation4], %s1842
          %v1845 = vld [vmem:[%s1844] sm:$0xff]
          %v1846 = vadd.f32 %v1843, %v1845
          %v1847 = vmul.f32 %v1846, %v1195
          %v1848 = vmax.f32 %v1847, 0.0
          %v1849 = vmin.f32 %v1848, 1.0
          %v1850 = vmul.f32 %v1836, 0.9
          %v1852 = vsel %vm802, %v1849, 0
          %1854 = vmatprep.subr.mxu0 0.0
          %1855 = vmatpush1.msra.mxu0 0.0
          %1856 = vmatprep.subr.mxu0 0.0
          %1857 = vmatpush1.msra.mxu0 0.0
          %1858 = vmatprep.subr.mxu0 0.0
          %1859 = vmatpush1.msra.mxu0 0.0
          %1860 = vmatprep.subr.mxu0 0.0
          %1861 = vmatpush1.msra.mxu0 0.0
          %1862 = vmatprep.subr.mxu0 0.0
          %1863 = vmatpush1.msra.mxu0 0.0
          %1864 = vmatprep.subr.mxu0 0.0
          %1865 = vmatpush1.msra.mxu0 0.0
          %1866 = vmatprep.subr.mxu0 0.0
          %1867 = vmatpush1.msra.mxu0 0.0
          %1868 = vmatprep.subr.mxu0 0.0
          %1869 = vmatpush1.msra.mxu0 0.0
          %1870 = vmatprep.subr.mxu0 0.0
          %1871 = vmatpush1.msra.mxu0 0.0
          %1872 = vmatprep.subr.mxu0 0.0
          %1873 = vmatpush1.msra.mxu0 0.0
          %1874 = vmatprep.subr.mxu0 0.0
          %1875 = vmatpush1.msra.mxu0 0.0
          %1876 = vmatprep.subr.mxu0 0.0
          %1877 = vmatpush1.msra.mxu0 0.0
          %1878 = vmatprep.subr.mxu0 0.0
          %1879 = vmatpush1.msra.mxu0 0.0
          %1880 = vmatprep.subr.mxu0 0.0
          %1881 = vmatpush1.msra.mxu0 0.0
          %1882 = vmatprep.subr.mxu0 0.0
          %1883 = vmatpush1.msra.mxu0 %v1172
          %1884 = vmatprep.subr.mxu0 0.0
          %1885 = vmatpush1.msra.mxu0 %v1171
          %1886 = vmatprep.subr.mxu0 0.0
          %1887 = vmatpush2.msra.mxu0 0.0
          %1888 = vmatprep.subr.mxu0 0.0
          %1889 = vmatpush2.msra.mxu0 0.0
          %1890 = vmatprep.subr.mxu0 0.0
          %1891 = vmatpush2.msra.mxu0 0.0
          %1892 = vmatprep.subr.mxu0 0.0
          %1893 = vmatpush2.msra.mxu0 0.0
          %1894 = vmatprep.subr.mxu0 0.0
          %1895 = vmatpush2.msra.mxu0 0.0
          %1896 = vmatprep.subr.mxu0 0.0
          %1897 = vmatpush2.msra.mxu0 0.0
          %1898 = vmatprep.subr.mxu0 0.0
          %1899 = vmatpush2.msra.mxu0 0.0
          %1900 = vmatprep.subr.mxu0 0.0
          %1901 = vmatpush2.msra.mxu0 0.0
          %1902 = vmatprep.subr.mxu0 0.0
          %1903 = vmatpush2.msra.mxu0 0.0
          %1904 = vmatprep.subr.mxu0 0.0
          %1905 = vmatpush2.msra.mxu0 0.0
          %1906 = vmatprep.subr.mxu0 0.0
          %1907 = vmatpush2.msra.mxu0 0.0
          %1908 = vmatprep.subr.mxu0 0.0
          %1909 = vmatpush2.msra.mxu0 0.0
          %1910 = vmatprep.subr.mxu0 0.0
          %1911 = vmatpush2.msra.mxu0 0.0
          %1912 = vmatprep.subr.mxu0 0.0
          %1913 = vmatpush2.msra.mxu0 0.0
          %1914 = vmatprep.subr.mxu0 0.0
          %1915 = vmatpush2.msra.mxu0 0.0
          %1916 = vmatprep.subr.mxu0 0.0
          %1917 = vmatpush2.msra.mxu0 0.0
          %1918 = vmatprep.mubr.f32.mxu0 0.0
          %1919 = vmatmul.mubr.f32.gmra.mxu0 %v1852
          %v1920 = vpop.f32.mrf.mxu0
          %v1921 = vadd.f32 0.0, %v1920
          %v1922 = vpop.f32.mrf.mxu0
          %1923 = vdwg.mxu0
          %v1924 = vadd.f32 %v1850, %v1921
          %s1925 = scalar_lea.vmem [#allocation5], %s1842
          %v1926 = vld [vmem:[%s1925] sm:$0xff]
          %v1927 = vadd.f32 %v1924, %v1926
          %v1928 = vmul.f32 %v1927, %v1282
          %v1929 = vadd.f32 %v1928, %v1289
          %v1930 = vmax.f32 %v1929, 0.0
          %v1931 = vmin.f32 %v1930, 1.0
          %s1932 = sadd.s32 %s1294, 8
          %s1933 = smul.u32 %s1932, 8
          %v1934 = vmul.f32 %v1846, 0.9
          %s1935 = scalar_lea.vmem [#allocation4], %s1933
          %v1936 = vld [vmem:[%s1935] sm:$0xff]
          %v1937 = vadd.f32 %v1934, %v1936
          %v1938 = vmul.f32 %v1937, %v1195
          %v1939 = vmax.f32 %v1938, 0.0
          %v1940 = vmin.f32 %v1939, 1.0
          %v1941 = vmul.f32 %v1927, 0.9
          %v1943 = vsel %vm802, %v1940, 0
          %1945 = vmatprep.subr.mxu0 0.0
          %1946 = vmatpush1.msra.mxu0 0.0
          %1947 = vmatprep.subr.mxu0 0.0
          %1948 = vmatpush1.msra.mxu0 0.0
          %1949 = vmatprep.subr.mxu0 0.0
          %1950 = vmatpush1.msra.mxu0 0.0
          %1951 = vmatprep.subr.mxu0 0.0
          %1952 = vmatpush1.msra.mxu0 0.0
          %1953 = vmatprep.subr.mxu0 0.0
          %1954 = vmatpush1.msra.mxu0 0.0
          %1955 = vmatprep.subr.mxu0 0.0
          %1956 = vmatpush1.msra.mxu0 0.0
          %1957 = vmatprep.subr.mxu0 0.0
          %1958 = vmatpush1.msra.mxu0 0.0
          %1959 = vmatprep.subr.mxu0 0.0
          %1960 = vmatpush1.msra.mxu0 0.0
          %1961 = vmatprep.subr.mxu0 0.0
          %1962 = vmatpush1.msra.mxu0 0.0
          %1963 = vmatprep.subr.mxu0 0.0
          %1964 = vmatpush1.msra.mxu0 0.0
          %1965 = vmatprep.subr.mxu0 0.0
          %1966 = vmatpush1.msra.mxu0 0.0
          %1967 = vmatprep.subr.mxu0 0.0
          %1968 = vmatpush1.msra.mxu0 0.0
          %1969 = vmatprep.subr.mxu0 0.0
          %1970 = vmatpush1.msra.mxu0 0.0
          %1971 = vmatprep.subr.mxu0 0.0
          %1972 = vmatpush1.msra.mxu0 0.0
          %1973 = vmatprep.subr.mxu0 0.0
          %1974 = vmatpush1.msra.mxu0 %v1172
          %1975 = vmatprep.subr.mxu0 0.0
          %1976 = vmatpush1.msra.mxu0 %v1171
          %1977 = vmatprep.subr.mxu0 0.0
          %1978 = vmatpush2.msra.mxu0 0.0
          %1979 = vmatprep.subr.mxu0 0.0
          %1980 = vmatpush2.msra.mxu0 0.0
          %1981 = vmatprep.subr.mxu0 0.0
          %1982 = vmatpush2.msra.mxu0 0.0
          %1983 = vmatprep.subr.mxu0 0.0
          %1984 = vmatpush2.msra.mxu0 0.0
          %1985 = vmatprep.subr.mxu0 0.0
          %1986 = vmatpush2.msra.mxu0 0.0
          %1987 = vmatprep.subr.mxu0 0.0
          %1988 = vmatpush2.msra.mxu0 0.0
          %1989 = vmatprep.subr.mxu0 0.0
          %1990 = vmatpush2.msra.mxu0 0.0
          %1991 = vmatprep.subr.mxu0 0.0
          %1992 = vmatpush2.msra.mxu0 0.0
          %1993 = vmatprep.subr.mxu0 0.0
          %1994 = vmatpush2.msra.mxu0 0.0
          %1995 = vmatprep.subr.mxu0 0.0
          %1996 = vmatpush2.msra.mxu0 0.0
          %1997 = vmatprep.subr.mxu0 0.0
          %1998 = vmatpush2.msra.mxu0 0.0
          %1999 = vmatprep.subr.mxu0 0.0
          %2000 = vmatpush2.msra.mxu0 0.0
          %2001 = vmatprep.subr.mxu0 0.0
          %2002 = vmatpush2.msra.mxu0 0.0
          %2003 = vmatprep.subr.mxu0 0.0
          %2004 = vmatpush2.msra.mxu0 0.0
          %2005 = vmatprep.subr.mxu0 0.0
          %2006 = vmatpush2.msra.mxu0 0.0
          %2007 = vmatprep.subr.mxu0 0.0
          %2008 = vmatpush2.msra.mxu0 0.0
          %2009 = vmatprep.mubr.f32.mxu0 0.0
          %2010 = vmatmul.mubr.f32.gmra.mxu0 %v1943
          %v2011 = vpop.f32.mrf.mxu0
          %v2012 = vadd.f32 0.0, %v2011
          %v2013 = vpop.f32.mrf.mxu0
          %2014 = vdwg.mxu0
          %v2015 = vadd.f32 %v1941, %v2012
          %s2016 = scalar_lea.vmem [#allocation5], %s1933
          %v2017 = vld [vmem:[%s2016] sm:$0xff]
          %v2018 = vadd.f32 %v2015, %v2017
          %v2019 = vmul.f32 %v2018, %v1282
          %v2020 = vadd.f32 %v2019, %v1289
          %v2021 = vmax.f32 %v2020, 0.0
          %v2022 = vmin.f32 %v2021, 1.0
          %s2023 = sadd.s32 %s1294, 9
          %s2024 = smul.u32 %s2023, 8
          %v2025 = vmul.f32 %v1937, 0.9
          %s2026 = scalar_lea.vmem [#allocation4], %s2024
          %v2027 = vld [vmem:[%s2026] sm:$0xff]
          %v2028 = vadd.f32 %v2025, %v2027
          %v2029 = vmul.f32 %v2028, %v1195
          %v2030 = vmax.f32 %v2029, 0.0
          %v2031 = vmin.f32 %v2030, 1.0
          %v2032 = vmul.f32 %v2018, 0.9
          %v2034 = vsel %vm802, %v2031, 0
          %2036 = vmatprep.subr.mxu0 0.0
          %2037 = vmatpush1.msra.mxu0 0.0
          %2038 = vmatprep.subr.mxu0 0.0
          %2039 = vmatpush1.msra.mxu0 0.0
          %2040 = vmatprep.subr.mxu0 0.0
          %2041 = vmatpush1.msra.mxu0 0.0
          %2042 = vmatprep.subr.mxu0 0.0
          %2043 = vmatpush1.msra.mxu0 0.0
          %2044 = vmatprep.subr.mxu0 0.0
          %2045 = vmatpush1.msra.mxu0 0.0
          %2046 = vmatprep.subr.mxu0 0.0
          %2047 = vmatpush1.msra.mxu0 0.0
          %2048 = vmatprep.subr.mxu0 0.0
          %2049 = vmatpush1.msra.mxu0 0.0
          %2050 = vmatprep.subr.mxu0 0.0
          %2051 = vmatpush1.msra.mxu0 0.0
          %2052 = vmatprep.subr.mxu0 0.0
          %2053 = vmatpush1.msra.mxu0 0.0
          %2054 = vmatprep.subr.mxu0 0.0
          %2055 = vmatpush1.msra.mxu0 0.0
          %2056 = vmatprep.subr.mxu0 0.0
          %2057 = vmatpush1.msra.mxu0 0.0
          %2058 = vmatprep.subr.mxu0 0.0
          %2059 = vmatpush1.msra.mxu0 0.0
          %2060 = vmatprep.subr.mxu0 0.0
          %2061 = vmatpush1.msra.mxu0 0.0
          %2062 = vmatprep.subr.mxu0 0.0
          %2063 = vmatpush1.msra.mxu0 0.0
          %2064 = vmatprep.subr.mxu0 0.0
          %2065 = vmatpush1.msra.mxu0 %v1172
          %2066 = vmatprep.subr.mxu0 0.0
          %2067 = vmatpush1.msra.mxu0 %v1171
          %2068 = vmatprep.subr.mxu0 0.0
          %2069 = vmatpush2.msra.mxu0 0.0
          %2070 = vmatprep.subr.mxu0 0.0
          %2071 = vmatpush2.msra.mxu0 0.0
          %2072 = vmatprep.subr.mxu0 0.0
          %2073 = vmatpush2.msra.mxu0 0.0
          %2074 = vmatprep.subr.mxu0 0.0
          %2075 = vmatpush2.msra.mxu0 0.0
          %2076 = vmatprep.subr.mxu0 0.0
          %2077 = vmatpush2.msra.mxu0 0.0
          %2078 = vmatprep.subr.mxu0 0.0
          %2079 = vmatpush2.msra.mxu0 0.0
          %2080 = vmatprep.subr.mxu0 0.0
          %2081 = vmatpush2.msra.mxu0 0.0
          %2082 = vmatprep.subr.mxu0 0.0
          %2083 = vmatpush2.msra.mxu0 0.0
          %2084 = vmatprep.subr.mxu0 0.0
          %2085 = vmatpush2.msra.mxu0 0.0
          %2086 = vmatprep.subr.mxu0 0.0
          %2087 = vmatpush2.msra.mxu0 0.0
          %2088 = vmatprep.subr.mxu0 0.0
          %2089 = vmatpush2.msra.mxu0 0.0
          %2090 = vmatprep.subr.mxu0 0.0
          %2091 = vmatpush2.msra.mxu0 0.0
          %2092 = vmatprep.subr.mxu0 0.0
          %2093 = vmatpush2.msra.mxu0 0.0
          %2094 = vmatprep.subr.mxu0 0.0
          %2095 = vmatpush2.msra.mxu0 0.0
          %2096 = vmatprep.subr.mxu0 0.0
          %2097 = vmatpush2.msra.mxu0 0.0
          %2098 = vmatprep.subr.mxu0 0.0
          %2099 = vmatpush2.msra.mxu0 0.0
          %2100 = vmatprep.mubr.f32.mxu0 0.0
          %2101 = vmatmul.mubr.f32.gmra.mxu0 %v2034
          %v2102 = vpop.f32.mrf.mxu0
          %v2103 = vadd.f32 0.0, %v2102
          %v2104 = vpop.f32.mrf.mxu0
          %2105 = vdwg.mxu0
          %v2106 = vadd.f32 %v2032, %v2103
          %s2107 = scalar_lea.vmem [#allocation5], %s2024
          %v2108 = vld [vmem:[%s2107] sm:$0xff]
          %v2109 = vadd.f32 %v2106, %v2108
          %v2110 = vmul.f32 %v2109, %v1282
          %v2111 = vadd.f32 %v2110, %v1289
          %v2112 = vmax.f32 %v2111, 0.0
          %v2113 = vmin.f32 %v2112, 1.0
          %s2114 = sadd.s32 %s1294, 10
          %s2115 = smul.u32 %s2114, 8
          %v2116 = vmul.f32 %v2028, 0.9
          %s2117 = scalar_lea.vmem [#allocation4], %s2115
          %v2118 = vld [vmem:[%s2117] sm:$0xff]
          %v2119 = vadd.f32 %v2116, %v2118
          %v2120 = vmul.f32 %v2119, %v1195
          %v2121 = vmax.f32 %v2120, 0.0
          %v2122 = vmin.f32 %v2121, 1.0
          %v2123 = vmul.f32 %v2109, 0.9
          %v2125 = vsel %vm802, %v2122, 0
          %2127 = vmatprep.subr.mxu0 0.0
          %2128 = vmatpush1.msra.mxu0 0.0
          %2129 = vmatprep.subr.mxu0 0.0
          %2130 = vmatpush1.msra.mxu0 0.0
          %2131 = vmatprep.subr.mxu0 0.0
          %2132 = vmatpush1.msra.mxu0 0.0
          %2133 = vmatprep.subr.mxu0 0.0
          %2134 = vmatpush1.msra.mxu0 0.0
          %2135 = vmatprep.subr.mxu0 0.0
          %2136 = vmatpush1.msra.mxu0 0.0
          %2137 = vmatprep.subr.mxu0 0.0
          %2138 = vmatpush1.msra.mxu0 0.0
          %2139 = vmatprep.subr.mxu0 0.0
          %2140 = vmatpush1.msra.mxu0 0.0
          %2141 = vmatprep.subr.mxu0 0.0
          %2142 = vmatpush1.msra.mxu0 0.0
          %2143 = vmatprep.subr.mxu0 0.0
          %2144 = vmatpush1.msra.mxu0 0.0
          %2145 = vmatprep.subr.mxu0 0.0
          %2146 = vmatpush1.msra.mxu0 0.0
          %2147 = vmatprep.subr.mxu0 0.0
          %2148 = vmatpush1.msra.mxu0 0.0
          %2149 = vmatprep.subr.mxu0 0.0
          %2150 = vmatpush1.msra.mxu0 0.0
          %2151 = vmatprep.subr.mxu0 0.0
          %2152 = vmatpush1.msra.mxu0 0.0
          %2153 = vmatprep.subr.mxu0 0.0
          %2154 = vmatpush1.msra.mxu0 0.0
          %2155 = vmatprep.subr.mxu0 0.0
          %2156 = vmatpush1.msra.mxu0 %v1172
          %2157 = vmatprep.subr.mxu0 0.0
          %2158 = vmatpush1.msra.mxu0 %v1171
          %2159 = vmatprep.subr.mxu0 0.0
          %2160 = vmatpush2.msra.mxu0 0.0
          %2161 = vmatprep.subr.mxu0 0.0
          %2162 = vmatpush2.msra.mxu0 0.0
          %2163 = vmatprep.subr.mxu0 0.0
          %2164 = vmatpush2.msra.mxu0 0.0
          %2165 = vmatprep.subr.mxu0 0.0
          %2166 = vmatpush2.msra.mxu0 0.0
          %2167 = vmatprep.subr.mxu0 0.0
          %2168 = vmatpush2.msra.mxu0 0.0
          %2169 = vmatprep.subr.mxu0 0.0
          %2170 = vmatpush2.msra.mxu0 0.0
          %2171 = vmatprep.subr.mxu0 0.0
          %2172 = vmatpush2.msra.mxu0 0.0
          %2173 = vmatprep.subr.mxu0 0.0
          %2174 = vmatpush2.msra.mxu0 0.0
          %2175 = vmatprep.subr.mxu0 0.0
          %2176 = vmatpush2.msra.mxu0 0.0
          %2177 = vmatprep.subr.mxu0 0.0
          %2178 = vmatpush2.msra.mxu0 0.0
          %2179 = vmatprep.subr.mxu0 0.0
          %2180 = vmatpush2.msra.mxu0 0.0
          %2181 = vmatprep.subr.mxu0 0.0
          %2182 = vmatpush2.msra.mxu0 0.0
          %2183 = vmatprep.subr.mxu0 0.0
          %2184 = vmatpush2.msra.mxu0 0.0
          %2185 = vmatprep.subr.mxu0 0.0
          %2186 = vmatpush2.msra.mxu0 0.0
          %2187 = vmatprep.subr.mxu0 0.0
          %2188 = vmatpush2.msra.mxu0 0.0
          %2189 = vmatprep.subr.mxu0 0.0
          %2190 = vmatpush2.msra.mxu0 0.0
          %2191 = vmatprep.mubr.f32.mxu0 0.0
          %2192 = vmatmul.mubr.f32.gmra.mxu0 %v2125
          %v2193 = vpop.f32.mrf.mxu0
          %v2194 = vadd.f32 0.0, %v2193
          %v2195 = vpop.f32.mrf.mxu0
          %2196 = vdwg.mxu0
          %v2197 = vadd.f32 %v2123, %v2194
          %s2198 = scalar_lea.vmem [#allocation5], %s2115
          %v2199 = vld [vmem:[%s2198] sm:$0xff]
          %v2200 = vadd.f32 %v2197, %v2199
          %v2201 = vmul.f32 %v2200, %v1282
          %v2202 = vadd.f32 %v2201, %v1289
          %v2203 = vmax.f32 %v2202, 0.0
          %v2204 = vmin.f32 %v2203, 1.0
          %s2205 = sadd.s32 %s1294, 11
          %s2206 = smul.u32 %s2205, 8
          %v2207 = vmul.f32 %v2119, 0.9
          %s2208 = scalar_lea.vmem [#allocation4], %s2206
          %v2209 = vld [vmem:[%s2208] sm:$0xff]
          %v2210 = vadd.f32 %v2207, %v2209
          %v2211 = vmul.f32 %v2210, %v1195
          %v2212 = vmax.f32 %v2211, 0.0
          %v2213 = vmin.f32 %v2212, 1.0
          %v2214 = vmul.f32 %v2200, 0.9
          %v2216 = vsel %vm802, %v2213, 0
          %2218 = vmatprep.subr.mxu0 0.0
          %2219 = vmatpush1.msra.mxu0 0.0
          %2220 = vmatprep.subr.mxu0 0.0
          %2221 = vmatpush1.msra.mxu0 0.0
          %2222 = vmatprep.subr.mxu0 0.0
          %2223 = vmatpush1.msra.mxu0 0.0
          %2224 = vmatprep.subr.mxu0 0.0
          %2225 = vmatpush1.msra.mxu0 0.0
          %2226 = vmatprep.subr.mxu0 0.0
          %2227 = vmatpush1.msra.mxu0 0.0
          %2228 = vmatprep.subr.mxu0 0.0
          %2229 = vmatpush1.msra.mxu0 0.0
          %2230 = vmatprep.subr.mxu0 0.0
          %2231 = vmatpush1.msra.mxu0 0.0
          %2232 = vmatprep.subr.mxu0 0.0
          %2233 = vmatpush1.msra.mxu0 0.0
          %2234 = vmatprep.subr.mxu0 0.0
          %2235 = vmatpush1.msra.mxu0 0.0
          %2236 = vmatprep.subr.mxu0 0.0
          %2237 = vmatpush1.msra.mxu0 0.0
          %2238 = vmatprep.subr.mxu0 0.0
          %2239 = vmatpush1.msra.mxu0 0.0
          %2240 = vmatprep.subr.mxu0 0.0
          %2241 = vmatpush1.msra.mxu0 0.0
          %2242 = vmatprep.subr.mxu0 0.0
          %2243 = vmatpush1.msra.mxu0 0.0
          %2244 = vmatprep.subr.mxu0 0.0
          %2245 = vmatpush1.msra.mxu0 0.0
          %2246 = vmatprep.subr.mxu0 0.0
          %2247 = vmatpush1.msra.mxu0 %v1172
          %2248 = vmatprep.subr.mxu0 0.0
          %2249 = vmatpush1.msra.mxu0 %v1171
          %2250 = vmatprep.subr.mxu0 0.0
          %2251 = vmatpush2.msra.mxu0 0.0
          %2252 = vmatprep.subr.mxu0 0.0
          %2253 = vmatpush2.msra.mxu0 0.0
          %2254 = vmatprep.subr.mxu0 0.0
          %2255 = vmatpush2.msra.mxu0 0.0
          %2256 = vmatprep.subr.mxu0 0.0
          %2257 = vmatpush2.msra.mxu0 0.0
          %2258 = vmatprep.subr.mxu0 0.0
          %2259 = vmatpush2.msra.mxu0 0.0
          %2260 = vmatprep.subr.mxu0 0.0
          %2261 = vmatpush2.msra.mxu0 0.0
          %2262 = vmatprep.subr.mxu0 0.0
          %2263 = vmatpush2.msra.mxu0 0.0
          %2264 = vmatprep.subr.mxu0 0.0
          %2265 = vmatpush2.msra.mxu0 0.0
          %2266 = vmatprep.subr.mxu0 0.0
          %2267 = vmatpush2.msra.mxu0 0.0
          %2268 = vmatprep.subr.mxu0 0.0
          %2269 = vmatpush2.msra.mxu0 0.0
          %2270 = vmatprep.subr.mxu0 0.0
          %2271 = vmatpush2.msra.mxu0 0.0
          %2272 = vmatprep.subr.mxu0 0.0
          %2273 = vmatpush2.msra.mxu0 0.0
          %2274 = vmatprep.subr.mxu0 0.0
          %2275 = vmatpush2.msra.mxu0 0.0
          %2276 = vmatprep.subr.mxu0 0.0
          %2277 = vmatpush2.msra.mxu0 0.0
          %2278 = vmatprep.subr.mxu0 0.0
          %2279 = vmatpush2.msra.mxu0 0.0
          %2280 = vmatprep.subr.mxu0 0.0
          %2281 = vmatpush2.msra.mxu0 0.0
          %2282 = vmatprep.mubr.f32.mxu0 0.0
          %2283 = vmatmul.mubr.f32.gmra.mxu0 %v2216
          %v2284 = vpop.f32.mrf.mxu0
          %v2285 = vadd.f32 0.0, %v2284
          %v2286 = vpop.f32.mrf.mxu0
          %2287 = vdwg.mxu0
          %v2288 = vadd.f32 %v2214, %v2285
          %s2289 = scalar_lea.vmem [#allocation5], %s2206
          %v2290 = vld [vmem:[%s2289] sm:$0xff]
          %v2291 = vadd.f32 %v2288, %v2290
          %v2292 = vmul.f32 %v2291, %v1282
          %v2293 = vadd.f32 %v2292, %v1289
          %v2294 = vmax.f32 %v2293, 0.0
          %v2295 = vmin.f32 %v2294, 1.0
          %s2296 = sadd.s32 %s1294, 12
          %s2297 = smul.u32 %s2296, 8
          %v2298 = vmul.f32 %v2210, 0.9
          %s2299 = scalar_lea.vmem [#allocation4], %s2297
          %v2300 = vld [vmem:[%s2299] sm:$0xff]
          %v2301 = vadd.f32 %v2298, %v2300
          %v2302 = vmul.f32 %v2301, %v1195
          %v2303 = vmax.f32 %v2302, 0.0
          %v2304 = vmin.f32 %v2303, 1.0
          %v2305 = vmul.f32 %v2291, 0.9
          %v2307 = vsel %vm802, %v2304, 0
          %2309 = vmatprep.subr.mxu0 0.0
          %2310 = vmatpush1.msra.mxu0 0.0
          %2311 = vmatprep.subr.mxu0 0.0
          %2312 = vmatpush1.msra.mxu0 0.0
          %2313 = vmatprep.subr.mxu0 0.0
          %2314 = vmatpush1.msra.mxu0 0.0
          %2315 = vmatprep.subr.mxu0 0.0
          %2316 = vmatpush1.msra.mxu0 0.0
          %2317 = vmatprep.subr.mxu0 0.0
          %2318 = vmatpush1.msra.mxu0 0.0
          %2319 = vmatprep.subr.mxu0 0.0
          %2320 = vmatpush1.msra.mxu0 0.0
          %2321 = vmatprep.subr.mxu0 0.0
          %2322 = vmatpush1.msra.mxu0 0.0
          %2323 = vmatprep.subr.mxu0 0.0
          %2324 = vmatpush1.msra.mxu0 0.0
          %2325 = vmatprep.subr.mxu0 0.0
          %2326 = vmatpush1.msra.mxu0 0.0
          %2327 = vmatprep.subr.mxu0 0.0
          %2328 = vmatpush1.msra.mxu0 0.0
          %2329 = vmatprep.subr.mxu0 0.0
          %2330 = vmatpush1.msra.mxu0 0.0
          %2331 = vmatprep.subr.mxu0 0.0
          %2332 = vmatpush1.msra.mxu0 0.0
          %2333 = vmatprep.subr.mxu0 0.0
          %2334 = vmatpush1.msra.mxu0 0.0
          %2335 = vmatprep.subr.mxu0 0.0
          %2336 = vmatpush1.msra.mxu0 0.0
          %2337 = vmatprep.subr.mxu0 0.0
          %2338 = vmatpush1.msra.mxu0 %v1172
          %2339 = vmatprep.subr.mxu0 0.0
          %2340 = vmatpush1.msra.mxu0 %v1171
          %2341 = vmatprep.subr.mxu0 0.0
          %2342 = vmatpush2.msra.mxu0 0.0
          %2343 = vmatprep.subr.mxu0 0.0
          %2344 = vmatpush2.msra.mxu0 0.0
          %2345 = vmatprep.subr.mxu0 0.0
          %2346 = vmatpush2.msra.mxu0 0.0
          %2347 = vmatprep.subr.mxu0 0.0
          %2348 = vmatpush2.msra.mxu0 0.0
          %2349 = vmatprep.subr.mxu0 0.0
          %2350 = vmatpush2.msra.mxu0 0.0
          %2351 = vmatprep.subr.mxu0 0.0
          %2352 = vmatpush2.msra.mxu0 0.0
          %2353 = vmatprep.subr.mxu0 0.0
          %2354 = vmatpush2.msra.mxu0 0.0
          %2355 = vmatprep.subr.mxu0 0.0
          %2356 = vmatpush2.msra.mxu0 0.0
          %2357 = vmatprep.subr.mxu0 0.0
          %2358 = vmatpush2.msra.mxu0 0.0
          %2359 = vmatprep.subr.mxu0 0.0
          %2360 = vmatpush2.msra.mxu0 0.0
          %2361 = vmatprep.subr.mxu0 0.0
          %2362 = vmatpush2.msra.mxu0 0.0
          %2363 = vmatprep.subr.mxu0 0.0
          %2364 = vmatpush2.msra.mxu0 0.0
          %2365 = vmatprep.subr.mxu0 0.0
          %2366 = vmatpush2.msra.mxu0 0.0
          %2367 = vmatprep.subr.mxu0 0.0
          %2368 = vmatpush2.msra.mxu0 0.0
          %2369 = vmatprep.subr.mxu0 0.0
          %2370 = vmatpush2.msra.mxu0 0.0
          %2371 = vmatprep.subr.mxu0 0.0
          %2372 = vmatpush2.msra.mxu0 0.0
          %2373 = vmatprep.mubr.f32.mxu0 0.0
          %2374 = vmatmul.mubr.f32.gmra.mxu0 %v2307
          %v2375 = vpop.f32.mrf.mxu0
          %v2376 = vadd.f32 0.0, %v2375
          %v2377 = vpop.f32.mrf.mxu0
          %2378 = vdwg.mxu0
          %v2379 = vadd.f32 %v2305, %v2376
          %s2380 = scalar_lea.vmem [#allocation5], %s2297
          %v2381 = vld [vmem:[%s2380] sm:$0xff]
          %v2382 = vadd.f32 %v2379, %v2381
          %v2383 = vmul.f32 %v2382, %v1282
          %v2384 = vadd.f32 %v2383, %v1289
          %v2385 = vmax.f32 %v2384, 0.0
          %v2386 = vmin.f32 %v2385, 1.0
          %s2387 = sadd.s32 %s1294, 13
          %s2388 = smul.u32 %s2387, 8
          %v2389 = vmul.f32 %v2301, 0.9
          %s2390 = scalar_lea.vmem [#allocation4], %s2388
          %v2391 = vld [vmem:[%s2390] sm:$0xff]
          %v2392 = vadd.f32 %v2389, %v2391
          %v2393 = vmul.f32 %v2392, %v1195
          %v2394 = vmax.f32 %v2393, 0.0
          %v2395 = vmin.f32 %v2394, 1.0
          %v2396 = vmul.f32 %v2382, 0.9
          %v2398 = vsel %vm802, %v2395, 0
          %2400 = vmatprep.subr.mxu0 0.0
          %2401 = vmatpush1.msra.mxu0 0.0
          %2402 = vmatprep.subr.mxu0 0.0
          %2403 = vmatpush1.msra.mxu0 0.0
          %2404 = vmatprep.subr.mxu0 0.0
          %2405 = vmatpush1.msra.mxu0 0.0
          %2406 = vmatprep.subr.mxu0 0.0
          %2407 = vmatpush1.msra.mxu0 0.0
          %2408 = vmatprep.subr.mxu0 0.0
          %2409 = vmatpush1.msra.mxu0 0.0
          %2410 = vmatprep.subr.mxu0 0.0
          %2411 = vmatpush1.msra.mxu0 0.0
          %2412 = vmatprep.subr.mxu0 0.0
          %2413 = vmatpush1.msra.mxu0 0.0
          %2414 = vmatprep.subr.mxu0 0.0
          %2415 = vmatpush1.msra.mxu0 0.0
          %2416 = vmatprep.subr.mxu0 0.0
          %2417 = vmatpush1.msra.mxu0 0.0
          %2418 = vmatprep.subr.mxu0 0.0
          %2419 = vmatpush1.msra.mxu0 0.0
          %2420 = vmatprep.subr.mxu0 0.0
          %2421 = vmatpush1.msra.mxu0 0.0
          %2422 = vmatprep.subr.mxu0 0.0
          %2423 = vmatpush1.msra.mxu0 0.0
          %2424 = vmatprep.subr.mxu0 0.0
          %2425 = vmatpush1.msra.mxu0 0.0
          %2426 = vmatprep.subr.mxu0 0.0
          %2427 = vmatpush1.msra.mxu0 0.0
          %2428 = vmatprep.subr.mxu0 0.0
          %2429 = vmatpush1.msra.mxu0 %v1172
          %2430 = vmatprep.subr.mxu0 0.0
          %2431 = vmatpush1.msra.mxu0 %v1171
          %2432 = vmatprep.subr.mxu0 0.0
          %2433 = vmatpush2.msra.mxu0 0.0
          %2434 = vmatprep.subr.mxu0 0.0
          %2435 = vmatpush2.msra.mxu0 0.0
          %2436 = vmatprep.subr.mxu0 0.0
          %2437 = vmatpush2.msra.mxu0 0.0
          %2438 = vmatprep.subr.mxu0 0.0
          %2439 = vmatpush2.msra.mxu0 0.0
          %2440 = vmatprep.subr.mxu0 0.0
          %2441 = vmatpush2.msra.mxu0 0.0
          %2442 = vmatprep.subr.mxu0 0.0
          %2443 = vmatpush2.msra.mxu0 0.0
          %2444 = vmatprep.subr.mxu0 0.0
          %2445 = vmatpush2.msra.mxu0 0.0
          %2446 = vmatprep.subr.mxu0 0.0
          %2447 = vmatpush2.msra.mxu0 0.0
          %2448 = vmatprep.subr.mxu0 0.0
          %2449 = vmatpush2.msra.mxu0 0.0
          %2450 = vmatprep.subr.mxu0 0.0
          %2451 = vmatpush2.msra.mxu0 0.0
          %2452 = vmatprep.subr.mxu0 0.0
          %2453 = vmatpush2.msra.mxu0 0.0
          %2454 = vmatprep.subr.mxu0 0.0
          %2455 = vmatpush2.msra.mxu0 0.0
          %2456 = vmatprep.subr.mxu0 0.0
          %2457 = vmatpush2.msra.mxu0 0.0
          %2458 = vmatprep.subr.mxu0 0.0
          %2459 = vmatpush2.msra.mxu0 0.0
          %2460 = vmatprep.subr.mxu0 0.0
          %2461 = vmatpush2.msra.mxu0 0.0
          %2462 = vmatprep.subr.mxu0 0.0
          %2463 = vmatpush2.msra.mxu0 0.0
          %2464 = vmatprep.mubr.f32.mxu0 0.0
          %2465 = vmatmul.mubr.f32.gmra.mxu0 %v2398
          %v2466 = vpop.f32.mrf.mxu0
          %v2467 = vadd.f32 0.0, %v2466
          %v2468 = vpop.f32.mrf.mxu0
          %2469 = vdwg.mxu0
          %v2470 = vadd.f32 %v2396, %v2467
          %s2471 = scalar_lea.vmem [#allocation5], %s2388
          %v2472 = vld [vmem:[%s2471] sm:$0xff]
          %v2473 = vadd.f32 %v2470, %v2472
          %v2474 = vmul.f32 %v2473, %v1282
          %v2475 = vadd.f32 %v2474, %v1289
          %v2476 = vmax.f32 %v2475, 0.0
          %v2477 = vmin.f32 %v2476, 1.0
          %s2478 = sadd.s32 %s1294, 14
          %s2479 = smul.u32 %s2478, 8
          %v2480 = vmul.f32 %v2392, 0.9
          %s2481 = scalar_lea.vmem [#allocation4], %s2479
          %v2482 = vld [vmem:[%s2481] sm:$0xff]
          %v2483 = vadd.f32 %v2480, %v2482
          %v2484 = vmul.f32 %v2483, %v1195
          %v2485 = vmax.f32 %v2484, 0.0
          %v2486 = vmin.f32 %v2485, 1.0
          %v2487 = vmul.f32 %v2473, 0.9
          %v2489 = vsel %vm802, %v2486, 0
          %2491 = vmatprep.subr.mxu0 0.0
          %2492 = vmatpush1.msra.mxu0 0.0
          %2493 = vmatprep.subr.mxu0 0.0
          %2494 = vmatpush1.msra.mxu0 0.0
          %2495 = vmatprep.subr.mxu0 0.0
          %2496 = vmatpush1.msra.mxu0 0.0
          %2497 = vmatprep.subr.mxu0 0.0
          %2498 = vmatpush1.msra.mxu0 0.0
          %2499 = vmatprep.subr.mxu0 0.0
          %2500 = vmatpush1.msra.mxu0 0.0
          %2501 = vmatprep.subr.mxu0 0.0
          %2502 = vmatpush1.msra.mxu0 0.0
          %2503 = vmatprep.subr.mxu0 0.0
          %2504 = vmatpush1.msra.mxu0 0.0
          %2505 = vmatprep.subr.mxu0 0.0
          %2506 = vmatpush1.msra.mxu0 0.0
          %2507 = vmatprep.subr.mxu0 0.0
          %2508 = vmatpush1.msra.mxu0 0.0
          %2509 = vmatprep.subr.mxu0 0.0
          %2510 = vmatpush1.msra.mxu0 0.0
          %2511 = vmatprep.subr.mxu0 0.0
          %2512 = vmatpush1.msra.mxu0 0.0
          %2513 = vmatprep.subr.mxu0 0.0
          %2514 = vmatpush1.msra.mxu0 0.0
          %2515 = vmatprep.subr.mxu0 0.0
          %2516 = vmatpush1.msra.mxu0 0.0
          %2517 = vmatprep.subr.mxu0 0.0
          %2518 = vmatpush1.msra.mxu0 0.0
          %2519 = vmatprep.subr.mxu0 0.0
          %2520 = vmatpush1.msra.mxu0 %v1172
          %2521 = vmatprep.subr.mxu0 0.0
          %2522 = vmatpush1.msra.mxu0 %v1171
          %2523 = vmatprep.subr.mxu0 0.0
          %2524 = vmatpush2.msra.mxu0 0.0
          %2525 = vmatprep.subr.mxu0 0.0
          %2526 = vmatpush2.msra.mxu0 0.0
          %2527 = vmatprep.subr.mxu0 0.0
          %2528 = vmatpush2.msra.mxu0 0.0
          %2529 = vmatprep.subr.mxu0 0.0
          %2530 = vmatpush2.msra.mxu0 0.0
          %2531 = vmatprep.subr.mxu0 0.0
          %2532 = vmatpush2.msra.mxu0 0.0
          %2533 = vmatprep.subr.mxu0 0.0
          %2534 = vmatpush2.msra.mxu0 0.0
          %2535 = vmatprep.subr.mxu0 0.0
          %2536 = vmatpush2.msra.mxu0 0.0
          %2537 = vmatprep.subr.mxu0 0.0
          %2538 = vmatpush2.msra.mxu0 0.0
          %2539 = vmatprep.subr.mxu0 0.0
          %2540 = vmatpush2.msra.mxu0 0.0
          %2541 = vmatprep.subr.mxu0 0.0
          %2542 = vmatpush2.msra.mxu0 0.0
          %2543 = vmatprep.subr.mxu0 0.0
          %2544 = vmatpush2.msra.mxu0 0.0
          %2545 = vmatprep.subr.mxu0 0.0
          %2546 = vmatpush2.msra.mxu0 0.0
          %2547 = vmatprep.subr.mxu0 0.0
          %2548 = vmatpush2.msra.mxu0 0.0
          %2549 = vmatprep.subr.mxu0 0.0
          %2550 = vmatpush2.msra.mxu0 0.0
          %2551 = vmatprep.subr.mxu0 0.0
          %2552 = vmatpush2.msra.mxu0 0.0
          %2553 = vmatprep.subr.mxu0 0.0
          %2554 = vmatpush2.msra.mxu0 0.0
          %2555 = vmatprep.mubr.f32.mxu0 0.0
          %2556 = vmatmul.mubr.f32.gmra.mxu0 %v2489
          %v2557 = vpop.f32.mrf.mxu0
          %v2558 = vadd.f32 0.0, %v2557
          %v2559 = vpop.f32.mrf.mxu0
          %2560 = vdwg.mxu0
          %v2561 = vadd.f32 %v2487, %v2558
          %s2562 = scalar_lea.vmem [#allocation5], %s2479
          %v2563 = vld [vmem:[%s2562] sm:$0xff]
          %v2564 = vadd.f32 %v2561, %v2563
          %v2565 = vmul.f32 %v2564, %v1282
          %v2566 = vadd.f32 %v2565, %v1289
          %v2567 = vmax.f32 %v2566, 0.0
          %v2568 = vmin.f32 %v2567, 1.0
          %s2569 = sadd.s32 %s1294, 15
          %s2570 = smul.u32 %s2569, 8
          %v2571 = vmul.f32 %v2483, 0.9
          %s2572 = scalar_lea.vmem [#allocation4], %s2570
          %v2573 = vld [vmem:[%s2572] sm:$0xff]
          %v2574 = vadd.f32 %v2571, %v2573
          %v2575 = vmul.f32 %v2574, %v1195
          %v2576 = vmax.f32 %v2575, 0.0
          %v2577 = vmin.f32 %v2576, 1.0
          %v2578 = vmul.f32 %v2564, 0.9
          %v2580 = vsel %vm802, %v2577, 0
          %2582 = vmatprep.subr.mxu0 0.0
          %2583 = vmatpush1.msra.mxu0 0.0
          %2584 = vmatprep.subr.mxu0 0.0
          %2585 = vmatpush1.msra.mxu0 0.0
          %2586 = vmatprep.subr.mxu0 0.0
          %2587 = vmatpush1.msra.mxu0 0.0
          %2588 = vmatprep.subr.mxu0 0.0
          %2589 = vmatpush1.msra.mxu0 0.0
          %2590 = vmatprep.subr.mxu0 0.0
          %2591 = vmatpush1.msra.mxu0 0.0
          %2592 = vmatprep.subr.mxu0 0.0
          %2593 = vmatpush1.msra.mxu0 0.0
          %2594 = vmatprep.subr.mxu0 0.0
          %2595 = vmatpush1.msra.mxu0 0.0
          %2596 = vmatprep.subr.mxu0 0.0
          %2597 = vmatpush1.msra.mxu0 0.0
          %2598 = vmatprep.subr.mxu0 0.0
          %2599 = vmatpush1.msra.mxu0 0.0
          %2600 = vmatprep.subr.mxu0 0.0
          %2601 = vmatpush1.msra.mxu0 0.0
          %2602 = vmatprep.subr.mxu0 0.0
          %2603 = vmatpush1.msra.mxu0 0.0
          %2604 = vmatprep.subr.mxu0 0.0
          %2605 = vmatpush1.msra.mxu0 0.0
          %2606 = vmatprep.subr.mxu0 0.0
          %2607 = vmatpush1.msra.mxu0 0.0
          %2608 = vmatprep.subr.mxu0 0.0
          %2609 = vmatpush1.msra.mxu0 0.0
          %2610 = vmatprep.subr.mxu0 0.0
          %2611 = vmatpush1.msra.mxu0 %v1172
          %2612 = vmatprep.subr.mxu0 0.0
          %2613 = vmatpush1.msra.mxu0 %v1171
          %2614 = vmatprep.subr.mxu0 0.0
          %2615 = vmatpush2.msra.mxu0 0.0
          %2616 = vmatprep.subr.mxu0 0.0
          %2617 = vmatpush2.msra.mxu0 0.0
          %2618 = vmatprep.subr.mxu0 0.0
          %2619 = vmatpush2.msra.mxu0 0.0
          %2620 = vmatprep.subr.mxu0 0.0
          %2621 = vmatpush2.msra.mxu0 0.0
          %2622 = vmatprep.subr.mxu0 0.0
          %2623 = vmatpush2.msra.mxu0 0.0
          %2624 = vmatprep.subr.mxu0 0.0
          %2625 = vmatpush2.msra.mxu0 0.0
          %2626 = vmatprep.subr.mxu0 0.0
          %2627 = vmatpush2.msra.mxu0 0.0
          %2628 = vmatprep.subr.mxu0 0.0
          %2629 = vmatpush2.msra.mxu0 0.0
          %2630 = vmatprep.subr.mxu0 0.0
          %2631 = vmatpush2.msra.mxu0 0.0
          %2632 = vmatprep.subr.mxu0 0.0
          %2633 = vmatpush2.msra.mxu0 0.0
          %2634 = vmatprep.subr.mxu0 0.0
          %2635 = vmatpush2.msra.mxu0 0.0
          %2636 = vmatprep.subr.mxu0 0.0
          %2637 = vmatpush2.msra.mxu0 0.0
          %2638 = vmatprep.subr.mxu0 0.0
          %2639 = vmatpush2.msra.mxu0 0.0
          %2640 = vmatprep.subr.mxu0 0.0
          %2641 = vmatpush2.msra.mxu0 0.0
          %2642 = vmatprep.subr.mxu0 0.0
          %2643 = vmatpush2.msra.mxu0 0.0
          %2644 = vmatprep.subr.mxu0 0.0
          %2645 = vmatpush2.msra.mxu0 0.0
          %2646 = vmatprep.mubr.f32.mxu0 0.0
          %2647 = vmatmul.mubr.f32.gmra.mxu0 %v2580
          %v2648 = vpop.f32.mrf.mxu0
          %v2649 = vadd.f32 0.0, %v2648
          %v2650 = vpop.f32.mrf.mxu0
          %2651 = vdwg.mxu0
          %v2652 = vadd.f32 %v2578, %v2649
          %s2653 = scalar_lea.vmem [#allocation5], %s2570
          %v2654 = vld [vmem:[%s2653] sm:$0xff]
          %v2655 = vadd.f32 %v2652, %v2654
          %v2656 = vmul.f32 %v2655, %v1282
          %v2657 = vadd.f32 %v2656, %v1289
          %v2658 = vmax.f32 %v2657, 0.0
          %v2659 = vmin.f32 %v2658, 1.0
          %2661 = vrot.lane.b32.xlu0 %v1385, 8
          %v2662 = vpop.permute.xlu0 %2661
          %2665 = vrot.lane.b32.xlu0 %v1476, 16
          %v2666 = vpop.permute.xlu0 %2665
          %2669 = vrot.lane.b32.xlu0 %v1567, 24
          %v2670 = vpop.permute.xlu0 %2669
          %2673 = vrot.lane.b32.xlu0 %v1658, 32
          %v2674 = vpop.permute.xlu0 %2673
          %2677 = vrot.lane.b32.xlu0 %v1749, 40
          %v2678 = vpop.permute.xlu0 %2677
          %2681 = vrot.lane.b32.xlu0 %v1840, 48
          %v2682 = vpop.permute.xlu0 %2681
          %2685 = vrot.lane.b32.xlu0 %v1931, 56
          %v2686 = vpop.permute.xlu0 %2685
          %2689 = vrot.lane.b32.xlu0 %v2022, 64
          %v2690 = vpop.permute.xlu0 %2689
          %2693 = vrot.lane.b32.xlu0 %v2113, 72
          %v2694 = vpop.permute.xlu0 %2693
          %2697 = vrot.lane.b32.xlu0 %v2204, 80
          %v2698 = vpop.permute.xlu0 %2697
          %2701 = vrot.lane.b32.xlu0 %v2295, 88
          %v2702 = vpop.permute.xlu0 %2701
          %2705 = vrot.lane.b32.xlu0 %v2386, 96
          %v2706 = vpop.permute.xlu0 %2705
          %2709 = vrot.lane.b32.xlu0 %v2477, 104
          %v2710 = vpop.permute.xlu0 %2709
          %2713 = vrot.lane.b32.xlu0 %v2568, 112
          %v2714 = vpop.permute.xlu0 %2713
          %2717 = vrot.lane.b32.xlu0 %v2659, 120
          %v2718 = vpop.permute.xlu0 %2717
          %v2720 = vsel %vm480, %v1293, %v2662
          %v2721 = vsel %vm802, %v2720, %v2666
          %vm2722 = vcmask 195584
          %v2723 = vsel %vm2722, %v2721, %v2670
          %vm2724 = vcmask 261120
          %v2725 = vsel %vm2724, %v2723, %v2674
          %vm2726 = vcmask 326656
          %v2727 = vsel %vm2726, %v2725, %v2678
          %vm2728 = vcmask 392192
          %v2729 = vsel %vm2728, %v2727, %v2682
          %vm2730 = vcmask 457728
          %v2731 = vsel %vm2730, %v2729, %v2686
          %vm2732 = vcmask 523264
          %v2733 = vsel %vm2732, %v2731, %v2690
          %vm2734 = vcmask 588800
          %v2735 = vsel %vm2734, %v2733, %v2694
          %vm2736 = vcmask 654336
          %v2737 = vsel %vm2736, %v2735, %v2698
          %vm2738 = vcmask 719872
          %v2739 = vsel %vm2738, %v2737, %v2702
          %vm2740 = vcmask 785408
          %v2741 = vsel %vm2740, %v2739, %v2706
          %vm2742 = vcmask 850944
          %v2743 = vsel %vm2742, %v2741, %v2710
          %vm2744 = vcmask 916480
          %v2745 = vsel %vm2744, %v2743, %v2714
          %vm2746 = vcmask 982016
          %v2747 = vsel %vm2746, %v2745, %v2718
          %s2748 = smul.u32 %s1179, 8
          %s2749 = scalar_lea.vmem %s328, %s2748 [#allocation7]
          %2750 = vst [vmem:[%s2749] sm:$0xff] %v2747
        $region65: #{tpu_custom_call.1} parent=55 // loop_footer
          %s1183 = sadd.s32 1, %s1179
        $region66: #{tpu_custom_call.1} parent=55 // loop_footer_branch
          %1178 = sbr.rel target = $region62
        $region67: #{tpu_custom_call.1} parent=55 // loop_exit
          _
        %2751 = vst.msk [vmem:[#allocation2] sm:$0xff] %vm802, %v1184
        %2752 = vst.msk [vmem:[#allocation3] sm:$0xff] %vm480, %v1185
        %s2753 = sand.u32 %s227, 1
        %s2754 = scalar_lea.sflag [#allocation8], %s2753
        %s2755 = sand.u32 %s227, 1
        %s2756 = smul.addr %s2755, 16
        %s2757 = scalar_lea.vmem [#allocation7], %s2756
        // Predicated region
        $region68: #{tpu_custom_call.1} parent=55 // pred_check
          %p2758 = pneg %p237
        $region69: #{tpu_custom_call.1} parent=55 // pred_check_branch
          %2760 = sbr.rel (%p2758) target = $region71
        $region70: #{tpu_custom_call.1} parent=55 // pred_region
          %s2761 = smul.u32 2, %s25
          %s2763 = ssub.s32 256, 256
          %2764 = vsyncadd %s2754, %s2763
          %s2765 = smul.addr %s2761, 128
          %s2766 = scalar_lea.hbm %s9, %s2765
          %s2767 = sshll.u32 %s2757, 4
          %s2768 = int_to_ptr.vmem [resolvable:$true] %s2767
          %2773 = dma.vmem_to_hbm [thread:$0]  %s2768, 256, %s2766, %s2754, 128, 128, 8
        $region71: #{tpu_custom_call.1} parent=55 // pred_fallthru
          _
      $region56: #{tpu_custom_call.1} parent=5 // pred_fallthru
        _
      %p2774 = scmp.le.s32.totalorder 2, %s20
      // Predicated region
      $region72: #{tpu_custom_call.1} parent=5 // pred_check
        %p2775 = pneg %p2774
      $region73: #{tpu_custom_call.1} parent=5 // pred_check_branch
        %2777 = sbr.rel (%p2775) target = $region75
      $region74: #{tpu_custom_call.1} parent=5 // pred_region
        %s2778 = ssub.s32 %s20, 2
        // Predicated region
        $region76: #{tpu_custom_call.1} parent=74 // pred_check
          %p2779 = pneg %p243
        $region77: #{tpu_custom_call.1} parent=74 // pred_check_branch
          %2781 = sbr.rel (%p2779) target = $region79
        $region78: #{tpu_custom_call.1} parent=74 // pred_region
          %s2782 = sand.u32 %s228, 1
          %s2783 = scalar_lea.sflag [#allocation8], %s2782
          %s2784 = sand.u32 %s228, 1
          %s2785 = smul.addr %s2784, 16
          %s2786 = scalar_lea.vmem [#allocation7], %s2785
          %2787 = dma.done %s2783, 256
        $region79: #{tpu_custom_call.1} parent=74 // pred_fallthru
          _
      $region75: #{tpu_custom_call.1} parent=5 // pred_fallthru
        _
    $region6: #{tpu_custom_call.1} parent=1 // loop_footer
      %s24 = sadd.s32 1, %s20
    $region7: #{tpu_custom_call.1} parent=1 // loop_footer_branch
      %19 = sbr.rel target = $region3
    $region8: #{tpu_custom_call.1} parent=1 // loop_exit
      _
    %2788 = vsyncpa [#allocation8], 1
    %s2789 = scalar_lea.sflag [#allocation8], 1
    %2790 = vsyncpa %s2789, 1

</llo_original>
